<compile_context>
chip_gen: v5e
topology: v5e:2x2
jax: 0.10.0
libtpu: 0.0.40
codegen_flags: <defaults>
</compile_context>

<pallas_src>
import jax
import jax.numpy as jnp
import numpy as np
from jax.experimental import pallas as pl
from jax.experimental.pallas import tpu as pltpu

# ----------------------------- configuration --------------------------------
B, L = 2, 8                 # batch, sequence length
BERT_DIM = 64               # stand-in for opt.embed_dim (BERT hidden size)
POS_DIM = 50                # POS embedding size (fixed in the module)
D_IN = POS_DIM + BERT_DIM   # input to `reduc` (= opt.embed_dim + 50) = 114
REDUC = 400                 # reduc_dim
HID = 150                   # ap/op fc width
TAG = 5                     # len(idx2tag)
POL = 4                     # opt.polarities_dim
POS_VOCAB = 20              # len(dict_tags_parser_tagger)

# padded / packed sizes (wrapper-side)
D_PAD = 128                 # 114 -> 128 (lane-aligned contraction dim)
H_PAD = 256                 # 150 -> 256 node slot (128-lane aligned slices)
TAGREP_W = 384              # ap_rep(150) | op_rep(150) | pad -> 384 (3*128)
AP_NODE_OFF = TAGREP_W      # 384
OP_NODE_OFF = TAGREP_W + H_PAD   # 640
HEADS_W = TAGREP_W + 2 * H_PAD   # 896 (was 1024)
TAG_SLOT = 16               # tag-fc output columns (ap 0..4, op 5..9, pad)
TRI_OFF = TAG_SLOT          # tri scores start at col 16 of the combined output
OUT_W = 128                 # single lane-dense combined output width

# Row-group structure: grid iterates over batch groups; weights stay resident.
# For real workloads pick GROUP_BATCHES so ROWS ~= 128-256; at toy size all
# batches fit in one group -> grid=(1,).
GROUP_BATCHES = B
assert B % GROUP_BATCHES == 0
NUM_GROUPS = B // GROUP_BATCHES
ROWS = GROUP_BATCHES * L    # rows per grid step (16 here)
assert TRI_OFF + POL * L <= OUT_W and 2 * TAG <= TAG_SLOT


# ------------------------------- kernel -------------------------------------
def bote_kernel(x_ref,
                w_reduc_ref, b_reduc_ref,
                w_heads_ref, b_heads_ref,
                w_tags_ref, b_tags_ref,
                w_bi_ref, b_bi_ref,
                out_ref):
    """One grid step: ROWS (= GROUP_BATCHES * L) tokens; weights VMEM-resident."""
    f32 = jnp.float32
    bf16 = jnp.bfloat16

    x = x_ref[...]                                                  # [ROWS,128] bf16

    # reduc = Linear(114 -> 400)  (dropout == identity in eval mode)
    reduc = jnp.dot(x, w_reduc_ref[...],
                    preferred_element_type=f32) + b_reduc_ref[...]  # [ROWS,400] f32
    reduc_b = reduc.astype(bf16)

    # four fused 400 -> 150 heads with ReLU, packed layout:
    #   [ap_rep(150) | op_rep(150) | pad..384 | ap_node(256 slot) | op_node(256 slot)]
    # padded weight/bias columns are zero, so padded outputs are relu(0) = 0.
    heads = jnp.maximum(
        jnp.dot(reduc_b, w_heads_ref[...],
                preferred_element_type=f32) + b_heads_ref[...], 0.0)  # [ROWS,896] f32
    heads_b = heads.astype(bf16)

    # merged tag heads: (ap_rep | op_rep) @ block-diagonal (w_aptag | w_optag)
    rep = heads_b[:, :TAGREP_W]                                       # [ROWS,384]
    tags = (jnp.dot(rep, w_tags_ref[...],
                    preferred_element_type=f32) + b_tags_ref[...])    # [ROWS,16] f32

    # Biaffine(150, 150, POL, bias=(True, False)):
    #   affine[i, p*H + d] = sum_k ap_node[i,k] * Wbi[k, p*H+d] + bias_row[p*H+d]
    #   tri[b, j, i, p]    = sum_d affine[i, p*H+d] * op_node[j, d]   (same batch)
    ap_node = heads_b[:, AP_NODE_OFF:AP_NODE_OFF + H_PAD]             # [ROWS,256] bf16
    affine = (jnp.dot(ap_node, w_bi_ref[...],
                      preferred_element_type=f32) + b_bi_ref[...])    # [ROWS,1024] f32

    # Single lane-dense output slab: zero the padding once, then fill slices.
    out_ref[...] = jnp.zeros_like(out_ref)
    out_ref[:, :TAG_SLOT] = tags

    # Per-batch biaffine scores (no cross-batch waste).  The op_node tile is the
    # shared (implicitly transposed) RHS for all POL matmuls of a batch, hoisted
    # out of the POL loop so only one relayout per batch is exposed.
    for g in range(GROUP_BATCHES):                 # small static loop
        r0 = g * L
        op_g = heads[r0:r0 + L, OP_NODE_OFF:OP_NODE_OFF + H_PAD].astype(bf16)  # [L,256]
        for p in range(POL):
            a_p = affine[r0:r0 + L, p * H_PAD:(p + 1) * H_PAD].astype(bf16)    # [L,256]
            # s[i, j] = sum_d a_p[i, d] * op_g[j, d]   -> [L_i, L_j]
            s = jax.lax.dot_general(a_p, op_g, (((1,), (1,)), ((), ())),
                                    preferred_element_type=f32)
            out_ref[r0:r0 + L, TRI_OFF + p * L:TRI_OFF + (p + 1) * L] = s


# ------------------------------- wrapper -------------------------------------
def pack_params(params):
    """Pad / pack / bf16-cast the module weights into kernel-friendly tensors."""
    (w_reduc, b_reduc, w_ap, b_ap, w_op, b_op, w_ap2, b_ap2, w_op2, b_op2,
     w_aptag, b_aptag, w_optag, b_optag, w_bi) = params
    f32, bf16 = jnp.float32, jnp.bfloat16

    # reduc: pad contraction dim 114 -> 128
    w_reduc_p = jnp.zeros((D_PAD, REDUC), f32).at[:D_IN, :].set(w_reduc).astype(bf16)
    b_reduc_p = jnp.asarray(b_reduc, f32).reshape(1, REDUC)

    # fused heads weight [400, 896]; ap_rep/op_rep packed contiguously, node heads
    # in 128-aligned 256-lane slots.
    w_heads = jnp.zeros((REDUC, HEADS_W), f32)
    b_heads = jnp.zeros((1, HEADS_W), f32)
    for off, w, b in [(0, w_ap, b_ap), (HID, w_op, b_op),
                      (AP_NODE_OFF, w_ap2, b_ap2), (OP_NODE_OFF, w_op2, b_op2)]:
        w_heads = w_heads.at[:, off:off + HID].set(w)
        b_heads = b_heads.at[0, off:off + HID].set(jnp.reshape(b, (-1,)))
    w_heads = w_heads.astype(bf16)

    # merged tag heads: block-diagonal pack into one [384, 16] weight
    w_tags = jnp.zeros((TAGREP_W, TAG_SLOT), f32)
    b_tags = jnp.zeros((1, TAG_SLOT), f32)
    w_tags = w_tags.at[:HID, :TAG].set(w_aptag)
    w_tags = w_tags.at[HID:2 * HID, TAG:2 * TAG].set(w_optag)
    b_tags = b_tags.at[0, :TAG].set(jnp.reshape(b_aptag, (-1,)))
    b_tags = b_tags.at[0, TAG:2 * TAG].set(jnp.reshape(b_optag, (-1,)))
    w_tags = w_tags.astype(bf16)

    # biaffine: split the ones-column bias row out of w_bi; each POL block padded
    # 150 -> 256 lanes so per-p slices of `affine` stay lane-aligned; rows padded
    # 150 -> 256 to match the ap_node slot.  Zero padding is load-bearing (see
    # correctness note at top of file).
    w_bi_main = w_bi[:HID]        # [150, POL*150]
    bias_row = w_bi[HID]          # [POL*150]
    w_bi_p = jnp.zeros((H_PAD, POL * H_PAD), f32)
    b_bi_p = jnp.zeros((1, POL * H_PAD), f32)
    for p in range(POL):
        w_bi_p = w_bi_p.at[:HID, p * H_PAD:p * H_PAD + HID].set(
            w_bi_main[:, p * HID:(p + 1) * HID])
        b_bi_p = b_bi_p.at[0, p * H_PAD:p * H_PAD + HID].set(
            bias_row[p * HID:(p + 1) * HID])
    w_bi_p = w_bi_p.astype(bf16)

    return (w_reduc_p, b_reduc_p, w_heads, b_heads, w_tags, b_tags, w_bi_p, b_bi_p)


@jax.jit
def bote_forward(x, kernel_params):
    """x: [B, L, D_IN] float32 (POS-embed ++ aligned BERT features)."""
    # flatten batch to B*L rows, pad feature dim 114 -> 128, cast to bf16
    x_flat = x.reshape(B * L, D_IN)
    x_pad = (jnp.zeros((B * L, D_PAD), jnp.float32)
             .at[:, :D_IN].set(x_flat).astype(jnp.bfloat16))

    args = (x_pad,) + tuple(kernel_params)

    # x / output blocks advance with the grid; weights use a constant index_map
    # so they are DMA'd once and stay resident in VMEM for the whole grid.
    # (With a 1-step grid the default double-buffering of the weight blocks is
    #  dead VMEM but harmless at ~2.7 MB total.)
    in_specs = [pl.BlockSpec((ROWS, D_PAD), lambda g: (g, 0))]
    in_specs += [pl.BlockSpec(kp.shape, lambda g: (0, 0)) for kp in kernel_params]

    out_shape = jax.ShapeDtypeStruct((NUM_GROUPS * ROWS, OUT_W), jnp.float32)
    out_specs = pl.BlockSpec((ROWS, OUT_W), lambda g: (g, 0))

    flops = int(NUM_GROUPS * (
        2 * ROWS * (D_PAD * REDUC + REDUC * HEADS_W + TAGREP_W * TAG_SLOT
                    + H_PAD * POL * H_PAD)
        + GROUP_BATCHES * POL * 2 * L * H_PAD * L))
    bytes_accessed = int(sum(a.size * a.dtype.itemsize for a in args)
                         + NUM_GROUPS * ROWS * OUT_W * 4)

    out = pl.pallas_call(
        bote_kernel,
        out_shape=out_shape,
        grid_spec=pltpu.PrefetchScalarGridSpec(
            num_scalar_prefetch=0,
            grid=(NUM_GROUPS,),
            in_specs=in_specs,
            out_specs=out_specs,
        ),
        compiler_params=pltpu.CompilerParams(
            dimension_semantics=("arbitrary",)),
        cost_estimate=pl.CostEstimate(flops=flops, transcendentals=0,
                                      bytes_accessed=bytes_accessed),
    )(*args)

    # wrapper-side layout plumbing (free relative to in-kernel relayout work)
    ap_out = out[:, :TAG].reshape(B, L, TAG)
    op_out = out[:, TAG:2 * TAG].reshape(B, L, TAG)
    # out[b*L + i, TRI_OFF + p*L + j] = triplet[b, j, i, p]
    tri = out[:, TRI_OFF:TRI_OFF + POL * L].reshape(B, L, POL, L)
    triplet_out = jnp.transpose(tri, (0, 3, 1, 2))          # [B, L_j, L_i, POL]
    return ap_out, op_out, triplet_out


# ------------------------- parameter construction ----------------------------
def make_params(key):
    ks = jax.random.split(key, 16)

    def lin(k, fan_in, fan_out):
        # deterministic uniform init (shapes follow the PyTorch module, [in, out])
        bound = 1.0 / np.sqrt(fan_in)
        kw, kb = jax.random.split(k)
        w = jax.random.uniform(kw, (fan_in, fan_out), jnp.float32, -bound, bound)
        b = jax.random.uniform(kb, (1, fan_out), jnp.float32, -bound, bound)
        return w, b

    w_reduc, b_reduc = lin(ks[0], D_IN, REDUC)
    w_ap, b_ap = lin(ks[1], REDUC, HID)
    w_op, b_op = lin(ks[2], REDUC, HID)
    w_ap2, b_ap2 = lin(ks[3], REDUC, HID)
    w_op2, b_op2 = lin(ks[4], REDUC, HID)
    w_aptag, b_aptag = lin(ks[5], HID, TAG)
    w_optag, b_optag = lin(ks[6], HID, TAG)

    # Biaffine linear: nn.Linear(151, POL*150, bias=False), xavier-asymmetric init
    fan_in, fan_out = HID + 1, POL * HID
    std = np.sqrt(2.0 / float(fan_in + fan_out))
    a = np.sqrt(3.0) * std
    w_bi = jax.random.uniform(ks[7], (HID + 1, POL * HID), jnp.float32, -a, a / 3)

    # POS embedding (padding_idx = 0 -> zero row)
    emb = jax.random.normal(ks[8], (POS_VOCAB, POS_DIM), jnp.float32)
    emb = emb.at[0].set(0.0)

    params = (w_reduc, b_reduc, w_ap, b_ap, w_op, b_op, w_ap2, b_ap2,
              w_op2, b_op2, w_aptag, b_aptag, w_optag, b_optag, w_bi)
    return params, emb


# ------------------------------ reference ------------------------------------
def reference(x, params):
    """Numpy f32 reference with the same bf16 quantization points as the kernel
    (weights / activations quantized to bf16, biases f32, f32 accumulation)."""
    def q(a):
        return np.asarray(jnp.asarray(a, jnp.float32)
                          .astype(jnp.bfloat16).astype(jnp.float32))

    (w_reduc, b_reduc, w_ap, b_ap, w_op, b_op, w_ap2, b_ap2, w_op2, b_op2,
     w_aptag, b_aptag, w_optag, b_optag, w_bi) = [np.asarray(p, np.float32)
                                                  for p in params]
    relu = lambda a: np.maximum(a, 0.0)
    xq = q(x)                                                   # [B, L, 114]

    reduc = xq @ q(w_reduc) + b_reduc
    rq = q(reduc)
    ap_rep = relu(rq @ q(w_ap) + b_ap)
    op_rep = relu(rq @ q(w_op) + b_op)
    ap_node = relu(rq @ q(w_ap2) + b_ap2)
    op_node = relu(rq @ q(w_op2) + b_op2)

    ap_out = q(ap_rep) @ q(w_aptag) + b_aptag
    op_out = q(op_rep) @ q(w_optag) + b_optag

    apq, opq = q(ap_node), q(op_node)
    affine = apq @ q(w_bi[:HID]) + w_bi[HID]                    # [B, L, POL*HID]
    afq = q(affine).reshape(B, L, POL, HID)
    # triplet_out[b, j, i, p] = sum_d affine[b, i, p*HID+d] * op_node[b, j, d]
    tri = np.einsum('bipd,bjd->bjip', afq, opq)
    return (ap_out.astype(np.float32), op_out.astype(np.float32),
            tri.astype(np.float32))


# --------------------------------- main ---------------------------------------
if __name__ == "__main__":
    key = jax.random.PRNGKey(0)
    k_param, k_bert, k_pos = jax.random.split(key, 3)

    params, pos_emb = make_params(k_param)
    kernel_params = pack_params(params)

    # Stand-in for the aligned BERT features ([B, L, BERT_DIM]) and POS tag ids.
    bert_feats = jax.random.normal(k_bert, (B, L, BERT_DIM), jnp.float32)
    postag_indices = jax.random.randint(k_pos, (B, L), 0, POS_VOCAB)

    # Glue (plain JAX): embedding lookup + concat, matching torch.cat((embed, bert), dim=2).
    embed = jnp.take(pos_emb, postag_indices, axis=0)            # [B, L, 50]
    x = jnp.concatenate([embed, bert_feats], axis=2)             # [B, L, 114]

    ap_out, op_out, tri_out = jax.block_until_ready(bote_forward(x, kernel_params))

    ap_ref, op_ref, tri_ref = reference(x, params)
    np.testing.assert_allclose(np.asarray(ap_out), ap_ref, rtol=2e-3, atol=2e-3)
    np.testing.assert_allclose(np.asarray(op_out), op_ref, rtol=2e-3, atol=2e-3)
    np.testing.assert_allclose(np.asarray(tri_out), tri_ref, rtol=2e-3, atol=2e-3)

    print("KERNEL_OK")
</pallas_src>

<mosaic_0001>
module attributes {stable_mosaic.version = 11 : i64} {
  func.func @bote_kernel(%arg0: i32, %arg1: memref<16x128xbf16, #tpu.memory_space<vmem>>, %arg2: memref<128x400xbf16, #tpu.memory_space<vmem>>, %arg3: memref<1x400xf32, #tpu.memory_space<vmem>>, %arg4: memref<400x896xbf16, #tpu.memory_space<vmem>>, %arg5: memref<1x896xf32, #tpu.memory_space<vmem>>, %arg6: memref<384x16xbf16, #tpu.memory_space<vmem>>, %arg7: memref<1x16xf32, #tpu.memory_space<vmem>>, %arg8: memref<256x1024xbf16, #tpu.memory_space<vmem>>, %arg9: memref<1x1024xf32, #tpu.memory_space<vmem>>, %arg10: memref<16x128xf32, #tpu.memory_space<vmem>>) attributes {dimension_semantics = [#tpu.dimension_semantics<arbitrary>], iteration_bounds = array<i64: 1>, scalar_prefetch = 0 : i64, scratch_operands = 0 : i64, tpu.core_type = #tpu.core_type<tc>, window_params = [{transform_indices = @transform_0, window_bounds = array<i64: 16, 128>}, {pipeline_mode = #tpu.pipeline_mode<synchronous>, transform_indices = @transform_1, window_bounds = array<i64: 128, 400>}, {pipeline_mode = #tpu.pipeline_mode<synchronous>, transform_indices = @transform_2, window_bounds = array<i64: 1, 400>}, {pipeline_mode = #tpu.pipeline_mode<synchronous>, transform_indices = @transform_3, window_bounds = array<i64: 400, 896>}, {pipeline_mode = #tpu.pipeline_mode<synchronous>, transform_indices = @transform_4, window_bounds = array<i64: 1, 896>}, {pipeline_mode = #tpu.pipeline_mode<synchronous>, transform_indices = @transform_5, window_bounds = array<i64: 384, 16>}, {pipeline_mode = #tpu.pipeline_mode<synchronous>, transform_indices = @transform_6, window_bounds = array<i64: 1, 16>}, {pipeline_mode = #tpu.pipeline_mode<synchronous>, transform_indices = @transform_7, window_bounds = array<i64: 256, 1024>}, {pipeline_mode = #tpu.pipeline_mode<synchronous>, transform_indices = @transform_8, window_bounds = array<i64: 1, 1024>}, {transform_indices = @transform_9, window_bounds = array<i64: 16, 128>}]} {
    %c0 = arith.constant 0 : index
    %c0_0 = arith.constant 0 : index
    %0 = vector.load %arg1[%c0, %c0_0] : memref<16x128xbf16, #tpu.memory_space<vmem>>, vector<16x128xbf16>
    %c0_1 = arith.constant 0 : index
    %c0_2 = arith.constant 0 : index
    %1 = vector.load %arg2[%c0_1, %c0_2] : memref<128x400xbf16, #tpu.memory_space<vmem>>, vector<128x400xbf16>
    %cst = arith.constant dense<0.000000e+00> : vector<16x400xf32>
    %2 = tpu.matmul %0, %1, %cst {dimension_numbers = #tpu.dot_dimension_numbers<[1], [0], [0], [1], [0, 0, 1, 1], [], []>} : vector<16x128xbf16>, vector<128x400xbf16>, vector<16x400xf32> -> vector<16x400xf32>
    %c0_3 = arith.constant 0 : index
    %c0_4 = arith.constant 0 : index
    %3 = vector.load %arg3[%c0_3, %c0_4] : memref<1x400xf32, #tpu.memory_space<vmem>>, vector<1x400xf32>
    %4 = vector.broadcast %3 : vector<1x400xf32> to vector<16x400xf32>
    %5 = arith.addf %2, %4 : vector<16x400xf32>
    %6 = arith.truncf %5 : vector<16x400xf32> to vector<16x400xbf16>
    %c0_5 = arith.constant 0 : index
    %c0_6 = arith.constant 0 : index
    %7 = vector.load %arg4[%c0_5, %c0_6] : memref<400x896xbf16, #tpu.memory_space<vmem>>, vector<400x896xbf16>
    %cst_7 = arith.constant dense<0.000000e+00> : vector<16x896xf32>
    %8 = tpu.matmul %6, %7, %cst_7 {dimension_numbers = #tpu.dot_dimension_numbers<[1], [0], [0], [1], [0, 0, 1, 1], [], []>} : vector<16x400xbf16>, vector<400x896xbf16>, vector<16x896xf32> -> vector<16x896xf32>
    %c0_8 = arith.constant 0 : index
    %c0_9 = arith.constant 0 : index
    %9 = vector.load %arg5[%c0_8, %c0_9] : memref<1x896xf32, #tpu.memory_space<vmem>>, vector<1x896xf32>
    %10 = vector.broadcast %9 : vector<1x896xf32> to vector<16x896xf32>
    %11 = arith.addf %8, %10 : vector<16x896xf32>
    %cst_10 = arith.constant 0.000000e+00 : f32
    %12 = vector.broadcast %cst_10 : f32 to vector<16x896xf32>
    %13 = arith.maximumf %11, %12 : vector<16x896xf32>
    %14 = arith.truncf %13 : vector<16x896xf32> to vector<16x896xbf16>
    %15 = vector.extract_strided_slice %14 {offsets = [0, 0], sizes = [16, 384], strides = [1, 1]} : vector<16x896xbf16> to vector<16x384xbf16>
    %c0_11 = arith.constant 0 : index
    %c0_12 = arith.constant 0 : index
    %16 = vector.load %arg6[%c0_11, %c0_12] : memref<384x16xbf16, #tpu.memory_space<vmem>>, vector<384x16xbf16>
    %cst_13 = arith.constant dense<0.000000e+00> : vector<16x16xf32>
    %17 = tpu.matmul %15, %16, %cst_13 {dimension_numbers = #tpu.dot_dimension_numbers<[1], [0], [0], [1], [0, 0, 1, 1], [], []>} : vector<16x384xbf16>, vector<384x16xbf16>, vector<16x16xf32> -> vector<16x16xf32>
    %c0_14 = arith.constant 0 : index
    %c0_15 = arith.constant 0 : index
    %18 = vector.load %arg7[%c0_14, %c0_15] : memref<1x16xf32, #tpu.memory_space<vmem>>, vector<1x16xf32>
    %19 = vector.broadcast %18 : vector<1x16xf32> to vector<16x16xf32>
    %20 = arith.addf %17, %19 : vector<16x16xf32>
    %21 = vector.extract_strided_slice %14 {offsets = [0, 384], sizes = [16, 256], strides = [1, 1]} : vector<16x896xbf16> to vector<16x256xbf16>
    %c0_16 = arith.constant 0 : index
    %c0_17 = arith.constant 0 : index
    %22 = vector.load %arg8[%c0_16, %c0_17] : memref<256x1024xbf16, #tpu.memory_space<vmem>>, vector<256x1024xbf16>
    %cst_18 = arith.constant dense<0.000000e+00> : vector<16x1024xf32>
    %23 = tpu.matmul %21, %22, %cst_18 {dimension_numbers = #tpu.dot_dimension_numbers<[1], [0], [0], [1], [0, 0, 1, 1], [], []>} : vector<16x256xbf16>, vector<256x1024xbf16>, vector<16x1024xf32> -> vector<16x1024xf32>
    %c0_19 = arith.constant 0 : index
    %c0_20 = arith.constant 0 : index
    %24 = vector.load %arg9[%c0_19, %c0_20] : memref<1x1024xf32, #tpu.memory_space<vmem>>, vector<1x1024xf32>
    %25 = vector.broadcast %24 : vector<1x1024xf32> to vector<16x1024xf32>
    %26 = arith.addf %23, %25 : vector<16x1024xf32>
    %cst_21 = arith.constant 0.000000e+00 : f32
    %27 = vector.broadcast %cst_21 : f32 to vector<16x128xf32>
    %c0_22 = arith.constant 0 : index
    %c0_23 = arith.constant 0 : index
    %28 = vector.load %arg10[%c0_22, %c0_23] : memref<16x128xf32, #tpu.memory_space<vmem>>, vector<16x128xf32>
    tpu.vector_store %arg10[%c0_22, %c0_23], %27 {strides = array<i32>} : memref<16x128xf32, #tpu.memory_space<vmem>>, vector<16x128xf32>,
    %c0_24 = arith.constant 0 : index
    %c0_25 = arith.constant 0 : index
    %29 = vector.load %arg10[%c0_24, %c0_25] : memref<16x128xf32, #tpu.memory_space<vmem>>, vector<16x16xf32>
    tpu.vector_store %arg10[%c0_24, %c0_25], %20 {strides = array<i32>} : memref<16x128xf32, #tpu.memory_space<vmem>>, vector<16x16xf32>,
    %30 = vector.extract_strided_slice %13 {offsets = [0, 640], sizes = [8, 256], strides = [1, 1]} : vector<16x896xf32> to vector<8x256xf32>
    %31 = arith.truncf %30 : vector<8x256xf32> to vector<8x256xbf16>
    %32 = vector.extract_strided_slice %26 {offsets = [0, 0], sizes = [8, 256], strides = [1, 1]} : vector<16x1024xf32> to vector<8x256xf32>
    %33 = arith.truncf %32 : vector<8x256xf32> to vector<8x256xbf16>
    %cst_26 = arith.constant dense<0.000000e+00> : vector<8x8xf32>
    %34 = tpu.matmul %33, %31, %cst_26 {dimension_numbers = #tpu.dot_dimension_numbers<[1], [1], [0], [0], [0, 0, 1, 0], [], []>} : vector<8x256xbf16>, vector<8x256xbf16>, vector<8x8xf32> -> vector<8x8xf32>
    %c0_27 = arith.constant 0 : index
    %c16 = arith.constant 16 : index
    %35 = vector.load %arg10[%c0_27, %c16] : memref<16x128xf32, #tpu.memory_space<vmem>>, vector<8x8xf32>
    tpu.vector_store %arg10[%c0_27, %c16], %34 {strides = array<i32>} : memref<16x128xf32, #tpu.memory_space<vmem>>, vector<8x8xf32>,
    %36 = vector.extract_strided_slice %26 {offsets = [0, 256], sizes = [8, 256], strides = [1, 1]} : vector<16x1024xf32> to vector<8x256xf32>
    %37 = arith.truncf %36 : vector<8x256xf32> to vector<8x256xbf16>
    %cst_28 = arith.constant dense<0.000000e+00> : vector<8x8xf32>
    %38 = tpu.matmul %37, %31, %cst_28 {dimension_numbers = #tpu.dot_dimension_numbers<[1], [1], [0], [0], [0, 0, 1, 0], [], []>} : vector<8x256xbf16>, vector<8x256xbf16>, vector<8x8xf32> -> vector<8x8xf32>
    %c0_29 = arith.constant 0 : index
    %c24 = arith.constant 24 : index
    %39 = vector.load %arg10[%c0_29, %c24] : memref<16x128xf32, #tpu.memory_space<vmem>>, vector<8x8xf32>
    tpu.vector_store %arg10[%c0_29, %c24], %38 {strides = array<i32>} : memref<16x128xf32, #tpu.memory_space<vmem>>, vector<8x8xf32>,
    %40 = vector.extract_strided_slice %26 {offsets = [0, 512], sizes = [8, 256], strides = [1, 1]} : vector<16x1024xf32> to vector<8x256xf32>
    %41 = arith.truncf %40 : vector<8x256xf32> to vector<8x256xbf16>
    %cst_30 = arith.constant dense<0.000000e+00> : vector<8x8xf32>
    %42 = tpu.matmul %41, %31, %cst_30 {dimension_numbers = #tpu.dot_dimension_numbers<[1], [1], [0], [0], [0, 0, 1, 0], [], []>} : vector<8x256xbf16>, vector<8x256xbf16>, vector<8x8xf32> -> vector<8x8xf32>
    %c0_31 = arith.constant 0 : index
    %c32 = arith.constant 32 : index
    %43 = vector.load %arg10[%c0_31, %c32] : memref<16x128xf32, #tpu.memory_space<vmem>>, vector<8x8xf32>
    tpu.vector_store %arg10[%c0_31, %c32], %42 {strides = array<i32>} : memref<16x128xf32, #tpu.memory_space<vmem>>, vector<8x8xf32>,
    %44 = vector.extract_strided_slice %26 {offsets = [0, 768], sizes = [8, 256], strides = [1, 1]} : vector<16x1024xf32> to vector<8x256xf32>
    %45 = arith.truncf %44 : vector<8x256xf32> to vector<8x256xbf16>
    %cst_32 = arith.constant dense<0.000000e+00> : vector<8x8xf32>
    %46 = tpu.matmul %45, %31, %cst_32 {dimension_numbers = #tpu.dot_dimension_numbers<[1], [1], [0], [0], [0, 0, 1, 0], [], []>} : vector<8x256xbf16>, vector<8x256xbf16>, vector<8x8xf32> -> vector<8x8xf32>
    %c0_33 = arith.constant 0 : index
    %c40 = arith.constant 40 : index
    %47 = vector.load %arg10[%c0_33, %c40] : memref<16x128xf32, #tpu.memory_space<vmem>>, vector<8x8xf32>
    tpu.vector_store %arg10[%c0_33, %c40], %46 {strides = array<i32>} : memref<16x128xf32, #tpu.memory_space<vmem>>, vector<8x8xf32>,
    %48 = vector.extract_strided_slice %13 {offsets = [8, 640], sizes = [8, 256], strides = [1, 1]} : vector<16x896xf32> to vector<8x256xf32>
    %49 = arith.truncf %48 : vector<8x256xf32> to vector<8x256xbf16>
    %50 = vector.extract_strided_slice %26 {offsets = [8, 0], sizes = [8, 256], strides = [1, 1]} : vector<16x1024xf32> to vector<8x256xf32>
    %51 = arith.truncf %50 : vector<8x256xf32> to vector<8x256xbf16>
    %cst_34 = arith.constant dense<0.000000e+00> : vector<8x8xf32>
    %52 = tpu.matmul %51, %49, %cst_34 {dimension_numbers = #tpu.dot_dimension_numbers<[1], [1], [0], [0], [0, 0, 1, 0], [], []>} : vector<8x256xbf16>, vector<8x256xbf16>, vector<8x8xf32> -> vector<8x8xf32>
    %c8 = arith.constant 8 : index
    %c16_35 = arith.constant 16 : index
    %53 = vector.load %arg10[%c8, %c16_35] : memref<16x128xf32, #tpu.memory_space<vmem>>, vector<8x8xf32>
    tpu.vector_store %arg10[%c8, %c16_35], %52 {strides = array<i32>} : memref<16x128xf32, #tpu.memory_space<vmem>>, vector<8x8xf32>,
    %54 = vector.extract_strided_slice %26 {offsets = [8, 256], sizes = [8, 256], strides = [1, 1]} : vector<16x1024xf32> to vector<8x256xf32>
    %55 = arith.truncf %54 : vector<8x256xf32> to vector<8x256xbf16>
    %cst_36 = arith.constant dense<0.000000e+00> : vector<8x8xf32>
    %56 = tpu.matmul %55, %49, %cst_36 {dimension_numbers = #tpu.dot_dimension_numbers<[1], [1], [0], [0], [0, 0, 1, 0], [], []>} : vector<8x256xbf16>, vector<8x256xbf16>, vector<8x8xf32> -> vector<8x8xf32>
    %c8_37 = arith.constant 8 : index
    %c24_38 = arith.constant 24 : index
    %57 = vector.load %arg10[%c8_37, %c24_38] : memref<16x128xf32, #tpu.memory_space<vmem>>, vector<8x8xf32>
    tpu.vector_store %arg10[%c8_37, %c24_38], %56 {strides = array<i32>} : memref<16x128xf32, #tpu.memory_space<vmem>>, vector<8x8xf32>,
    %58 = vector.extract_strided_slice %26 {offsets = [8, 512], sizes = [8, 256], strides = [1, 1]} : vector<16x1024xf32> to vector<8x256xf32>
    %59 = arith.truncf %58 : vector<8x256xf32> to vector<8x256xbf16>
    %cst_39 = arith.constant dense<0.000000e+00> : vector<8x8xf32>
    %60 = tpu.matmul %59, %49, %cst_39 {dimension_numbers = #tpu.dot_dimension_numbers<[1], [1], [0], [0], [0, 0, 1, 0], [], []>} : vector<8x256xbf16>, vector<8x256xbf16>, vector<8x8xf32> -> vector<8x8xf32>
    %c8_40 = arith.constant 8 : index
    %c32_41 = arith.constant 32 : index
    %61 = vector.load %arg10[%c8_40, %c32_41] : memref<16x128xf32, #tpu.memory_space<vmem>>, vector<8x8xf32>
    tpu.vector_store %arg10[%c8_40, %c32_41], %60 {strides = array<i32>} : memref<16x128xf32, #tpu.memory_space<vmem>>, vector<8x8xf32>,
    %62 = vector.extract_strided_slice %26 {offsets = [8, 768], sizes = [8, 256], strides = [1, 1]} : vector<16x1024xf32> to vector<8x256xf32>
    %63 = arith.truncf %62 : vector<8x256xf32> to vector<8x256xbf16>
    %cst_42 = arith.constant dense<0.000000e+00> : vector<8x8xf32>
    %64 = tpu.matmul %63, %49, %cst_42 {dimension_numbers = #tpu.dot_dimension_numbers<[1], [1], [0], [0], [0, 0, 1, 0], [], []>} : vector<8x256xbf16>, vector<8x256xbf16>, vector<8x8xf32> -> vector<8x8xf32>
    %c8_43 = arith.constant 8 : index
    %c40_44 = arith.constant 40 : index
    %65 = vector.load %arg10[%c8_43, %c40_44] : memref<16x128xf32, #tpu.memory_space<vmem>>, vector<8x8xf32>
    tpu.vector_store %arg10[%c8_43, %c40_44], %64 {strides = array<i32>} : memref<16x128xf32, #tpu.memory_space<vmem>>, vector<8x8xf32>,
    return
  }
  func.func @transform_0(%arg0: i32) -> (i32, i32) {
    %c0_i32 = arith.constant 0 : i32
    %c0_i32_0 = arith.constant 0 : i32
    return %arg0, %c0_i32 : i32, i32
  }
  func.func @transform_1(%arg0: i32) -> (i32, i32) {
    %c0_i32 = arith.constant 0 : i32
    %c0_i32_0 = arith.constant 0 : i32
    %c0_i32_1 = arith.constant 0 : i32
    return %c0_i32, %c0_i32_0 : i32, i32
  }
  func.func @transform_2(%arg0: i32) -> (i32, i32) {
    %c0_i32 = arith.constant 0 : i32
    %c0_i32_0 = arith.constant 0 : i32
    %c0_i32_1 = arith.constant 0 : i32
    return %c0_i32, %c0_i32_0 : i32, i32
  }
  func.func @transform_3(%arg0: i32) -> (i32, i32) {
    %c0_i32 = arith.constant 0 : i32
    %c0_i32_0 = arith.constant 0 : i32
    %c0_i32_1 = arith.constant 0 : i32
    return %c0_i32, %c0_i32_0 : i32, i32
  }
  func.func @transform_4(%arg0: i32) -> (i32, i32) {
    %c0_i32 = arith.constant 0 : i32
    %c0_i32_0 = arith.constant 0 : i32
    %c0_i32_1 = arith.constant 0 : i32
    return %c0_i32, %c0_i32_0 : i32, i32
  }
  func.func @transform_5(%arg0: i32) -> (i32, i32) {
    %c0_i32 = arith.constant 0 : i32
    %c0_i32_0 = arith.constant 0 : i32
    %c0_i32_1 = arith.constant 0 : i32
    return %c0_i32, %c0_i32_0 : i32, i32
  }
  func.func @transform_6(%arg0: i32) -> (i32, i32) {
    %c0_i32 = arith.constant 0 : i32
    %c0_i32_0 = arith.constant 0 : i32
    %c0_i32_1 = arith.constant 0 : i32
    return %c0_i32, %c0_i32_0 : i32, i32
  }
  func.func @transform_7(%arg0: i32) -> (i32, i32) {
    %c0_i32 = arith.constant 0 : i32
    %c0_i32_0 = arith.constant 0 : i32
    %c0_i32_1 = arith.constant 0 : i32
    return %c0_i32, %c0_i32_0 : i32, i32
  }
  func.func @transform_8(%arg0: i32) -> (i32, i32) {
    %c0_i32 = arith.constant 0 : i32
    %c0_i32_0 = arith.constant 0 : i32
    %c0_i32_1 = arith.constant 0 : i32
    return %c0_i32, %c0_i32_0 : i32, i32
  }
  func.func @transform_9(%arg0: i32) -> (i32, i32) {
    %c0_i32 = arith.constant 0 : i32
    %c0_i32_0 = arith.constant 0 : i32
    return %arg0, %c0_i32 : i32, i32
  }
}

</mosaic_0001>

<llo_original>
// kernel: bote_forward.1
$region0: #{bote_forward.1}
  #allocation0 [shape = 'u32[]', space=smem, size = 0x4, offset = 0x4, fixed_abs, tag = 'smem constant byte address 0x4 - core index']
  #allocation1 [shape = 'u32[72,128]{1,0:T(1,128)}', space=vmem, size = 0x9000, scoped, tag = 'internal scratch']
  %s0 = inlined_call_operand.vmem [shape: bf16[16,128], index: 0, kind: input, shape index: {}]
  %s1 = inlined_call_operand.vmem [shape: bf16[128,400], index: 1, kind: input, shape index: {}]
  %s2 = inlined_call_operand.vmem [shape: f32[1,400], index: 2, kind: input, shape index: {}]
  %s3 = inlined_call_operand.hbm [shape: bf16[400,896], index: 3, kind: input, shape index: {}]
  %s4 = inlined_call_operand.vmem [shape: f32[1,896], index: 4, kind: input, shape index: {}]
  %s5 = inlined_call_operand.vmem [shape: bf16[384,16], index: 5, kind: input, shape index: {}]
  %s6 = inlined_call_operand.vmem [shape: f32[1,16], index: 6, kind: input, shape index: {}]
  %s7 = inlined_call_operand.hbm [shape: bf16[256,1024], index: 7, kind: input, shape index: {}]
  %s8 = inlined_call_operand.vmem [shape: f32[1,1024], index: 8, kind: input, shape index: {}]
  %s9 = inlined_call_operand.vmem [shape: f32[16,128], index: 9, kind: output, shape index: {}]
  %s10 = sld [smem:[#allocation0]]
  $region54: #{bote_forward.1} parent=0
    _
  %s12 = ssub.s32 1, %s10
  %s13 = scalar_select 0, %s12, %s10
  $region1: #{bote_forward.1} parent=0
    #allocation2 [shape = 'u8[716800]{0}', space=vmem, size = 0xaf000, scoped, tag = 'input window, operand 3, single buffered']
    #allocation3 [shape = 's32[1]{0}', space=sflag, size = 0x4, scoped, tag = 'scoped memory for bote_forward.1']
    #allocation4 [shape = 'u8[524288]{0}', space=vmem, size = 0x80000, scoped, tag = 'input window, operand 7, single buffered']
    #allocation5 [shape = 's32[1]{0}', space=sflag, size = 0x4, scoped, tag = 'scoped memory for bote_forward.1']
    %14 = vsyncpa [#allocation3], 0
    %15 = vsyncpa [#allocation5], 0
    // Predicated region
    $region2: #{bote_forward.1} parent=1 // pred_check
      _
    $region3: #{bote_forward.1} parent=1 // pred_check_branch
      %17 = sbr.rel (0) target = $region5
    $region4: #{bote_forward.1} parent=1 // pred_region
      _
    $region5: #{bote_forward.1} parent=1 // pred_fallthru
      _
    // Predicated region
    $region6: #{bote_forward.1} parent=1 // pred_check
      _
    $region7: #{bote_forward.1} parent=1 // pred_check_branch
      %19 = sbr.rel (0) target = $region9
    $region8: #{bote_forward.1} parent=1 // pred_region
      _
    $region9: #{bote_forward.1} parent=1 // pred_fallthru
      _
    // Predicated region
    $region10: #{bote_forward.1} parent=1 // pred_check
      _
    $region11: #{bote_forward.1} parent=1 // pred_check_branch
      %21 = sbr.rel (0) target = $region13
    $region12: #{bote_forward.1} parent=1 // pred_region
      _
    $region13: #{bote_forward.1} parent=1 // pred_fallthru
      _
    // Predicated region
    $region14: #{bote_forward.1} parent=1 // pred_check
      _
    $region15: #{bote_forward.1} parent=1 // pred_check_branch
      %23 = sbr.rel (0) target = $region17
    $region16: #{bote_forward.1} parent=1 // pred_region
      %25 = vsyncadd [#allocation3], 0
      %s26 = sshll.u32 %s3, 4
      %s27 = int_to_ptr.hbm [resolvable:$true] %s26
      %s28 = sshll.u32 [#allocation2], 4
      %s29 = int_to_ptr.vmem [resolvable:$true] %s28
      %34 = dma.hbm_to_vmem [thread:$0]  %s27, 22400, %s29, [#allocation3], 448, 448, 28
    $region17: #{bote_forward.1} parent=1 // pred_fallthru
      _
    // Predicated region
    $region18: #{bote_forward.1} parent=1 // pred_check
      _
    $region19: #{bote_forward.1} parent=1 // pred_check_branch
      %36 = sbr.rel (0) target = $region21
    $region20: #{bote_forward.1} parent=1 // pred_region
      _
    $region21: #{bote_forward.1} parent=1 // pred_fallthru
      _
    // Predicated region
    $region22: #{bote_forward.1} parent=1 // pred_check
      _
    $region23: #{bote_forward.1} parent=1 // pred_check_branch
      %38 = sbr.rel (0) target = $region25
    $region24: #{bote_forward.1} parent=1 // pred_region
      _
    $region25: #{bote_forward.1} parent=1 // pred_fallthru
      _
    // Predicated region
    $region26: #{bote_forward.1} parent=1 // pred_check
      _
    $region27: #{bote_forward.1} parent=1 // pred_check_branch
      %40 = sbr.rel (0) target = $region29
    $region28: #{bote_forward.1} parent=1 // pred_region
      _
    $region29: #{bote_forward.1} parent=1 // pred_fallthru
      _
    // Predicated region
    $region30: #{bote_forward.1} parent=1 // pred_check
      _
    $region31: #{bote_forward.1} parent=1 // pred_check_branch
      %42 = sbr.rel (0) target = $region33
    $region32: #{bote_forward.1} parent=1 // pred_region
      %44 = vsyncadd [#allocation5], 0
      %s45 = sshll.u32 %s7, 4
      %s46 = int_to_ptr.hbm [resolvable:$true] %s45
      %s47 = sshll.u32 [#allocation4], 4
      %s48 = int_to_ptr.vmem [resolvable:$true] %s47
      %53 = dma.hbm_to_vmem [thread:$0]  %s46, 16384, %s48, [#allocation5], 512, 512, 32
    $region33: #{bote_forward.1} parent=1 // pred_fallthru
      _
    // Predicated region
    $region34: #{bote_forward.1} parent=1 // pred_check
      _
    $region35: #{bote_forward.1} parent=1 // pred_check_branch
      %55 = sbr.rel (0) target = $region37
    $region36: #{bote_forward.1} parent=1 // pred_region
      _
    $region37: #{bote_forward.1} parent=1 // pred_fallthru
      _
    // Predicated region
    $region38: #{bote_forward.1} parent=1 // pred_check
      _
    $region39: #{bote_forward.1} parent=1 // pred_check_branch
      %57 = sbr.rel (0) target = $region41
    $region40: #{bote_forward.1} parent=1 // pred_region
      %59 = dma.done [#allocation3], 22400
    $region41: #{bote_forward.1} parent=1 // pred_fallthru
      _
    // Predicated region
    $region42: #{bote_forward.1} parent=1 // pred_check
      _
    $region43: #{bote_forward.1} parent=1 // pred_check_branch
      %61 = sbr.rel (0) target = $region45
    $region44: #{bote_forward.1} parent=1 // pred_region
      %63 = dma.done [#allocation5], 16384
    $region45: #{bote_forward.1} parent=1 // pred_fallthru
      _
    %v65 = vld [vmem:[%s0] sm:$0xf]
    %v66 = vld [vmem:[%s0 + $0x4] sm:$0xf]
    %v67 = vld [vmem:[%s1] sm:$0xff]
    %v68 = vld [vmem:[%s1 + $0x8] sm:$0xff]
    %v69 = vld [vmem:[%s1 + $0x10] sm:$0xff]
    %v70 = vld [vmem:[%s1 + $0x18] sm:$0xff]
    %v71 = vld [vmem:[%s1 + $0x20] sm:$0xff]
    %v72 = vld [vmem:[%s1 + $0x28] sm:$0xff]
    %v73 = vld [vmem:[%s1 + $0x30] sm:$0xff]
    %v74 = vld [vmem:[%s1 + $0x38] sm:$0xff]
    %v75 = vld [vmem:[%s1 + $0x40] sm:$0xff]
    %v76 = vld [vmem:[%s1 + $0x48] sm:$0xff]
    %v77 = vld [vmem:[%s1 + $0x50] sm:$0xff]
    %v78 = vld [vmem:[%s1 + $0x58] sm:$0xff]
    %v79 = vld [vmem:[%s1 + $0x60] sm:$0xff]
    %v80 = vld [vmem:[%s1 + $0x68] sm:$0xff]
    %v81 = vld [vmem:[%s1 + $0x70] sm:$0xff]
    %v82 = vld [vmem:[%s1 + $0x78] sm:$0xff]
    %v83 = vld [vmem:[%s1 + $0x80] sm:$0xff]
    %v84 = vld [vmem:[%s1 + $0x88] sm:$0xff]
    %v85 = vld [vmem:[%s1 + $0x90] sm:$0xff]
    %v86 = vld [vmem:[%s1 + $0x98] sm:$0xff]
    %v87 = vld [vmem:[%s1 + $0xa0] sm:$0xff]
    %v88 = vld [vmem:[%s1 + $0xa8] sm:$0xff]
    %v89 = vld [vmem:[%s1 + $0xb0] sm:$0xff]
    %v90 = vld [vmem:[%s1 + $0xb8] sm:$0xff]
    %v91 = vld [vmem:[%s1 + $0xc0] sm:$0xff]
    %v92 = vld [vmem:[%s1 + $0xc8] sm:$0xff]
    %v93 = vld [vmem:[%s1 + $0xd0] sm:$0xff]
    %v94 = vld [vmem:[%s1 + $0xd8] sm:$0xff]
    %v95 = vld [vmem:[%s1 + $0xe0] sm:$0xff]
    %v96 = vld [vmem:[%s1 + $0xe8] sm:$0xff]
    %v97 = vld [vmem:[%s1 + $0xf0] sm:$0xff]
    %v98 = vld [vmem:[%s1 + $0xf8] sm:$0xff]
    %v99 = vld [vmem:[%s2] sm:$0xf]
    %v101 = vperm.slane %v99, 0
    %v102 = vperm.slane %v99, 1
    %v103 = vperm.slane %v99, 2
    %v104 = vperm.slane %v99, 3
    %v111 = vunpack.c.l.b16 %v65
    %v112 = vunpack.c.l.b16 %v66
    %v113 = vpack.c.b16 %v112, %v111
    %v147 = vunpack.c.l.b16 %v67
    %v148 = vunpack.c.h.b16 %v67
    %v149 = vunpack.c.l.b16 %v68
    %v150 = vunpack.c.h.b16 %v68
    %v151 = vunpack.c.l.b16 %v69
    %v152 = vunpack.c.h.b16 %v69
    %v153 = vunpack.c.l.b16 %v70
    %v154 = vunpack.c.h.b16 %v70
    %v155 = vunpack.c.l.b16 %v71
    %v156 = vunpack.c.h.b16 %v71
    %v157 = vunpack.c.l.b16 %v72
    %v158 = vunpack.c.h.b16 %v72
    %v159 = vunpack.c.l.b16 %v73
    %v160 = vunpack.c.h.b16 %v73
    %v161 = vunpack.c.l.b16 %v74
    %v162 = vunpack.c.h.b16 %v74
    %v163 = vunpack.c.l.b16 %v75
    %v164 = vunpack.c.h.b16 %v75
    %v165 = vunpack.c.l.b16 %v76
    %v166 = vunpack.c.h.b16 %v76
    %v167 = vunpack.c.l.b16 %v77
    %v168 = vunpack.c.h.b16 %v77
    %v169 = vunpack.c.l.b16 %v78
    %v170 = vunpack.c.h.b16 %v78
    %v171 = vunpack.c.l.b16 %v79
    %v172 = vunpack.c.h.b16 %v79
    %v173 = vunpack.c.l.b16 %v80
    %v174 = vunpack.c.h.b16 %v80
    %v175 = vunpack.c.l.b16 %v81
    %v176 = vunpack.c.h.b16 %v81
    %v177 = vunpack.c.l.b16 %v82
    %v178 = vunpack.c.h.b16 %v82
    %v179 = vunpack.c.l.b16 %v83
    %v180 = vunpack.c.h.b16 %v83
    %v181 = vunpack.c.l.b16 %v84
    %v182 = vunpack.c.h.b16 %v84
    %v183 = vunpack.c.l.b16 %v85
    %v184 = vunpack.c.h.b16 %v85
    %v185 = vunpack.c.l.b16 %v86
    %v186 = vunpack.c.h.b16 %v86
    %v187 = vunpack.c.l.b16 %v87
    %v188 = vunpack.c.h.b16 %v87
    %v189 = vunpack.c.l.b16 %v88
    %v190 = vunpack.c.h.b16 %v88
    %v191 = vunpack.c.l.b16 %v89
    %v192 = vunpack.c.h.b16 %v89
    %v193 = vunpack.c.l.b16 %v90
    %v194 = vunpack.c.h.b16 %v90
    %v195 = vunpack.c.l.b16 %v91
    %v196 = vunpack.c.h.b16 %v91
    %v197 = vunpack.c.l.b16 %v92
    %v198 = vunpack.c.h.b16 %v92
    %v199 = vunpack.c.l.b16 %v93
    %v200 = vunpack.c.h.b16 %v93
    %v201 = vunpack.c.l.b16 %v94
    %v202 = vunpack.c.h.b16 %v94
    %v203 = vunpack.c.l.b16 %v95
    %v204 = vunpack.c.h.b16 %v95
    %v205 = vunpack.c.l.b16 %v96
    %v206 = vunpack.c.h.b16 %v96
    %v207 = vunpack.c.l.b16 %v97
    %v208 = vunpack.c.h.b16 %v97
    %v209 = vunpack.c.l.b16 %v98
    %v210 = vunpack.c.h.b16 %v98
    %v211 = vpack.c.b16 %v151, %v147
    %v212 = vpack.c.b16 %v152, %v148
    %v213 = vpack.c.b16 %v153, %v149
    %v214 = vpack.c.b16 %v154, %v150
    %v215 = vpack.c.b16 %v159, %v155
    %v216 = vpack.c.b16 %v160, %v156
    %v217 = vpack.c.b16 %v161, %v157
    %v218 = vpack.c.b16 %v162, %v158
    %v219 = vpack.c.b16 %v167, %v163
    %v220 = vpack.c.b16 %v168, %v164
    %v221 = vpack.c.b16 %v169, %v165
    %v222 = vpack.c.b16 %v170, %v166
    %v223 = vpack.c.b16 %v175, %v171
    %v224 = vpack.c.b16 %v176, %v172
    %v225 = vpack.c.b16 %v177, %v173
    %v226 = vpack.c.b16 %v178, %v174
    %v227 = vpack.c.b16 %v183, %v179
    %v228 = vpack.c.b16 %v184, %v180
    %v229 = vpack.c.b16 %v185, %v181
    %v230 = vpack.c.b16 %v186, %v182
    %v231 = vpack.c.b16 %v191, %v187
    %v232 = vpack.c.b16 %v192, %v188
    %v233 = vpack.c.b16 %v193, %v189
    %v234 = vpack.c.b16 %v194, %v190
    %v235 = vpack.c.b16 %v199, %v195
    %v236 = vpack.c.b16 %v200, %v196
    %v237 = vpack.c.b16 %v201, %v197
    %v238 = vpack.c.b16 %v202, %v198
    %v239 = vpack.c.b16 %v207, %v203
    %v240 = vpack.c.b16 %v208, %v204
    %v241 = vpack.c.b16 %v209, %v205
    %v242 = vpack.c.b16 %v210, %v206
    %275 = vmatpush.bf16.msra.mxu0 %v239
    %276 = vmatpush.bf16.msra.mxu0 %v235
    %277 = vmatpush.bf16.msra.mxu0 %v231
    %278 = vmatpush.bf16.msra.mxu0 %v227
    %279 = vmatpush.bf16.msra.mxu0 %v223
    %280 = vmatpush.bf16.msra.mxu0 %v219
    %281 = vmatpush.bf16.msra.mxu0 %v215
    %282 = vmatpush.bf16.msra.mxu0 %v211
    %283 = vmatmul.bf16.gmra.mxu0 %v113
    %v284 = vpop.f32.mrf.mxu0
    %v285 = vadd.f32 %v101, %v284
    %v286 = vpop.f32.mrf.mxu0
    %v287 = vadd.f32 %v101, %v286
    %288 = vdwg.mxu0
    %289 = vmatpush.bf16.msra.mxu0 %v240
    %290 = vmatpush.bf16.msra.mxu0 %v236
    %291 = vmatpush.bf16.msra.mxu0 %v232
    %292 = vmatpush.bf16.msra.mxu0 %v228
    %293 = vmatpush.bf16.msra.mxu0 %v224
    %294 = vmatpush.bf16.msra.mxu0 %v220
    %295 = vmatpush.bf16.msra.mxu0 %v216
    %296 = vmatpush.bf16.msra.mxu0 %v212
    %297 = vmatmul.bf16.gmra.mxu0 %v113
    %v298 = vpop.f32.mrf.mxu0
    %v299 = vadd.f32 %v102, %v298
    %v300 = vpop.f32.mrf.mxu0
    %v301 = vadd.f32 %v102, %v300
    %302 = vdwg.mxu0
    %303 = vmatpush.bf16.msra.mxu0 %v241
    %304 = vmatpush.bf16.msra.mxu0 %v237
    %305 = vmatpush.bf16.msra.mxu0 %v233
    %306 = vmatpush.bf16.msra.mxu0 %v229
    %307 = vmatpush.bf16.msra.mxu0 %v225
    %308 = vmatpush.bf16.msra.mxu0 %v221
    %309 = vmatpush.bf16.msra.mxu0 %v217
    %310 = vmatpush.bf16.msra.mxu0 %v213
    %311 = vmatmul.bf16.gmra.mxu0 %v113
    %v312 = vpop.f32.mrf.mxu0
    %v313 = vadd.f32 %v103, %v312
    %v314 = vpop.f32.mrf.mxu0
    %v315 = vadd.f32 %v103, %v314
    %316 = vdwg.mxu0
    %317 = vmatpush.bf16.msra.mxu0 %v242
    %318 = vmatpush.bf16.msra.mxu0 %v238
    %319 = vmatpush.bf16.msra.mxu0 %v234
    %320 = vmatpush.bf16.msra.mxu0 %v230
    %321 = vmatpush.bf16.msra.mxu0 %v226
    %322 = vmatpush.bf16.msra.mxu0 %v222
    %323 = vmatpush.bf16.msra.mxu0 %v218
    %324 = vmatpush.bf16.msra.mxu0 %v214
    %325 = vmatmul.bf16.gmra.mxu0 %v113
    %v326 = vpop.f32.mrf.mxu0
    %v327 = vadd.f32 %v104, %v326
    %v328 = vpop.f32.mrf.mxu0
    %v329 = vadd.f32 %v104, %v328
    %330 = vdwg.mxu0
    %v331 = vpack.c.bf16 %v287, %v285
    %v332 = vpack.c.bf16 %v301, %v299
    %v333 = vpack.c.bf16 %v315, %v313
    %v334 = vpack.c.bf16 %v329, %v327
    %v335 = vld [vmem:[#allocation2] sm:$0xff]
    %v336 = vld [vmem:[#allocation2 + $0x8] sm:$0xff]
    %v337 = vld [vmem:[#allocation2 + $0x10] sm:$0xff]
    %v338 = vld [vmem:[#allocation2 + $0x18] sm:$0xf]
    %v339 = vld [vmem:[#allocation2 + $0x1c] sm:$0xff]
    %v340 = vld [vmem:[#allocation2 + $0x24] sm:$0xff]
    %v341 = vld [vmem:[#allocation2 + $0x2c] sm:$0xff]
    %v342 = vld [vmem:[#allocation2 + $0x34] sm:$0xf]
    %v343 = vld [vmem:[#allocation2 + $0x38] sm:$0xff]
    %v344 = vld [vmem:[#allocation2 + $0x40] sm:$0xff]
    %v345 = vld [vmem:[#allocation2 + $0x48] sm:$0xff]
    %v346 = vld [vmem:[#allocation2 + $0x50] sm:$0xf]
    %v347 = vld [vmem:[#allocation2 + $0x54] sm:$0xff]
    %v348 = vld [vmem:[#allocation2 + $0x5c] sm:$0xff]
    %v349 = vld [vmem:[#allocation2 + $0x64] sm:$0xff]
    %v350 = vld [vmem:[#allocation2 + $0x6c] sm:$0xf]
    %v351 = vld [vmem:[#allocation2 + $0x70] sm:$0xff]
    %v352 = vld [vmem:[#allocation2 + $0x78] sm:$0xff]
    %v353 = vld [vmem:[#allocation2 + $0x80] sm:$0xff]
    %v354 = vld [vmem:[#allocation2 + $0x88] sm:$0xf]
    %v355 = vld [vmem:[#allocation2 + $0x8c] sm:$0xff]
    %v356 = vld [vmem:[#allocation2 + $0x94] sm:$0xff]
    %v357 = vld [vmem:[#allocation2 + $0x9c] sm:$0xff]
    %v358 = vld [vmem:[#allocation2 + $0xa4] sm:$0xf]
    %v359 = vld [vmem:[#allocation2 + $0xa8] sm:$0xff]
    %v360 = vld [vmem:[#allocation2 + $0xb0] sm:$0xff]
    %v361 = vld [vmem:[#allocation2 + $0xb8] sm:$0xff]
    %v362 = vld [vmem:[#allocation2 + $0xc0] sm:$0xf]
    %v363 = vld [vmem:[#allocation2 + $0xc4] sm:$0xff]
    %v364 = vld [vmem:[#allocation2 + $0xcc] sm:$0xff]
    %v365 = vld [vmem:[#allocation2 + $0xd4] sm:$0xff]
    %v366 = vld [vmem:[#allocation2 + $0xdc] sm:$0xf]
    %v367 = vld [vmem:[#allocation2 + $0xe0] sm:$0xff]
    %v368 = vld [vmem:[#allocation2 + $0xe8] sm:$0xff]
    %v369 = vld [vmem:[#allocation2 + $0xf0] sm:$0xff]
    %v370 = vld [vmem:[#allocation2 + $0xf8] sm:$0xf]
    %v371 = vld [vmem:[#allocation2 + $0xfc] sm:$0xff]
    %v372 = vld [vmem:[#allocation2 + $0x104] sm:$0xff]
    %v373 = vld [vmem:[#allocation2 + $0x10c] sm:$0xff]
    %v374 = vld [vmem:[#allocation2 + $0x114] sm:$0xf]
    %v375 = vld [vmem:[#allocation2 + $0x118] sm:$0xff]
    %v376 = vld [vmem:[#allocation2 + $0x120] sm:$0xff]
    %v377 = vld [vmem:[#allocation2 + $0x128] sm:$0xff]
    %v378 = vld [vmem:[#allocation2 + $0x130] sm:$0xf]
    %v379 = vld [vmem:[#allocation2 + $0x134] sm:$0xff]
    %v380 = vld [vmem:[#allocation2 + $0x13c] sm:$0xff]
    %v381 = vld [vmem:[#allocation2 + $0x144] sm:$0xff]
    %v382 = vld [vmem:[#allocation2 + $0x14c] sm:$0xf]
    %v383 = vld [vmem:[#allocation2 + $0x150] sm:$0xff]
    %v384 = vld [vmem:[#allocation2 + $0x158] sm:$0xff]
    %v385 = vld [vmem:[#allocation2 + $0x160] sm:$0xff]
    %v386 = vld [vmem:[#allocation2 + $0x168] sm:$0xf]
    %v387 = vld [vmem:[#allocation2 + $0x16c] sm:$0xff]
    %v388 = vld [vmem:[#allocation2 + $0x174] sm:$0xff]
    %v389 = vld [vmem:[#allocation2 + $0x17c] sm:$0xff]
    %v390 = vld [vmem:[#allocation2 + $0x184] sm:$0xf]
    %v391 = vld [vmem:[#allocation2 + $0x188] sm:$0xff]
    %v392 = vld [vmem:[#allocation2 + $0x190] sm:$0xff]
    %v393 = vld [vmem:[#allocation2 + $0x198] sm:$0xff]
    %v394 = vld [vmem:[#allocation2 + $0x1a0] sm:$0xf]
    %v395 = vld [vmem:[#allocation2 + $0x1a4] sm:$0xff]
    %v396 = vld [vmem:[#allocation2 + $0x1ac] sm:$0xff]
    %v397 = vld [vmem:[#allocation2 + $0x1b4] sm:$0xff]
    %v398 = vld [vmem:[#allocation2 + $0x1bc] sm:$0xf]
    %v399 = vld [vmem:[#allocation2 + $0x1c0] sm:$0xff]
    %v400 = vld [vmem:[#allocation2 + $0x1c8] sm:$0xff]
    %v401 = vld [vmem:[#allocation2 + $0x1d0] sm:$0xff]
    %v402 = vld [vmem:[#allocation2 + $0x1d8] sm:$0xf]
    %v403 = vld [vmem:[#allocation2 + $0x1dc] sm:$0xff]
    %v404 = vld [vmem:[#allocation2 + $0x1e4] sm:$0xff]
    %v405 = vld [vmem:[#allocation2 + $0x1ec] sm:$0xff]
    %v406 = vld [vmem:[#allocation2 + $0x1f4] sm:$0xf]
    %v407 = vld [vmem:[#allocation2 + $0x1f8] sm:$0xff]
    %v408 = vld [vmem:[#allocation2 + $0x200] sm:$0xff]
    %v409 = vld [vmem:[#allocation2 + $0x208] sm:$0xff]
    %v410 = vld [vmem:[#allocation2 + $0x210] sm:$0xf]
    %v411 = vld [vmem:[#allocation2 + $0x214] sm:$0xff]
    %v412 = vld [vmem:[#allocation2 + $0x21c] sm:$0xff]
    %v413 = vld [vmem:[#allocation2 + $0x224] sm:$0xff]
    %v414 = vld [vmem:[#allocation2 + $0x22c] sm:$0xf]
    %v415 = vld [vmem:[#allocation2 + $0x230] sm:$0xff]
    %v416 = vld [vmem:[#allocation2 + $0x238] sm:$0xff]
    %v417 = vld [vmem:[#allocation2 + $0x240] sm:$0xff]
    %v418 = vld [vmem:[#allocation2 + $0x248] sm:$0xf]
    %v419 = vld [vmem:[#allocation2 + $0x24c] sm:$0xff]
    %v420 = vld [vmem:[#allocation2 + $0x254] sm:$0xff]
    %v421 = vld [vmem:[#allocation2 + $0x25c] sm:$0xff]
    %v422 = vld [vmem:[#allocation2 + $0x264] sm:$0xf]
    %v423 = vld [vmem:[#allocation2 + $0x268] sm:$0xff]
    %v424 = vld [vmem:[#allocation2 + $0x270] sm:$0xff]
    %v425 = vld [vmem:[#allocation2 + $0x278] sm:$0xff]
    %v426 = vld [vmem:[#allocation2 + $0x280] sm:$0xf]
    %v427 = vld [vmem:[#allocation2 + $0x284] sm:$0xff]
    %v428 = vld [vmem:[#allocation2 + $0x28c] sm:$0xff]
    %v429 = vld [vmem:[#allocation2 + $0x294] sm:$0xff]
    %v430 = vld [vmem:[#allocation2 + $0x29c] sm:$0xf]
    %v431 = vld [vmem:[#allocation2 + $0x2a0] sm:$0xff]
    %v432 = vld [vmem:[#allocation2 + $0x2a8] sm:$0xff]
    %v433 = vld [vmem:[#allocation2 + $0x2b0] sm:$0xff]
    %v434 = vld [vmem:[#allocation2 + $0x2b8] sm:$0xf]
    %v435 = vld [vmem:[#allocation2 + $0x2bc] sm:$0xff]
    %v436 = vld [vmem:[#allocation2 + $0x2c4] sm:$0xff]
    %v437 = vld [vmem:[#allocation2 + $0x2cc] sm:$0xff]
    %v438 = vld [vmem:[#allocation2 + $0x2d4] sm:$0xf]
    %v439 = vld [vmem:[#allocation2 + $0x2d8] sm:$0xff]
    %v440 = vld [vmem:[#allocation2 + $0x2e0] sm:$0xff]
    %v441 = vld [vmem:[#allocation2 + $0x2e8] sm:$0xff]
    %v442 = vld [vmem:[#allocation2 + $0x2f0] sm:$0xf]
    %v443 = vld [vmem:[#allocation2 + $0x2f4] sm:$0xff]
    %v444 = vld [vmem:[#allocation2 + $0x2fc] sm:$0xff]
    %v445 = vld [vmem:[#allocation2 + $0x304] sm:$0xff]
    %v446 = vld [vmem:[#allocation2 + $0x30c] sm:$0xf]
    %v447 = vld [vmem:[#allocation2 + $0x310] sm:$0xff]
    %v448 = vld [vmem:[#allocation2 + $0x318] sm:$0xff]
    %v449 = vld [vmem:[#allocation2 + $0x320] sm:$0xff]
    %v450 = vld [vmem:[#allocation2 + $0x328] sm:$0xf]
    %v451 = vld [vmem:[#allocation2 + $0x32c] sm:$0xff]
    %v452 = vld [vmem:[#allocation2 + $0x334] sm:$0xff]
    %v453 = vld [vmem:[#allocation2 + $0x33c] sm:$0xff]
    %v454 = vld [vmem:[#allocation2 + $0x344] sm:$0xf]
    %v455 = vld [vmem:[#allocation2 + $0x348] sm:$0xff]
    %v456 = vld [vmem:[#allocation2 + $0x350] sm:$0xff]
    %v457 = vld [vmem:[#allocation2 + $0x358] sm:$0xff]
    %v458 = vld [vmem:[#allocation2 + $0x360] sm:$0xf]
    %v459 = vld [vmem:[#allocation2 + $0x364] sm:$0xff]
    %v460 = vld [vmem:[#allocation2 + $0x36c] sm:$0xff]
    %v461 = vld [vmem:[#allocation2 + $0x374] sm:$0xff]
    %v462 = vld [vmem:[#allocation2 + $0x37c] sm:$0xf]
    %v463 = vld [vmem:[#allocation2 + $0x380] sm:$0xff]
    %v464 = vld [vmem:[#allocation2 + $0x388] sm:$0xff]
    %v465 = vld [vmem:[#allocation2 + $0x390] sm:$0xff]
    %v466 = vld [vmem:[#allocation2 + $0x398] sm:$0xf]
    %v467 = vld [vmem:[#allocation2 + $0x39c] sm:$0xff]
    %v468 = vld [vmem:[#allocation2 + $0x3a4] sm:$0xff]
    %v469 = vld [vmem:[#allocation2 + $0x3ac] sm:$0xff]
    %v470 = vld [vmem:[#allocation2 + $0x3b4] sm:$0xf]
    %v471 = vld [vmem:[#allocation2 + $0x3b8] sm:$0xff]
    %v472 = vld [vmem:[#allocation2 + $0x3c0] sm:$0xff]
    %v473 = vld [vmem:[#allocation2 + $0x3c8] sm:$0xff]
    %v474 = vld [vmem:[#allocation2 + $0x3d0] sm:$0xf]
    %v475 = vld [vmem:[#allocation2 + $0x3d4] sm:$0xff]
    %v476 = vld [vmem:[#allocation2 + $0x3dc] sm:$0xff]
    %v477 = vld [vmem:[#allocation2 + $0x3e4] sm:$0xff]
    %v478 = vld [vmem:[#allocation2 + $0x3ec] sm:$0xf]
    %v479 = vld [vmem:[#allocation2 + $0x3f0] sm:$0xff]
    %v480 = vld [vmem:[#allocation2 + $0x3f8] sm:$0xff]
    %v481 = vld [vmem:[#allocation2 + $0x400] sm:$0xff]
    %v482 = vld [vmem:[#allocation2 + $0x408] sm:$0xf]
    %v483 = vld [vmem:[#allocation2 + $0x40c] sm:$0xff]
    %v484 = vld [vmem:[#allocation2 + $0x414] sm:$0xff]
    %v485 = vld [vmem:[#allocation2 + $0x41c] sm:$0xff]
    %v486 = vld [vmem:[#allocation2 + $0x424] sm:$0xf]
    %v487 = vld [vmem:[#allocation2 + $0x428] sm:$0xff]
    %v488 = vld [vmem:[#allocation2 + $0x430] sm:$0xff]
    %v489 = vld [vmem:[#allocation2 + $0x438] sm:$0xff]
    %v490 = vld [vmem:[#allocation2 + $0x440] sm:$0xf]
    %v491 = vld [vmem:[#allocation2 + $0x444] sm:$0xff]
    %v492 = vld [vmem:[#allocation2 + $0x44c] sm:$0xff]
    %v493 = vld [vmem:[#allocation2 + $0x454] sm:$0xff]
    %v494 = vld [vmem:[#allocation2 + $0x45c] sm:$0xf]
    %v495 = vld [vmem:[#allocation2 + $0x460] sm:$0xff]
    %v496 = vld [vmem:[#allocation2 + $0x468] sm:$0xff]
    %v497 = vld [vmem:[#allocation2 + $0x470] sm:$0xff]
    %v498 = vld [vmem:[#allocation2 + $0x478] sm:$0xf]
    %v499 = vld [vmem:[#allocation2 + $0x47c] sm:$0xff]
    %v500 = vld [vmem:[#allocation2 + $0x484] sm:$0xff]
    %v501 = vld [vmem:[#allocation2 + $0x48c] sm:$0xff]
    %v502 = vld [vmem:[#allocation2 + $0x494] sm:$0xf]
    %v503 = vld [vmem:[#allocation2 + $0x498] sm:$0xff]
    %v504 = vld [vmem:[#allocation2 + $0x4a0] sm:$0xff]
    %v505 = vld [vmem:[#allocation2 + $0x4a8] sm:$0xff]
    %v506 = vld [vmem:[#allocation2 + $0x4b0] sm:$0xf]
    %v507 = vld [vmem:[#allocation2 + $0x4b4] sm:$0xff]
    %v508 = vld [vmem:[#allocation2 + $0x4bc] sm:$0xff]
    %v509 = vld [vmem:[#allocation2 + $0x4c4] sm:$0xff]
    %v510 = vld [vmem:[#allocation2 + $0x4cc] sm:$0xf]
    %v511 = vld [vmem:[#allocation2 + $0x4d0] sm:$0xff]
    %v512 = vld [vmem:[#allocation2 + $0x4d8] sm:$0xff]
    %v513 = vld [vmem:[#allocation2 + $0x4e0] sm:$0xff]
    %v514 = vld [vmem:[#allocation2 + $0x4e8] sm:$0xf]
    %v515 = vld [vmem:[#allocation2 + $0x4ec] sm:$0xff]
    %v516 = vld [vmem:[#allocation2 + $0x4f4] sm:$0xff]
    %v517 = vld [vmem:[#allocation2 + $0x4fc] sm:$0xff]
    %v518 = vld [vmem:[#allocation2 + $0x504] sm:$0xf]
    %v519 = vld [vmem:[#allocation2 + $0x508] sm:$0xff]
    %v520 = vld [vmem:[#allocation2 + $0x510] sm:$0xff]
    %v521 = vld [vmem:[#allocation2 + $0x518] sm:$0xff]
    %v522 = vld [vmem:[#allocation2 + $0x520] sm:$0xf]
    %v523 = vld [vmem:[#allocation2 + $0x524] sm:$0xff]
    %v524 = vld [vmem:[#allocation2 + $0x52c] sm:$0xff]
    %v525 = vld [vmem:[#allocation2 + $0x534] sm:$0xff]
    %v526 = vld [vmem:[#allocation2 + $0x53c] sm:$0xf]
    %v527 = vld [vmem:[#allocation2 + $0x540] sm:$0xff]
    %v528 = vld [vmem:[#allocation2 + $0x548] sm:$0xff]
    %v529 = vld [vmem:[#allocation2 + $0x550] sm:$0xff]
    %v530 = vld [vmem:[#allocation2 + $0x558] sm:$0xf]
    %v531 = vld [vmem:[#allocation2 + $0x55c] sm:$0xff]
    %v532 = vld [vmem:[#allocation2 + $0x564] sm:$0xff]
    %v533 = vld [vmem:[#allocation2 + $0x56c] sm:$0xff]
    %v534 = vld [vmem:[#allocation2 + $0x574] sm:$0xf]
    %v535 = vld [vmem:[%s4] sm:$0xff]
    %v537 = vperm.slane %v535, 0
    %v538 = vperm.slane %v535, 1
    %v539 = vperm.slane %v535, 2
    %v540 = vperm.slane %v535, 3
    %v541 = vperm.slane %v535, 4
    %v542 = vperm.slane %v535, 5
    %v543 = vperm.slane %v535, 6
    %v751 = vunpack.c.l.b16 %v335
    %v752 = vunpack.c.h.b16 %v335
    %v753 = vunpack.c.l.b16 %v336
    %v754 = vunpack.c.h.b16 %v336
    %v755 = vunpack.c.l.b16 %v337
    %v756 = vunpack.c.h.b16 %v337
    %v757 = vunpack.c.l.b16 %v338
    %v758 = vunpack.c.l.b16 %v339
    %v759 = vunpack.c.h.b16 %v339
    %v760 = vunpack.c.l.b16 %v340
    %v761 = vunpack.c.h.b16 %v340
    %v762 = vunpack.c.l.b16 %v341
    %v763 = vunpack.c.h.b16 %v341
    %v764 = vunpack.c.l.b16 %v342
    %v765 = vunpack.c.l.b16 %v343
    %v766 = vunpack.c.h.b16 %v343
    %v767 = vunpack.c.l.b16 %v344
    %v768 = vunpack.c.h.b16 %v344
    %v769 = vunpack.c.l.b16 %v345
    %v770 = vunpack.c.h.b16 %v345
    %v771 = vunpack.c.l.b16 %v346
    %v772 = vunpack.c.l.b16 %v347
    %v773 = vunpack.c.h.b16 %v347
    %v774 = vunpack.c.l.b16 %v348
    %v775 = vunpack.c.h.b16 %v348
    %v776 = vunpack.c.l.b16 %v349
    %v777 = vunpack.c.h.b16 %v349
    %v778 = vunpack.c.l.b16 %v350
    %v779 = vunpack.c.l.b16 %v351
    %v780 = vunpack.c.h.b16 %v351
    %v781 = vunpack.c.l.b16 %v352
    %v782 = vunpack.c.h.b16 %v352
    %v783 = vunpack.c.l.b16 %v353
    %v784 = vunpack.c.h.b16 %v353
    %v785 = vunpack.c.l.b16 %v354
    %v786 = vunpack.c.l.b16 %v355
    %v787 = vunpack.c.h.b16 %v355
    %v788 = vunpack.c.l.b16 %v356
    %v789 = vunpack.c.h.b16 %v356
    %v790 = vunpack.c.l.b16 %v357
    %v791 = vunpack.c.h.b16 %v357
    %v792 = vunpack.c.l.b16 %v358
    %v793 = vunpack.c.l.b16 %v359
    %v794 = vunpack.c.h.b16 %v359
    %v795 = vunpack.c.l.b16 %v360
    %v796 = vunpack.c.h.b16 %v360
    %v797 = vunpack.c.l.b16 %v361
    %v798 = vunpack.c.h.b16 %v361
    %v799 = vunpack.c.l.b16 %v362
    %v800 = vunpack.c.l.b16 %v363
    %v801 = vunpack.c.h.b16 %v363
    %v802 = vunpack.c.l.b16 %v364
    %v803 = vunpack.c.h.b16 %v364
    %v804 = vunpack.c.l.b16 %v365
    %v805 = vunpack.c.h.b16 %v365
    %v806 = vunpack.c.l.b16 %v366
    %v807 = vunpack.c.l.b16 %v367
    %v808 = vunpack.c.h.b16 %v367
    %v809 = vunpack.c.l.b16 %v368
    %v810 = vunpack.c.h.b16 %v368
    %v811 = vunpack.c.l.b16 %v369
    %v812 = vunpack.c.h.b16 %v369
    %v813 = vunpack.c.l.b16 %v370
    %v814 = vunpack.c.l.b16 %v371
    %v815 = vunpack.c.h.b16 %v371
    %v816 = vunpack.c.l.b16 %v372
    %v817 = vunpack.c.h.b16 %v372
    %v818 = vunpack.c.l.b16 %v373
    %v819 = vunpack.c.h.b16 %v373
    %v820 = vunpack.c.l.b16 %v374
    %v821 = vunpack.c.l.b16 %v375
    %v822 = vunpack.c.h.b16 %v375
    %v823 = vunpack.c.l.b16 %v376
    %v824 = vunpack.c.h.b16 %v376
    %v825 = vunpack.c.l.b16 %v377
    %v826 = vunpack.c.h.b16 %v377
    %v827 = vunpack.c.l.b16 %v378
    %v828 = vunpack.c.l.b16 %v379
    %v829 = vunpack.c.h.b16 %v379
    %v830 = vunpack.c.l.b16 %v380
    %v831 = vunpack.c.h.b16 %v380
    %v832 = vunpack.c.l.b16 %v381
    %v833 = vunpack.c.h.b16 %v381
    %v834 = vunpack.c.l.b16 %v382
    %v835 = vunpack.c.l.b16 %v383
    %v836 = vunpack.c.h.b16 %v383
    %v837 = vunpack.c.l.b16 %v384
    %v838 = vunpack.c.h.b16 %v384
    %v839 = vunpack.c.l.b16 %v385
    %v840 = vunpack.c.h.b16 %v385
    %v841 = vunpack.c.l.b16 %v386
    %v842 = vunpack.c.l.b16 %v387
    %v843 = vunpack.c.h.b16 %v387
    %v844 = vunpack.c.l.b16 %v388
    %v845 = vunpack.c.h.b16 %v388
    %v846 = vunpack.c.l.b16 %v389
    %v847 = vunpack.c.h.b16 %v389
    %v848 = vunpack.c.l.b16 %v390
    %v849 = vunpack.c.l.b16 %v391
    %v850 = vunpack.c.h.b16 %v391
    %v851 = vunpack.c.l.b16 %v392
    %v852 = vunpack.c.h.b16 %v392
    %v853 = vunpack.c.l.b16 %v393
    %v854 = vunpack.c.h.b16 %v393
    %v855 = vunpack.c.l.b16 %v394
    %v856 = vunpack.c.l.b16 %v395
    %v857 = vunpack.c.h.b16 %v395
    %v858 = vunpack.c.l.b16 %v396
    %v859 = vunpack.c.h.b16 %v396
    %v860 = vunpack.c.l.b16 %v397
    %v861 = vunpack.c.h.b16 %v397
    %v862 = vunpack.c.l.b16 %v398
    %v863 = vunpack.c.l.b16 %v399
    %v864 = vunpack.c.h.b16 %v399
    %v865 = vunpack.c.l.b16 %v400
    %v866 = vunpack.c.h.b16 %v400
    %v867 = vunpack.c.l.b16 %v401
    %v868 = vunpack.c.h.b16 %v401
    %v869 = vunpack.c.l.b16 %v402
    %v870 = vunpack.c.l.b16 %v403
    %v871 = vunpack.c.h.b16 %v403
    %v872 = vunpack.c.l.b16 %v404
    %v873 = vunpack.c.h.b16 %v404
    %v874 = vunpack.c.l.b16 %v405
    %v875 = vunpack.c.h.b16 %v405
    %v876 = vunpack.c.l.b16 %v406
    %v877 = vunpack.c.l.b16 %v407
    %v878 = vunpack.c.h.b16 %v407
    %v879 = vunpack.c.l.b16 %v408
    %v880 = vunpack.c.h.b16 %v408
    %v881 = vunpack.c.l.b16 %v409
    %v882 = vunpack.c.h.b16 %v409
    %v883 = vunpack.c.l.b16 %v410
    %v884 = vunpack.c.l.b16 %v411
    %v885 = vunpack.c.h.b16 %v411
    %v886 = vunpack.c.l.b16 %v412
    %v887 = vunpack.c.h.b16 %v412
    %v888 = vunpack.c.l.b16 %v413
    %v889 = vunpack.c.h.b16 %v413
    %v890 = vunpack.c.l.b16 %v414
    %v891 = vunpack.c.l.b16 %v415
    %v892 = vunpack.c.h.b16 %v415
    %v893 = vunpack.c.l.b16 %v416
    %v894 = vunpack.c.h.b16 %v416
    %v895 = vunpack.c.l.b16 %v417
    %v896 = vunpack.c.h.b16 %v417
    %v897 = vunpack.c.l.b16 %v418
    %v898 = vunpack.c.l.b16 %v419
    %v899 = vunpack.c.h.b16 %v419
    %v900 = vunpack.c.l.b16 %v420
    %v901 = vunpack.c.h.b16 %v420
    %v902 = vunpack.c.l.b16 %v421
    %v903 = vunpack.c.h.b16 %v421
    %v904 = vunpack.c.l.b16 %v422
    %v905 = vunpack.c.l.b16 %v423
    %v906 = vunpack.c.h.b16 %v423
    %v907 = vunpack.c.l.b16 %v424
    %v908 = vunpack.c.h.b16 %v424
    %v909 = vunpack.c.l.b16 %v425
    %v910 = vunpack.c.h.b16 %v425
    %v911 = vunpack.c.l.b16 %v426
    %v912 = vunpack.c.l.b16 %v427
    %v913 = vunpack.c.h.b16 %v427
    %v914 = vunpack.c.l.b16 %v428
    %v915 = vunpack.c.h.b16 %v428
    %v916 = vunpack.c.l.b16 %v429
    %v917 = vunpack.c.h.b16 %v429
    %v918 = vunpack.c.l.b16 %v430
    %v919 = vunpack.c.l.b16 %v431
    %v920 = vunpack.c.h.b16 %v431
    %v921 = vunpack.c.l.b16 %v432
    %v922 = vunpack.c.h.b16 %v432
    %v923 = vunpack.c.l.b16 %v433
    %v924 = vunpack.c.h.b16 %v433
    %v925 = vunpack.c.l.b16 %v434
    %v926 = vunpack.c.l.b16 %v435
    %v927 = vunpack.c.h.b16 %v435
    %v928 = vunpack.c.l.b16 %v436
    %v929 = vunpack.c.h.b16 %v436
    %v930 = vunpack.c.l.b16 %v437
    %v931 = vunpack.c.h.b16 %v437
    %v932 = vunpack.c.l.b16 %v438
    %v933 = vunpack.c.l.b16 %v439
    %v934 = vunpack.c.h.b16 %v439
    %v935 = vunpack.c.l.b16 %v440
    %v936 = vunpack.c.h.b16 %v440
    %v937 = vunpack.c.l.b16 %v441
    %v938 = vunpack.c.h.b16 %v441
    %v939 = vunpack.c.l.b16 %v442
    %v940 = vunpack.c.l.b16 %v443
    %v941 = vunpack.c.h.b16 %v443
    %v942 = vunpack.c.l.b16 %v444
    %v943 = vunpack.c.h.b16 %v444
    %v944 = vunpack.c.l.b16 %v445
    %v945 = vunpack.c.h.b16 %v445
    %v946 = vunpack.c.l.b16 %v446
    %v947 = vunpack.c.l.b16 %v447
    %v948 = vunpack.c.h.b16 %v447
    %v949 = vunpack.c.l.b16 %v448
    %v950 = vunpack.c.h.b16 %v448
    %v951 = vunpack.c.l.b16 %v449
    %v952 = vunpack.c.h.b16 %v449
    %v953 = vunpack.c.l.b16 %v450
    %v954 = vunpack.c.l.b16 %v451
    %v955 = vunpack.c.h.b16 %v451
    %v956 = vunpack.c.l.b16 %v452
    %v957 = vunpack.c.h.b16 %v452
    %v958 = vunpack.c.l.b16 %v453
    %v959 = vunpack.c.h.b16 %v453
    %v960 = vunpack.c.l.b16 %v454
    %v961 = vunpack.c.l.b16 %v455
    %v962 = vunpack.c.h.b16 %v455
    %v963 = vunpack.c.l.b16 %v456
    %v964 = vunpack.c.h.b16 %v456
    %v965 = vunpack.c.l.b16 %v457
    %v966 = vunpack.c.h.b16 %v457
    %v967 = vunpack.c.l.b16 %v458
    %v968 = vunpack.c.l.b16 %v459
    %v969 = vunpack.c.h.b16 %v459
    %v970 = vunpack.c.l.b16 %v460
    %v971 = vunpack.c.h.b16 %v460
    %v972 = vunpack.c.l.b16 %v461
    %v973 = vunpack.c.h.b16 %v461
    %v974 = vunpack.c.l.b16 %v462
    %v975 = vunpack.c.l.b16 %v463
    %v976 = vunpack.c.h.b16 %v463
    %v977 = vunpack.c.l.b16 %v464
    %v978 = vunpack.c.h.b16 %v464
    %v979 = vunpack.c.l.b16 %v465
    %v980 = vunpack.c.h.b16 %v465
    %v981 = vunpack.c.l.b16 %v466
    %v982 = vunpack.c.l.b16 %v467
    %v983 = vunpack.c.h.b16 %v467
    %v984 = vunpack.c.l.b16 %v468
    %v985 = vunpack.c.h.b16 %v468
    %v986 = vunpack.c.l.b16 %v469
    %v987 = vunpack.c.h.b16 %v469
    %v988 = vunpack.c.l.b16 %v470
    %v989 = vunpack.c.l.b16 %v471
    %v990 = vunpack.c.h.b16 %v471
    %v991 = vunpack.c.l.b16 %v472
    %v992 = vunpack.c.h.b16 %v472
    %v993 = vunpack.c.l.b16 %v473
    %v994 = vunpack.c.h.b16 %v473
    %v995 = vunpack.c.l.b16 %v474
    %v996 = vunpack.c.l.b16 %v475
    %v997 = vunpack.c.h.b16 %v475
    %v998 = vunpack.c.l.b16 %v476
    %v999 = vunpack.c.h.b16 %v476
    %v1000 = vunpack.c.l.b16 %v477
    %v1001 = vunpack.c.h.b16 %v477
    %v1002 = vunpack.c.l.b16 %v478
    %v1003 = vunpack.c.l.b16 %v479
    %v1004 = vunpack.c.h.b16 %v479
    %v1005 = vunpack.c.l.b16 %v480
    %v1006 = vunpack.c.h.b16 %v480
    %v1007 = vunpack.c.l.b16 %v481
    %v1008 = vunpack.c.h.b16 %v481
    %v1009 = vunpack.c.l.b16 %v482
    %v1010 = vunpack.c.l.b16 %v483
    %v1011 = vunpack.c.h.b16 %v483
    %v1012 = vunpack.c.l.b16 %v484
    %v1013 = vunpack.c.h.b16 %v484
    %v1014 = vunpack.c.l.b16 %v485
    %v1015 = vunpack.c.h.b16 %v485
    %v1016 = vunpack.c.l.b16 %v486
    %v1017 = vunpack.c.l.b16 %v487
    %v1018 = vunpack.c.h.b16 %v487
    %v1019 = vunpack.c.l.b16 %v488
    %v1020 = vunpack.c.h.b16 %v488
    %v1021 = vunpack.c.l.b16 %v489
    %v1022 = vunpack.c.h.b16 %v489
    %v1023 = vunpack.c.l.b16 %v490
    %v1024 = vunpack.c.l.b16 %v491
    %v1025 = vunpack.c.h.b16 %v491
    %v1026 = vunpack.c.l.b16 %v492
    %v1027 = vunpack.c.h.b16 %v492
    %v1028 = vunpack.c.l.b16 %v493
    %v1029 = vunpack.c.h.b16 %v493
    %v1030 = vunpack.c.l.b16 %v494
    %v1031 = vunpack.c.l.b16 %v495
    %v1032 = vunpack.c.h.b16 %v495
    %v1033 = vunpack.c.l.b16 %v496
    %v1034 = vunpack.c.h.b16 %v496
    %v1035 = vunpack.c.l.b16 %v497
    %v1036 = vunpack.c.h.b16 %v497
    %v1037 = vunpack.c.l.b16 %v498
    %v1038 = vunpack.c.l.b16 %v499
    %v1039 = vunpack.c.h.b16 %v499
    %v1040 = vunpack.c.l.b16 %v500
    %v1041 = vunpack.c.h.b16 %v500
    %v1042 = vunpack.c.l.b16 %v501
    %v1043 = vunpack.c.h.b16 %v501
    %v1044 = vunpack.c.l.b16 %v502
    %v1045 = vunpack.c.l.b16 %v503
    %v1046 = vunpack.c.h.b16 %v503
    %v1047 = vunpack.c.l.b16 %v504
    %v1048 = vunpack.c.h.b16 %v504
    %v1049 = vunpack.c.l.b16 %v505
    %v1050 = vunpack.c.h.b16 %v505
    %v1051 = vunpack.c.l.b16 %v506
    %v1052 = vunpack.c.l.b16 %v507
    %v1053 = vunpack.c.h.b16 %v507
    %v1054 = vunpack.c.l.b16 %v508
    %v1055 = vunpack.c.h.b16 %v508
    %v1056 = vunpack.c.l.b16 %v509
    %v1057 = vunpack.c.h.b16 %v509
    %v1058 = vunpack.c.l.b16 %v510
    %v1059 = vunpack.c.l.b16 %v511
    %v1060 = vunpack.c.h.b16 %v511
    %v1061 = vunpack.c.l.b16 %v512
    %v1062 = vunpack.c.h.b16 %v512
    %v1063 = vunpack.c.l.b16 %v513
    %v1064 = vunpack.c.h.b16 %v513
    %v1065 = vunpack.c.l.b16 %v514
    %v1066 = vunpack.c.l.b16 %v515
    %v1067 = vunpack.c.h.b16 %v515
    %v1068 = vunpack.c.l.b16 %v516
    %v1069 = vunpack.c.h.b16 %v516
    %v1070 = vunpack.c.l.b16 %v517
    %v1071 = vunpack.c.h.b16 %v517
    %v1072 = vunpack.c.l.b16 %v518
    %v1073 = vunpack.c.l.b16 %v519
    %v1074 = vunpack.c.h.b16 %v519
    %v1075 = vunpack.c.l.b16 %v520
    %v1076 = vunpack.c.h.b16 %v520
    %v1077 = vunpack.c.l.b16 %v521
    %v1078 = vunpack.c.h.b16 %v521
    %v1079 = vunpack.c.l.b16 %v522
    %v1080 = vunpack.c.l.b16 %v523
    %v1081 = vunpack.c.h.b16 %v523
    %v1082 = vunpack.c.l.b16 %v524
    %v1083 = vunpack.c.h.b16 %v524
    %v1084 = vunpack.c.l.b16 %v525
    %v1085 = vunpack.c.h.b16 %v525
    %v1086 = vunpack.c.l.b16 %v526
    %v1087 = vunpack.c.l.b16 %v527
    %v1088 = vunpack.c.h.b16 %v527
    %v1089 = vunpack.c.l.b16 %v528
    %v1090 = vunpack.c.h.b16 %v528
    %v1091 = vunpack.c.l.b16 %v529
    %v1092 = vunpack.c.h.b16 %v529
    %v1093 = vunpack.c.l.b16 %v530
    %v1094 = vunpack.c.l.b16 %v531
    %v1095 = vunpack.c.h.b16 %v531
    %v1096 = vunpack.c.l.b16 %v532
    %v1097 = vunpack.c.h.b16 %v532
    %v1098 = vunpack.c.l.b16 %v533
    %v1099 = vunpack.c.h.b16 %v533
    %v1100 = vunpack.c.l.b16 %v534
    %v1101 = vpack.c.b16 %v758, %v751
    %v1102 = vpack.c.b16 %v759, %v752
    %v1103 = vpack.c.b16 %v760, %v753
    %v1104 = vpack.c.b16 %v761, %v754
    %v1105 = vpack.c.b16 %v762, %v755
    %v1106 = vpack.c.b16 %v763, %v756
    %v1107 = vpack.c.b16 %v764, %v757
    %v1108 = vpack.c.b16 %v772, %v765
    %v1109 = vpack.c.b16 %v773, %v766
    %v1110 = vpack.c.b16 %v774, %v767
    %v1111 = vpack.c.b16 %v775, %v768
    %v1112 = vpack.c.b16 %v776, %v769
    %v1113 = vpack.c.b16 %v777, %v770
    %v1114 = vpack.c.b16 %v778, %v771
    %v1115 = vpack.c.b16 %v786, %v779
    %v1116 = vpack.c.b16 %v787, %v780
    %v1117 = vpack.c.b16 %v788, %v781
    %v1118 = vpack.c.b16 %v789, %v782
    %v1119 = vpack.c.b16 %v790, %v783
    %v1120 = vpack.c.b16 %v791, %v784
    %v1121 = vpack.c.b16 %v792, %v785
    %v1122 = vpack.c.b16 %v800, %v793
    %v1123 = vpack.c.b16 %v801, %v794
    %v1124 = vpack.c.b16 %v802, %v795
    %v1125 = vpack.c.b16 %v803, %v796
    %v1126 = vpack.c.b16 %v804, %v797
    %v1127 = vpack.c.b16 %v805, %v798
    %v1128 = vpack.c.b16 %v806, %v799
    %v1129 = vpack.c.b16 %v814, %v807
    %v1130 = vpack.c.b16 %v815, %v808
    %v1131 = vpack.c.b16 %v816, %v809
    %v1132 = vpack.c.b16 %v817, %v810
    %v1133 = vpack.c.b16 %v818, %v811
    %v1134 = vpack.c.b16 %v819, %v812
    %v1135 = vpack.c.b16 %v820, %v813
    %v1136 = vpack.c.b16 %v828, %v821
    %v1137 = vpack.c.b16 %v829, %v822
    %v1138 = vpack.c.b16 %v830, %v823
    %v1139 = vpack.c.b16 %v831, %v824
    %v1140 = vpack.c.b16 %v832, %v825
    %v1141 = vpack.c.b16 %v833, %v826
    %v1142 = vpack.c.b16 %v834, %v827
    %v1143 = vpack.c.b16 %v842, %v835
    %v1144 = vpack.c.b16 %v843, %v836
    %v1145 = vpack.c.b16 %v844, %v837
    %v1146 = vpack.c.b16 %v845, %v838
    %v1147 = vpack.c.b16 %v846, %v839
    %v1148 = vpack.c.b16 %v847, %v840
    %v1149 = vpack.c.b16 %v848, %v841
    %v1150 = vpack.c.b16 %v856, %v849
    %v1151 = vpack.c.b16 %v857, %v850
    %v1152 = vpack.c.b16 %v858, %v851
    %v1153 = vpack.c.b16 %v859, %v852
    %v1154 = vpack.c.b16 %v860, %v853
    %v1155 = vpack.c.b16 %v861, %v854
    %v1156 = vpack.c.b16 %v862, %v855
    %v1157 = vpack.c.b16 %v870, %v863
    %v1158 = vpack.c.b16 %v871, %v864
    %v1159 = vpack.c.b16 %v872, %v865
    %v1160 = vpack.c.b16 %v873, %v866
    %v1161 = vpack.c.b16 %v874, %v867
    %v1162 = vpack.c.b16 %v875, %v868
    %v1163 = vpack.c.b16 %v876, %v869
    %v1164 = vpack.c.b16 %v884, %v877
    %v1165 = vpack.c.b16 %v885, %v878
    %v1166 = vpack.c.b16 %v886, %v879
    %v1167 = vpack.c.b16 %v887, %v880
    %v1168 = vpack.c.b16 %v888, %v881
    %v1169 = vpack.c.b16 %v889, %v882
    %v1170 = vpack.c.b16 %v890, %v883
    %v1171 = vpack.c.b16 %v898, %v891
    %v1172 = vpack.c.b16 %v899, %v892
    %v1173 = vpack.c.b16 %v900, %v893
    %v1174 = vpack.c.b16 %v901, %v894
    %v1175 = vpack.c.b16 %v902, %v895
    %v1176 = vpack.c.b16 %v903, %v896
    %v1177 = vpack.c.b16 %v904, %v897
    %v1178 = vpack.c.b16 %v912, %v905
    %v1179 = vpack.c.b16 %v913, %v906
    %v1180 = vpack.c.b16 %v914, %v907
    %v1181 = vpack.c.b16 %v915, %v908
    %v1182 = vpack.c.b16 %v916, %v909
    %v1183 = vpack.c.b16 %v917, %v910
    %v1184 = vpack.c.b16 %v918, %v911
    %v1185 = vpack.c.b16 %v926, %v919
    %v1186 = vpack.c.b16 %v927, %v920
    %v1187 = vpack.c.b16 %v928, %v921
    %v1188 = vpack.c.b16 %v929, %v922
    %v1189 = vpack.c.b16 %v930, %v923
    %v1190 = vpack.c.b16 %v931, %v924
    %v1191 = vpack.c.b16 %v932, %v925
    %v1192 = vpack.c.b16 %v940, %v933
    %v1193 = vpack.c.b16 %v941, %v934
    %v1194 = vpack.c.b16 %v942, %v935
    %v1195 = vpack.c.b16 %v943, %v936
    %v1196 = vpack.c.b16 %v944, %v937
    %v1197 = vpack.c.b16 %v945, %v938
    %v1198 = vpack.c.b16 %v946, %v939
    %v1199 = vpack.c.b16 %v954, %v947
    %v1200 = vpack.c.b16 %v955, %v948
    %v1201 = vpack.c.b16 %v956, %v949
    %v1202 = vpack.c.b16 %v957, %v950
    %v1203 = vpack.c.b16 %v958, %v951
    %v1204 = vpack.c.b16 %v959, %v952
    %v1205 = vpack.c.b16 %v960, %v953
    %v1206 = vpack.c.b16 %v968, %v961
    %v1207 = vpack.c.b16 %v969, %v962
    %v1208 = vpack.c.b16 %v970, %v963
    %v1209 = vpack.c.b16 %v971, %v964
    %v1210 = vpack.c.b16 %v972, %v965
    %v1211 = vpack.c.b16 %v973, %v966
    %v1212 = vpack.c.b16 %v974, %v967
    %v1213 = vpack.c.b16 %v982, %v975
    %v1214 = vpack.c.b16 %v983, %v976
    %v1215 = vpack.c.b16 %v984, %v977
    %v1216 = vpack.c.b16 %v985, %v978
    %v1217 = vpack.c.b16 %v986, %v979
    %v1218 = vpack.c.b16 %v987, %v980
    %v1219 = vpack.c.b16 %v988, %v981
    %v1220 = vpack.c.b16 %v996, %v989
    %v1221 = vpack.c.b16 %v997, %v990
    %v1222 = vpack.c.b16 %v998, %v991
    %v1223 = vpack.c.b16 %v999, %v992
    %v1224 = vpack.c.b16 %v1000, %v993
    %v1225 = vpack.c.b16 %v1001, %v994
    %v1226 = vpack.c.b16 %v1002, %v995
    %v1227 = vpack.c.b16 %v1010, %v1003
    %v1228 = vpack.c.b16 %v1011, %v1004
    %v1229 = vpack.c.b16 %v1012, %v1005
    %v1230 = vpack.c.b16 %v1013, %v1006
    %v1231 = vpack.c.b16 %v1014, %v1007
    %v1232 = vpack.c.b16 %v1015, %v1008
    %v1233 = vpack.c.b16 %v1016, %v1009
    %v1234 = vpack.c.b16 %v1024, %v1017
    %v1235 = vpack.c.b16 %v1025, %v1018
    %v1236 = vpack.c.b16 %v1026, %v1019
    %v1237 = vpack.c.b16 %v1027, %v1020
    %v1238 = vpack.c.b16 %v1028, %v1021
    %v1239 = vpack.c.b16 %v1029, %v1022
    %v1240 = vpack.c.b16 %v1030, %v1023
    %v1241 = vpack.c.b16 %v1038, %v1031
    %v1242 = vpack.c.b16 %v1039, %v1032
    %v1243 = vpack.c.b16 %v1040, %v1033
    %v1244 = vpack.c.b16 %v1041, %v1034
    %v1245 = vpack.c.b16 %v1042, %v1035
    %v1246 = vpack.c.b16 %v1043, %v1036
    %v1247 = vpack.c.b16 %v1044, %v1037
    %v1248 = vpack.c.b16 %v1052, %v1045
    %v1249 = vpack.c.b16 %v1053, %v1046
    %v1250 = vpack.c.b16 %v1054, %v1047
    %v1251 = vpack.c.b16 %v1055, %v1048
    %v1252 = vpack.c.b16 %v1056, %v1049
    %v1253 = vpack.c.b16 %v1057, %v1050
    %v1254 = vpack.c.b16 %v1058, %v1051
    %v1255 = vpack.c.b16 %v1066, %v1059
    %v1256 = vpack.c.b16 %v1067, %v1060
    %v1257 = vpack.c.b16 %v1068, %v1061
    %v1258 = vpack.c.b16 %v1069, %v1062
    %v1259 = vpack.c.b16 %v1070, %v1063
    %v1260 = vpack.c.b16 %v1071, %v1064
    %v1261 = vpack.c.b16 %v1072, %v1065
    %v1262 = vpack.c.b16 %v1080, %v1073
    %v1263 = vpack.c.b16 %v1081, %v1074
    %v1264 = vpack.c.b16 %v1082, %v1075
    %v1265 = vpack.c.b16 %v1083, %v1076
    %v1266 = vpack.c.b16 %v1084, %v1077
    %v1267 = vpack.c.b16 %v1085, %v1078
    %v1268 = vpack.c.b16 %v1086, %v1079
    %v1269 = vpack.c.b16 %v1094, %v1087
    %v1270 = vpack.c.b16 %v1095, %v1088
    %v1271 = vpack.c.b16 %v1096, %v1089
    %v1272 = vpack.c.b16 %v1097, %v1090
    %v1273 = vpack.c.b16 %v1098, %v1091
    %v1274 = vpack.c.b16 %v1099, %v1092
    %v1275 = vpack.c.b16 %v1100, %v1093
    %vm1451 = vcmask 130048
    %v1453 = vsel %vm1451, %v334, 0
    %1455 = vmatpush.bf16.msra.mxu0 %v1150
    %1456 = vmatpush.bf16.msra.mxu0 %v1143
    %1457 = vmatpush.bf16.msra.mxu0 %v1136
    %1458 = vmatpush.bf16.msra.mxu0 %v1129
    %1459 = vmatpush.bf16.msra.mxu0 %v1122
    %1460 = vmatpush.bf16.msra.mxu0 %v1115
    %1461 = vmatpush.bf16.msra.mxu0 %v1108
    %1462 = vmatpush.bf16.msra.mxu0 %v1101
    %1463 = vmatmul.bf16.gmra.mxu0 %v331
    %v1464 = vpop.f32.mrf.mxu0
    %v1465 = vadd.f32 %v537, %v1464
    %v1466 = vpop.f32.mrf.mxu0
    %v1467 = vadd.f32 %v537, %v1466
    %1468 = vdwg.mxu0
    %1469 = vmatpush.bf16.msra.mxu0 %v1206
    %1470 = vmatpush.bf16.msra.mxu0 %v1199
    %1471 = vmatpush.bf16.msra.mxu0 %v1192
    %1472 = vmatpush.bf16.msra.mxu0 %v1185
    %1473 = vmatpush.bf16.msra.mxu0 %v1178
    %1474 = vmatpush.bf16.msra.mxu0 %v1171
    %1475 = vmatpush.bf16.msra.mxu0 %v1164
    %1476 = vmatpush.bf16.msra.mxu0 %v1157
    %1477 = vmatmul.bf16.gmra.mxu0 %v332
    %v1478 = vpop.f32.mrf.mxu0
    %v1479 = vadd.f32 %v1465, %v1478
    %v1480 = vpop.f32.mrf.mxu0
    %v1481 = vadd.f32 %v1467, %v1480
    %1482 = vdwg.mxu0
    %1483 = vmatpush.bf16.msra.mxu0 %v1262
    %1484 = vmatpush.bf16.msra.mxu0 %v1255
    %1485 = vmatpush.bf16.msra.mxu0 %v1248
    %1486 = vmatpush.bf16.msra.mxu0 %v1241
    %1487 = vmatpush.bf16.msra.mxu0 %v1234
    %1488 = vmatpush.bf16.msra.mxu0 %v1227
    %1489 = vmatpush.bf16.msra.mxu0 %v1220
    %1490 = vmatpush.bf16.msra.mxu0 %v1213
    %1491 = vmatmul.bf16.gmra.mxu0 %v333
    %v1492 = vpop.f32.mrf.mxu0
    %v1493 = vadd.f32 %v1479, %v1492
    %v1494 = vpop.f32.mrf.mxu0
    %v1495 = vadd.f32 %v1481, %v1494
    %1496 = vdwg.mxu0
    %1497 = vmatpush.bf16.msra.mxu0 0
    %1498 = vmatpush.bf16.msra.mxu0 0
    %1499 = vmatpush.bf16.msra.mxu0 0
    %1500 = vmatpush.bf16.msra.mxu0 0
    %1501 = vmatpush.bf16.msra.mxu0 0
    %1502 = vmatpush.bf16.msra.mxu0 0
    %1503 = vmatpush.bf16.msra.mxu0 0
    %1504 = vmatpush.bf16.msra.mxu0 %v1269
    %1505 = vmatmul.bf16.gmra.mxu0 %v1453
    %v1506 = vpop.f32.mrf.mxu0
    %v1507 = vadd.f32 %v1493, %v1506
    %v1508 = vpop.f32.mrf.mxu0
    %v1509 = vadd.f32 %v1495, %v1508
    %1510 = vdwg.mxu0
    %1511 = vmatpush.bf16.msra.mxu0 %v1151
    %1512 = vmatpush.bf16.msra.mxu0 %v1144
    %1513 = vmatpush.bf16.msra.mxu0 %v1137
    %1514 = vmatpush.bf16.msra.mxu0 %v1130
    %1515 = vmatpush.bf16.msra.mxu0 %v1123
    %1516 = vmatpush.bf16.msra.mxu0 %v1116
    %1517 = vmatpush.bf16.msra.mxu0 %v1109
    %1518 = vmatpush.bf16.msra.mxu0 %v1102
    %1519 = vmatmul.bf16.gmra.mxu0 %v331
    %v1520 = vpop.f32.mrf.mxu0
    %v1521 = vadd.f32 %v538, %v1520
    %v1522 = vpop.f32.mrf.mxu0
    %v1523 = vadd.f32 %v538, %v1522
    %1524 = vdwg.mxu0
    %1525 = vmatpush.bf16.msra.mxu0 %v1207
    %1526 = vmatpush.bf16.msra.mxu0 %v1200
    %1527 = vmatpush.bf16.msra.mxu0 %v1193
    %1528 = vmatpush.bf16.msra.mxu0 %v1186
    %1529 = vmatpush.bf16.msra.mxu0 %v1179
    %1530 = vmatpush.bf16.msra.mxu0 %v1172
    %1531 = vmatpush.bf16.msra.mxu0 %v1165
    %1532 = vmatpush.bf16.msra.mxu0 %v1158
    %1533 = vmatmul.bf16.gmra.mxu0 %v332
    %v1534 = vpop.f32.mrf.mxu0
    %v1535 = vadd.f32 %v1521, %v1534
    %v1536 = vpop.f32.mrf.mxu0
    %v1537 = vadd.f32 %v1523, %v1536
    %1538 = vdwg.mxu0
    %1539 = vmatpush.bf16.msra.mxu0 %v1263
    %1540 = vmatpush.bf16.msra.mxu0 %v1256
    %1541 = vmatpush.bf16.msra.mxu0 %v1249
    %1542 = vmatpush.bf16.msra.mxu0 %v1242
    %1543 = vmatpush.bf16.msra.mxu0 %v1235
    %1544 = vmatpush.bf16.msra.mxu0 %v1228
    %1545 = vmatpush.bf16.msra.mxu0 %v1221
    %1546 = vmatpush.bf16.msra.mxu0 %v1214
    %1547 = vmatmul.bf16.gmra.mxu0 %v333
    %v1548 = vpop.f32.mrf.mxu0
    %v1549 = vadd.f32 %v1535, %v1548
    %v1550 = vpop.f32.mrf.mxu0
    %v1551 = vadd.f32 %v1537, %v1550
    %1552 = vdwg.mxu0
    %1553 = vmatpush.bf16.msra.mxu0 0
    %1554 = vmatpush.bf16.msra.mxu0 0
    %1555 = vmatpush.bf16.msra.mxu0 0
    %1556 = vmatpush.bf16.msra.mxu0 0
    %1557 = vmatpush.bf16.msra.mxu0 0
    %1558 = vmatpush.bf16.msra.mxu0 0
    %1559 = vmatpush.bf16.msra.mxu0 0
    %1560 = vmatpush.bf16.msra.mxu0 %v1270
    %1561 = vmatmul.bf16.gmra.mxu0 %v1453
    %v1562 = vpop.f32.mrf.mxu0
    %v1563 = vadd.f32 %v1549, %v1562
    %v1564 = vpop.f32.mrf.mxu0
    %v1565 = vadd.f32 %v1551, %v1564
    %1566 = vdwg.mxu0
    %1567 = vmatpush.bf16.msra.mxu0 %v1152
    %1568 = vmatpush.bf16.msra.mxu0 %v1145
    %1569 = vmatpush.bf16.msra.mxu0 %v1138
    %1570 = vmatpush.bf16.msra.mxu0 %v1131
    %1571 = vmatpush.bf16.msra.mxu0 %v1124
    %1572 = vmatpush.bf16.msra.mxu0 %v1117
    %1573 = vmatpush.bf16.msra.mxu0 %v1110
    %1574 = vmatpush.bf16.msra.mxu0 %v1103
    %1575 = vmatmul.bf16.gmra.mxu0 %v331
    %v1576 = vpop.f32.mrf.mxu0
    %v1577 = vadd.f32 %v539, %v1576
    %v1578 = vpop.f32.mrf.mxu0
    %v1579 = vadd.f32 %v539, %v1578
    %1580 = vdwg.mxu0
    %1581 = vmatpush.bf16.msra.mxu0 %v1208
    %1582 = vmatpush.bf16.msra.mxu0 %v1201
    %1583 = vmatpush.bf16.msra.mxu0 %v1194
    %1584 = vmatpush.bf16.msra.mxu0 %v1187
    %1585 = vmatpush.bf16.msra.mxu0 %v1180
    %1586 = vmatpush.bf16.msra.mxu0 %v1173
    %1587 = vmatpush.bf16.msra.mxu0 %v1166
    %1588 = vmatpush.bf16.msra.mxu0 %v1159
    %1589 = vmatmul.bf16.gmra.mxu0 %v332
    %v1590 = vpop.f32.mrf.mxu0
    %v1591 = vadd.f32 %v1577, %v1590
    %v1592 = vpop.f32.mrf.mxu0
    %v1593 = vadd.f32 %v1579, %v1592
    %1594 = vdwg.mxu0
    %1595 = vmatpush.bf16.msra.mxu0 %v1264
    %1596 = vmatpush.bf16.msra.mxu0 %v1257
    %1597 = vmatpush.bf16.msra.mxu0 %v1250
    %1598 = vmatpush.bf16.msra.mxu0 %v1243
    %1599 = vmatpush.bf16.msra.mxu0 %v1236
    %1600 = vmatpush.bf16.msra.mxu0 %v1229
    %1601 = vmatpush.bf16.msra.mxu0 %v1222
    %1602 = vmatpush.bf16.msra.mxu0 %v1215
    %1603 = vmatmul.bf16.gmra.mxu0 %v333
    %v1604 = vpop.f32.mrf.mxu0
    %v1605 = vadd.f32 %v1591, %v1604
    %v1606 = vpop.f32.mrf.mxu0
    %v1607 = vadd.f32 %v1593, %v1606
    %1608 = vdwg.mxu0
    %1609 = vmatpush.bf16.msra.mxu0 0
    %1610 = vmatpush.bf16.msra.mxu0 0
    %1611 = vmatpush.bf16.msra.mxu0 0
    %1612 = vmatpush.bf16.msra.mxu0 0
    %1613 = vmatpush.bf16.msra.mxu0 0
    %1614 = vmatpush.bf16.msra.mxu0 0
    %1615 = vmatpush.bf16.msra.mxu0 0
    %1616 = vmatpush.bf16.msra.mxu0 %v1271
    %1617 = vmatmul.bf16.gmra.mxu0 %v1453
    %v1618 = vpop.f32.mrf.mxu0
    %v1619 = vadd.f32 %v1605, %v1618
    %v1620 = vpop.f32.mrf.mxu0
    %v1621 = vadd.f32 %v1607, %v1620
    %1622 = vdwg.mxu0
    %1623 = vmatpush.bf16.msra.mxu0 %v1153
    %1624 = vmatpush.bf16.msra.mxu0 %v1146
    %1625 = vmatpush.bf16.msra.mxu0 %v1139
    %1626 = vmatpush.bf16.msra.mxu0 %v1132
    %1627 = vmatpush.bf16.msra.mxu0 %v1125
    %1628 = vmatpush.bf16.msra.mxu0 %v1118
    %1629 = vmatpush.bf16.msra.mxu0 %v1111
    %1630 = vmatpush.bf16.msra.mxu0 %v1104
    %1631 = vmatmul.bf16.gmra.mxu0 %v331
    %v1632 = vpop.f32.mrf.mxu0
    %v1633 = vadd.f32 %v540, %v1632
    %v1634 = vpop.f32.mrf.mxu0
    %v1635 = vadd.f32 %v540, %v1634
    %1636 = vdwg.mxu0
    %1637 = vmatpush.bf16.msra.mxu0 %v1209
    %1638 = vmatpush.bf16.msra.mxu0 %v1202
    %1639 = vmatpush.bf16.msra.mxu0 %v1195
    %1640 = vmatpush.bf16.msra.mxu0 %v1188
    %1641 = vmatpush.bf16.msra.mxu0 %v1181
    %1642 = vmatpush.bf16.msra.mxu0 %v1174
    %1643 = vmatpush.bf16.msra.mxu0 %v1167
    %1644 = vmatpush.bf16.msra.mxu0 %v1160
    %1645 = vmatmul.bf16.gmra.mxu0 %v332
    %v1646 = vpop.f32.mrf.mxu0
    %v1647 = vadd.f32 %v1633, %v1646
    %v1648 = vpop.f32.mrf.mxu0
    %v1649 = vadd.f32 %v1635, %v1648
    %1650 = vdwg.mxu0
    %1651 = vmatpush.bf16.msra.mxu0 %v1265
    %1652 = vmatpush.bf16.msra.mxu0 %v1258
    %1653 = vmatpush.bf16.msra.mxu0 %v1251
    %1654 = vmatpush.bf16.msra.mxu0 %v1244
    %1655 = vmatpush.bf16.msra.mxu0 %v1237
    %1656 = vmatpush.bf16.msra.mxu0 %v1230
    %1657 = vmatpush.bf16.msra.mxu0 %v1223
    %1658 = vmatpush.bf16.msra.mxu0 %v1216
    %1659 = vmatmul.bf16.gmra.mxu0 %v333
    %v1660 = vpop.f32.mrf.mxu0
    %v1661 = vadd.f32 %v1647, %v1660
    %v1662 = vpop.f32.mrf.mxu0
    %v1663 = vadd.f32 %v1649, %v1662
    %1664 = vdwg.mxu0
    %1665 = vmatpush.bf16.msra.mxu0 0
    %1666 = vmatpush.bf16.msra.mxu0 0
    %1667 = vmatpush.bf16.msra.mxu0 0
    %1668 = vmatpush.bf16.msra.mxu0 0
    %1669 = vmatpush.bf16.msra.mxu0 0
    %1670 = vmatpush.bf16.msra.mxu0 0
    %1671 = vmatpush.bf16.msra.mxu0 0
    %1672 = vmatpush.bf16.msra.mxu0 %v1272
    %1673 = vmatmul.bf16.gmra.mxu0 %v1453
    %v1674 = vpop.f32.mrf.mxu0
    %v1675 = vadd.f32 %v1661, %v1674
    %v1676 = vpop.f32.mrf.mxu0
    %v1677 = vadd.f32 %v1663, %v1676
    %1678 = vdwg.mxu0
    %1679 = vmatpush.bf16.msra.mxu0 %v1154
    %1680 = vmatpush.bf16.msra.mxu0 %v1147
    %1681 = vmatpush.bf16.msra.mxu0 %v1140
    %1682 = vmatpush.bf16.msra.mxu0 %v1133
    %1683 = vmatpush.bf16.msra.mxu0 %v1126
    %1684 = vmatpush.bf16.msra.mxu0 %v1119
    %1685 = vmatpush.bf16.msra.mxu0 %v1112
    %1686 = vmatpush.bf16.msra.mxu0 %v1105
    %1687 = vmatmul.bf16.gmra.mxu0 %v331
    %v1688 = vpop.f32.mrf.mxu0
    %v1689 = vadd.f32 %v541, %v1688
    %v1690 = vpop.f32.mrf.mxu0
    %v1691 = vadd.f32 %v541, %v1690
    %1692 = vdwg.mxu0
    %1693 = vmatpush.bf16.msra.mxu0 %v1210
    %1694 = vmatpush.bf16.msra.mxu0 %v1203
    %1695 = vmatpush.bf16.msra.mxu0 %v1196
    %1696 = vmatpush.bf16.msra.mxu0 %v1189
    %1697 = vmatpush.bf16.msra.mxu0 %v1182
    %1698 = vmatpush.bf16.msra.mxu0 %v1175
    %1699 = vmatpush.bf16.msra.mxu0 %v1168
    %1700 = vmatpush.bf16.msra.mxu0 %v1161
    %1701 = vmatmul.bf16.gmra.mxu0 %v332
    %v1702 = vpop.f32.mrf.mxu0
    %v1703 = vadd.f32 %v1689, %v1702
    %v1704 = vpop.f32.mrf.mxu0
    %v1705 = vadd.f32 %v1691, %v1704
    %1706 = vdwg.mxu0
    %1707 = vmatpush.bf16.msra.mxu0 %v1266
    %1708 = vmatpush.bf16.msra.mxu0 %v1259
    %1709 = vmatpush.bf16.msra.mxu0 %v1252
    %1710 = vmatpush.bf16.msra.mxu0 %v1245
    %1711 = vmatpush.bf16.msra.mxu0 %v1238
    %1712 = vmatpush.bf16.msra.mxu0 %v1231
    %1713 = vmatpush.bf16.msra.mxu0 %v1224
    %1714 = vmatpush.bf16.msra.mxu0 %v1217
    %1715 = vmatmul.bf16.gmra.mxu0 %v333
    %v1716 = vpop.f32.mrf.mxu0
    %v1717 = vadd.f32 %v1703, %v1716
    %v1718 = vpop.f32.mrf.mxu0
    %v1719 = vadd.f32 %v1705, %v1718
    %1720 = vdwg.mxu0
    %1721 = vmatpush.bf16.msra.mxu0 0
    %1722 = vmatpush.bf16.msra.mxu0 0
    %1723 = vmatpush.bf16.msra.mxu0 0
    %1724 = vmatpush.bf16.msra.mxu0 0
    %1725 = vmatpush.bf16.msra.mxu0 0
    %1726 = vmatpush.bf16.msra.mxu0 0
    %1727 = vmatpush.bf16.msra.mxu0 0
    %1728 = vmatpush.bf16.msra.mxu0 %v1273
    %1729 = vmatmul.bf16.gmra.mxu0 %v1453
    %v1730 = vpop.f32.mrf.mxu0
    %v1731 = vadd.f32 %v1717, %v1730
    %v1732 = vpop.f32.mrf.mxu0
    %v1733 = vadd.f32 %v1719, %v1732
    %1734 = vdwg.mxu0
    %1735 = vmatpush.bf16.msra.mxu0 %v1155
    %1736 = vmatpush.bf16.msra.mxu0 %v1148
    %1737 = vmatpush.bf16.msra.mxu0 %v1141
    %1738 = vmatpush.bf16.msra.mxu0 %v1134
    %1739 = vmatpush.bf16.msra.mxu0 %v1127
    %1740 = vmatpush.bf16.msra.mxu0 %v1120
    %1741 = vmatpush.bf16.msra.mxu0 %v1113
    %1742 = vmatpush.bf16.msra.mxu0 %v1106
    %1743 = vmatmul.bf16.gmra.mxu0 %v331
    %v1744 = vpop.f32.mrf.mxu0
    %v1745 = vadd.f32 %v542, %v1744
    %v1746 = vpop.f32.mrf.mxu0
    %v1747 = vadd.f32 %v542, %v1746
    %1748 = vdwg.mxu0
    %1749 = vmatpush.bf16.msra.mxu0 %v1211
    %1750 = vmatpush.bf16.msra.mxu0 %v1204
    %1751 = vmatpush.bf16.msra.mxu0 %v1197
    %1752 = vmatpush.bf16.msra.mxu0 %v1190
    %1753 = vmatpush.bf16.msra.mxu0 %v1183
    %1754 = vmatpush.bf16.msra.mxu0 %v1176
    %1755 = vmatpush.bf16.msra.mxu0 %v1169
    %1756 = vmatpush.bf16.msra.mxu0 %v1162
    %1757 = vmatmul.bf16.gmra.mxu0 %v332
    %v1758 = vpop.f32.mrf.mxu0
    %v1759 = vadd.f32 %v1745, %v1758
    %v1760 = vpop.f32.mrf.mxu0
    %v1761 = vadd.f32 %v1747, %v1760
    %1762 = vdwg.mxu0
    %1763 = vmatpush.bf16.msra.mxu0 %v1267
    %1764 = vmatpush.bf16.msra.mxu0 %v1260
    %1765 = vmatpush.bf16.msra.mxu0 %v1253
    %1766 = vmatpush.bf16.msra.mxu0 %v1246
    %1767 = vmatpush.bf16.msra.mxu0 %v1239
    %1768 = vmatpush.bf16.msra.mxu0 %v1232
    %1769 = vmatpush.bf16.msra.mxu0 %v1225
    %1770 = vmatpush.bf16.msra.mxu0 %v1218
    %1771 = vmatmul.bf16.gmra.mxu0 %v333
    %v1772 = vpop.f32.mrf.mxu0
    %v1773 = vadd.f32 %v1759, %v1772
    %v1774 = vpop.f32.mrf.mxu0
    %v1775 = vadd.f32 %v1761, %v1774
    %1776 = vdwg.mxu0
    %1777 = vmatpush.bf16.msra.mxu0 0
    %1778 = vmatpush.bf16.msra.mxu0 0
    %1779 = vmatpush.bf16.msra.mxu0 0
    %1780 = vmatpush.bf16.msra.mxu0 0
    %1781 = vmatpush.bf16.msra.mxu0 0
    %1782 = vmatpush.bf16.msra.mxu0 0
    %1783 = vmatpush.bf16.msra.mxu0 0
    %1784 = vmatpush.bf16.msra.mxu0 %v1274
    %1785 = vmatmul.bf16.gmra.mxu0 %v1453
    %v1786 = vpop.f32.mrf.mxu0
    %v1787 = vadd.f32 %v1773, %v1786
    %v1788 = vpop.f32.mrf.mxu0
    %v1789 = vadd.f32 %v1775, %v1788
    %1790 = vdwg.mxu0
    %1791 = vmatpush.bf16.msra.mxu0 %v1156
    %1792 = vmatpush.bf16.msra.mxu0 %v1149
    %1793 = vmatpush.bf16.msra.mxu0 %v1142
    %1794 = vmatpush.bf16.msra.mxu0 %v1135
    %1795 = vmatpush.bf16.msra.mxu0 %v1128
    %1796 = vmatpush.bf16.msra.mxu0 %v1121
    %1797 = vmatpush.bf16.msra.mxu0 %v1114
    %1798 = vmatpush.bf16.msra.mxu0 %v1107
    %1799 = vmatmul.bf16.gmra.mxu0 %v331
    %v1800 = vpop.f32.mrf.mxu0
    %v1801 = vadd.f32 %v543, %v1800
    %v1802 = vpop.f32.mrf.mxu0
    %v1803 = vadd.f32 %v543, %v1802
    %1804 = vdwg.mxu0
    %1805 = vmatpush.bf16.msra.mxu0 %v1212
    %1806 = vmatpush.bf16.msra.mxu0 %v1205
    %1807 = vmatpush.bf16.msra.mxu0 %v1198
    %1808 = vmatpush.bf16.msra.mxu0 %v1191
    %1809 = vmatpush.bf16.msra.mxu0 %v1184
    %1810 = vmatpush.bf16.msra.mxu0 %v1177
    %1811 = vmatpush.bf16.msra.mxu0 %v1170
    %1812 = vmatpush.bf16.msra.mxu0 %v1163
    %1813 = vmatmul.bf16.gmra.mxu0 %v332
    %v1814 = vpop.f32.mrf.mxu0
    %v1815 = vadd.f32 %v1801, %v1814
    %v1816 = vpop.f32.mrf.mxu0
    %v1817 = vadd.f32 %v1803, %v1816
    %1818 = vdwg.mxu0
    %1819 = vmatpush.bf16.msra.mxu0 %v1268
    %1820 = vmatpush.bf16.msra.mxu0 %v1261
    %1821 = vmatpush.bf16.msra.mxu0 %v1254
    %1822 = vmatpush.bf16.msra.mxu0 %v1247
    %1823 = vmatpush.bf16.msra.mxu0 %v1240
    %1824 = vmatpush.bf16.msra.mxu0 %v1233
    %1825 = vmatpush.bf16.msra.mxu0 %v1226
    %1826 = vmatpush.bf16.msra.mxu0 %v1219
    %1827 = vmatmul.bf16.gmra.mxu0 %v333
    %v1828 = vpop.f32.mrf.mxu0
    %v1829 = vadd.f32 %v1815, %v1828
    %v1830 = vpop.f32.mrf.mxu0
    %v1831 = vadd.f32 %v1817, %v1830
    %1832 = vdwg.mxu0
    %1833 = vmatpush.bf16.msra.mxu0 0
    %1834 = vmatpush.bf16.msra.mxu0 0
    %1835 = vmatpush.bf16.msra.mxu0 0
    %1836 = vmatpush.bf16.msra.mxu0 0
    %1837 = vmatpush.bf16.msra.mxu0 0
    %1838 = vmatpush.bf16.msra.mxu0 0
    %1839 = vmatpush.bf16.msra.mxu0 0
    %1840 = vmatpush.bf16.msra.mxu0 %v1275
    %1841 = vmatmul.bf16.gmra.mxu0 %v1453
    %v1842 = vpop.f32.mrf.mxu0
    %v1843 = vadd.f32 %v1829, %v1842
    %v1844 = vpop.f32.mrf.mxu0
    %v1845 = vadd.f32 %v1831, %v1844
    %1846 = vdwg.mxu0
    %v1847 = vmax.f32 %v1507, 0.0
    %v1848 = vmax.f32 %v1563, 0.0
    %v1849 = vmax.f32 %v1619, 0.0
    %v1850 = vmax.f32 %v1675, 0.0
    %v1851 = vmax.f32 %v1731, 0.0
    %v1852 = vmax.f32 %v1787, 0.0
    %v1853 = vmax.f32 %v1843, 0.0
    %v1854 = vmax.f32 %v1509, 0.0
    %v1855 = vmax.f32 %v1565, 0.0
    %v1856 = vmax.f32 %v1621, 0.0
    %v1857 = vmax.f32 %v1677, 0.0
    %v1858 = vmax.f32 %v1733, 0.0
    %v1859 = vmax.f32 %v1789, 0.0
    %v1860 = vmax.f32 %v1845, 0.0
    %v1861 = vpack.c.bf16 %v1848, %v1847
    %v1862 = vpack.c.bf16 %v1850, %v1849
    %v1863 = vpack.c.bf16 %v1852, %v1851
    %v1864 = vpack.c.bf16 %v1855, %v1854
    %v1865 = vpack.c.bf16 %v1857, %v1856
    %v1866 = vpack.c.bf16 %v1859, %v1858
    %v1867 = vld [vmem:[%s5] sm:$0xf]
    %v1868 = vld [vmem:[%s5 + $0x4] sm:$0xf]
    %v1869 = vld [vmem:[%s5 + $0x8] sm:$0xf]
    %v1870 = vld [vmem:[%s5 + $0xc] sm:$0xf]
    %v1871 = vld [vmem:[%s5 + $0x10] sm:$0xf]
    %v1872 = vld [vmem:[%s5 + $0x14] sm:$0xf]
    %v1873 = vld [vmem:[%s5 + $0x18] sm:$0xf]
    %v1874 = vld [vmem:[%s5 + $0x1c] sm:$0xf]
    %v1875 = vld [vmem:[%s5 + $0x20] sm:$0xf]
    %v1876 = vld [vmem:[%s5 + $0x24] sm:$0xf]
    %v1877 = vld [vmem:[%s5 + $0x28] sm:$0xf]
    %v1878 = vld [vmem:[%s5 + $0x2c] sm:$0xf]
    %v1879 = vld [vmem:[%s5 + $0x30] sm:$0xf]
    %v1880 = vld [vmem:[%s5 + $0x34] sm:$0xf]
    %v1881 = vld [vmem:[%s5 + $0x38] sm:$0xf]
    %v1882 = vld [vmem:[%s5 + $0x3c] sm:$0xf]
    %v1883 = vld [vmem:[%s5 + $0x40] sm:$0xf]
    %v1884 = vld [vmem:[%s5 + $0x44] sm:$0xf]
    %v1885 = vld [vmem:[%s5 + $0x48] sm:$0xf]
    %v1886 = vld [vmem:[%s5 + $0x4c] sm:$0xf]
    %v1887 = vld [vmem:[%s5 + $0x50] sm:$0xf]
    %v1888 = vld [vmem:[%s5 + $0x54] sm:$0xf]
    %v1889 = vld [vmem:[%s5 + $0x58] sm:$0xf]
    %v1890 = vld [vmem:[%s5 + $0x5c] sm:$0xf]
    %v1891 = vld [vmem:[%s5 + $0x60] sm:$0xf]
    %v1892 = vld [vmem:[%s5 + $0x64] sm:$0xf]
    %v1893 = vld [vmem:[%s5 + $0x68] sm:$0xf]
    %v1894 = vld [vmem:[%s5 + $0x6c] sm:$0xf]
    %v1895 = vld [vmem:[%s5 + $0x70] sm:$0xf]
    %v1896 = vld [vmem:[%s5 + $0x74] sm:$0xf]
    %v1897 = vld [vmem:[%s5 + $0x78] sm:$0xf]
    %v1898 = vld [vmem:[%s5 + $0x7c] sm:$0xf]
    %v1899 = vld [vmem:[%s5 + $0x80] sm:$0xf]
    %v1900 = vld [vmem:[%s5 + $0x84] sm:$0xf]
    %v1901 = vld [vmem:[%s5 + $0x88] sm:$0xf]
    %v1902 = vld [vmem:[%s5 + $0x8c] sm:$0xf]
    %v1903 = vld [vmem:[%s5 + $0x90] sm:$0xf]
    %v1904 = vld [vmem:[%s5 + $0x94] sm:$0xf]
    %v1905 = vld [vmem:[%s5 + $0x98] sm:$0xf]
    %v1906 = vld [vmem:[%s5 + $0x9c] sm:$0xf]
    %v1907 = vld [vmem:[%s5 + $0xa0] sm:$0xf]
    %v1908 = vld [vmem:[%s5 + $0xa4] sm:$0xf]
    %v1909 = vld [vmem:[%s5 + $0xa8] sm:$0xf]
    %v1910 = vld [vmem:[%s5 + $0xac] sm:$0xf]
    %v1911 = vld [vmem:[%s5 + $0xb0] sm:$0xf]
    %v1912 = vld [vmem:[%s5 + $0xb4] sm:$0xf]
    %v1913 = vld [vmem:[%s5 + $0xb8] sm:$0xf]
    %v1914 = vld [vmem:[%s5 + $0xbc] sm:$0xf]
    %v1915 = vld [vmem:[%s6] sm:$0x1]
    %v1917 = vperm.slane %v1915, 0
    %v1923 = vunpack.c.l.b16 %v1861
    %v1924 = vunpack.c.h.b16 %v1861
    %v1925 = vunpack.c.l.b16 %v1862
    %v1926 = vunpack.c.l.b16 %v1864
    %v1927 = vunpack.c.h.b16 %v1864
    %v1928 = vunpack.c.l.b16 %v1865
    %v1929 = vpack.c.b16 %v1926, %v1923
    %v1930 = vpack.c.b16 %v1927, %v1924
    %v1931 = vpack.c.b16 %v1928, %v1925
    %v1983 = vunpack.c.l.b16 %v1867
    %v1984 = vunpack.c.l.b16 %v1868
    %v1985 = vunpack.c.l.b16 %v1869
    %v1986 = vunpack.c.l.b16 %v1870
    %v1987 = vunpack.c.l.b16 %v1871
    %v1988 = vunpack.c.l.b16 %v1872
    %v1989 = vunpack.c.l.b16 %v1873
    %v1990 = vunpack.c.l.b16 %v1874
    %v1991 = vunpack.c.l.b16 %v1875
    %v1992 = vunpack.c.l.b16 %v1876
    %v1993 = vunpack.c.l.b16 %v1877
    %v1994 = vunpack.c.l.b16 %v1878
    %v1995 = vunpack.c.l.b16 %v1879
    %v1996 = vunpack.c.l.b16 %v1880
    %v1997 = vunpack.c.l.b16 %v1881
    %v1998 = vunpack.c.l.b16 %v1882
    %v1999 = vunpack.c.l.b16 %v1883
    %v2000 = vunpack.c.l.b16 %v1884
    %v2001 = vunpack.c.l.b16 %v1885
    %v2002 = vunpack.c.l.b16 %v1886
    %v2003 = vunpack.c.l.b16 %v1887
    %v2004 = vunpack.c.l.b16 %v1888
    %v2005 = vunpack.c.l.b16 %v1889
    %v2006 = vunpack.c.l.b16 %v1890
    %v2007 = vunpack.c.l.b16 %v1891
    %v2008 = vunpack.c.l.b16 %v1892
    %v2009 = vunpack.c.l.b16 %v1893
    %v2010 = vunpack.c.l.b16 %v1894
    %v2011 = vunpack.c.l.b16 %v1895
    %v2012 = vunpack.c.l.b16 %v1896
    %v2013 = vunpack.c.l.b16 %v1897
    %v2014 = vunpack.c.l.b16 %v1898
    %v2015 = vunpack.c.l.b16 %v1899
    %v2016 = vunpack.c.l.b16 %v1900
    %v2017 = vunpack.c.l.b16 %v1901
    %v2018 = vunpack.c.l.b16 %v1902
    %v2019 = vunpack.c.l.b16 %v1903
    %v2020 = vunpack.c.l.b16 %v1904
    %v2021 = vunpack.c.l.b16 %v1905
    %v2022 = vunpack.c.l.b16 %v1906
    %v2023 = vunpack.c.l.b16 %v1907
    %v2024 = vunpack.c.l.b16 %v1908
    %v2025 = vunpack.c.l.b16 %v1909
    %v2026 = vunpack.c.l.b16 %v1910
    %v2027 = vunpack.c.l.b16 %v1911
    %v2028 = vunpack.c.l.b16 %v1912
    %v2029 = vunpack.c.l.b16 %v1913
    %v2030 = vunpack.c.l.b16 %v1914
    %v2031 = vpack.c.b16 %v1984, %v1983
    %v2032 = vpack.c.b16 %v1986, %v1985
    %v2033 = vpack.c.b16 %v1988, %v1987
    %v2034 = vpack.c.b16 %v1990, %v1989
    %v2035 = vpack.c.b16 %v1992, %v1991
    %v2036 = vpack.c.b16 %v1994, %v1993
    %v2037 = vpack.c.b16 %v1996, %v1995
    %v2038 = vpack.c.b16 %v1998, %v1997
    %v2039 = vpack.c.b16 %v2000, %v1999
    %v2040 = vpack.c.b16 %v2002, %v2001
    %v2041 = vpack.c.b16 %v2004, %v2003
    %v2042 = vpack.c.b16 %v2006, %v2005
    %v2043 = vpack.c.b16 %v2008, %v2007
    %v2044 = vpack.c.b16 %v2010, %v2009
    %v2045 = vpack.c.b16 %v2012, %v2011
    %v2046 = vpack.c.b16 %v2014, %v2013
    %v2047 = vpack.c.b16 %v2016, %v2015
    %v2048 = vpack.c.b16 %v2018, %v2017
    %v2049 = vpack.c.b16 %v2020, %v2019
    %v2050 = vpack.c.b16 %v2022, %v2021
    %v2051 = vpack.c.b16 %v2024, %v2023
    %v2052 = vpack.c.b16 %v2026, %v2025
    %v2053 = vpack.c.b16 %v2028, %v2027
    %v2054 = vpack.c.b16 %v2030, %v2029
    %2079 = vmatpush.bf16.msra.mxu0 %v2038
    %2080 = vmatpush.bf16.msra.mxu0 %v2037
    %2081 = vmatpush.bf16.msra.mxu0 %v2036
    %2082 = vmatpush.bf16.msra.mxu0 %v2035
    %2083 = vmatpush.bf16.msra.mxu0 %v2034
    %2084 = vmatpush.bf16.msra.mxu0 %v2033
    %2085 = vmatpush.bf16.msra.mxu0 %v2032
    %2086 = vmatpush.bf16.msra.mxu0 %v2031
    %2087 = vmatmul.bf16.gmra.mxu0 %v1929
    %v2088 = vpop.f32.mrf.mxu0
    %v2089 = vadd.f32 %v1917, %v2088
    %v2090 = vpop.f32.mrf.mxu0
    %v2091 = vadd.f32 %v1917, %v2090
    %2092 = vdwg.mxu0
    %2093 = vmatpush.bf16.msra.mxu0 %v2046
    %2094 = vmatpush.bf16.msra.mxu0 %v2045
    %2095 = vmatpush.bf16.msra.mxu0 %v2044
    %2096 = vmatpush.bf16.msra.mxu0 %v2043
    %2097 = vmatpush.bf16.msra.mxu0 %v2042
    %2098 = vmatpush.bf16.msra.mxu0 %v2041
    %2099 = vmatpush.bf16.msra.mxu0 %v2040
    %2100 = vmatpush.bf16.msra.mxu0 %v2039
    %2101 = vmatmul.bf16.gmra.mxu0 %v1930
    %v2102 = vpop.f32.mrf.mxu0
    %v2103 = vadd.f32 %v2089, %v2102
    %v2104 = vpop.f32.mrf.mxu0
    %v2105 = vadd.f32 %v2091, %v2104
    %2106 = vdwg.mxu0
    %2107 = vmatpush.bf16.msra.mxu0 %v2054
    %2108 = vmatpush.bf16.msra.mxu0 %v2053
    %2109 = vmatpush.bf16.msra.mxu0 %v2052
    %2110 = vmatpush.bf16.msra.mxu0 %v2051
    %2111 = vmatpush.bf16.msra.mxu0 %v2050
    %2112 = vmatpush.bf16.msra.mxu0 %v2049
    %2113 = vmatpush.bf16.msra.mxu0 %v2048
    %2114 = vmatpush.bf16.msra.mxu0 %v2047
    %2115 = vmatmul.bf16.gmra.mxu0 %v1931
    %v2116 = vpop.f32.mrf.mxu0
    %v2117 = vadd.f32 %v2103, %v2116
    %v2118 = vpop.f32.mrf.mxu0
    %v2119 = vadd.f32 %v2105, %v2118
    %2120 = vdwg.mxu0
    %v2121 = vld [vmem:[#allocation4] sm:$0xff]
    %v2122 = vld [vmem:[#allocation4 + $0x8] sm:$0xff]
    %v2123 = vld [vmem:[#allocation4 + $0x10] sm:$0xff]
    %v2124 = vld [vmem:[#allocation4 + $0x18] sm:$0xff]
    %v2125 = vld [vmem:[#allocation4 + $0x20] sm:$0xff]
    %v2126 = vld [vmem:[#allocation4 + $0x28] sm:$0xff]
    %v2127 = vld [vmem:[#allocation4 + $0x30] sm:$0xff]
    %v2128 = vld [vmem:[#allocation4 + $0x38] sm:$0xff]
    %v2129 = vld [vmem:[#allocation4 + $0x40] sm:$0xff]
    %v2130 = vld [vmem:[#allocation4 + $0x48] sm:$0xff]
    %v2131 = vld [vmem:[#allocation4 + $0x50] sm:$0xff]
    %v2132 = vld [vmem:[#allocation4 + $0x58] sm:$0xff]
    %v2133 = vld [vmem:[#allocation4 + $0x60] sm:$0xff]
    %v2134 = vld [vmem:[#allocation4 + $0x68] sm:$0xff]
    %v2135 = vld [vmem:[#allocation4 + $0x70] sm:$0xff]
    %v2136 = vld [vmem:[#allocation4 + $0x78] sm:$0xff]
    %v2137 = vld [vmem:[#allocation4 + $0x80] sm:$0xff]
    %v2138 = vld [vmem:[#allocation4 + $0x88] sm:$0xff]
    %v2139 = vld [vmem:[#allocation4 + $0x90] sm:$0xff]
    %v2140 = vld [vmem:[#allocation4 + $0x98] sm:$0xff]
    %v2141 = vld [vmem:[#allocation4 + $0xa0] sm:$0xff]
    %v2142 = vld [vmem:[#allocation4 + $0xa8] sm:$0xff]
    %v2143 = vld [vmem:[#allocation4 + $0xb0] sm:$0xff]
    %v2144 = vld [vmem:[#allocation4 + $0xb8] sm:$0xff]
    %v2145 = vld [vmem:[#allocation4 + $0xc0] sm:$0xff]
    %v2146 = vld [vmem:[#allocation4 + $0xc8] sm:$0xff]
    %v2147 = vld [vmem:[#allocation4 + $0xd0] sm:$0xff]
    %v2148 = vld [vmem:[#allocation4 + $0xd8] sm:$0xff]
    %v2149 = vld [vmem:[#allocation4 + $0xe0] sm:$0xff]
    %v2150 = vld [vmem:[#allocation4 + $0xe8] sm:$0xff]
    %v2151 = vld [vmem:[#allocation4 + $0xf0] sm:$0xff]
    %v2152 = vld [vmem:[#allocation4 + $0xf8] sm:$0xff]
    %v2153 = vld [vmem:[#allocation4 + $0x100] sm:$0xff]
    %v2154 = vld [vmem:[#allocation4 + $0x108] sm:$0xff]
    %v2155 = vld [vmem:[#allocation4 + $0x110] sm:$0xff]
    %v2156 = vld [vmem:[#allocation4 + $0x118] sm:$0xff]
    %v2157 = vld [vmem:[#allocation4 + $0x120] sm:$0xff]
    %v2158 = vld [vmem:[#allocation4 + $0x128] sm:$0xff]
    %v2159 = vld [vmem:[#allocation4 + $0x130] sm:$0xff]
    %v2160 = vld [vmem:[#allocation4 + $0x138] sm:$0xff]
    %v2161 = vld [vmem:[#allocation4 + $0x140] sm:$0xff]
    %v2162 = vld [vmem:[#allocation4 + $0x148] sm:$0xff]
    %v2163 = vld [vmem:[#allocation4 + $0x150] sm:$0xff]
    %v2164 = vld [vmem:[#allocation4 + $0x158] sm:$0xff]
    %v2165 = vld [vmem:[#allocation4 + $0x160] sm:$0xff]
    %v2166 = vld [vmem:[#allocation4 + $0x168] sm:$0xff]
    %v2167 = vld [vmem:[#allocation4 + $0x170] sm:$0xff]
    %v2168 = vld [vmem:[#allocation4 + $0x178] sm:$0xff]
    %v2169 = vld [vmem:[#allocation4 + $0x180] sm:$0xff]
    %v2170 = vld [vmem:[#allocation4 + $0x188] sm:$0xff]
    %v2171 = vld [vmem:[#allocation4 + $0x190] sm:$0xff]
    %v2172 = vld [vmem:[#allocation4 + $0x198] sm:$0xff]
    %v2173 = vld [vmem:[#allocation4 + $0x1a0] sm:$0xff]
    %v2174 = vld [vmem:[#allocation4 + $0x1a8] sm:$0xff]
    %v2175 = vld [vmem:[#allocation4 + $0x1b0] sm:$0xff]
    %v2176 = vld [vmem:[#allocation4 + $0x1b8] sm:$0xff]
    %v2177 = vld [vmem:[#allocation4 + $0x1c0] sm:$0xff]
    %v2178 = vld [vmem:[#allocation4 + $0x1c8] sm:$0xff]
    %v2179 = vld [vmem:[#allocation4 + $0x1d0] sm:$0xff]
    %v2180 = vld [vmem:[#allocation4 + $0x1d8] sm:$0xff]
    %v2181 = vld [vmem:[#allocation4 + $0x1e0] sm:$0xff]
    %v2182 = vld [vmem:[#allocation4 + $0x1e8] sm:$0xff]
    %v2183 = vld [vmem:[#allocation4 + $0x1f0] sm:$0xff]
    %v2184 = vld [vmem:[#allocation4 + $0x1f8] sm:$0xff]
    %v2185 = vld [vmem:[#allocation4 + $0x200] sm:$0xff]
    %v2186 = vld [vmem:[#allocation4 + $0x208] sm:$0xff]
    %v2187 = vld [vmem:[#allocation4 + $0x210] sm:$0xff]
    %v2188 = vld [vmem:[#allocation4 + $0x218] sm:$0xff]
    %v2189 = vld [vmem:[#allocation4 + $0x220] sm:$0xff]
    %v2190 = vld [vmem:[#allocation4 + $0x228] sm:$0xff]
    %v2191 = vld [vmem:[#allocation4 + $0x230] sm:$0xff]
    %v2192 = vld [vmem:[#allocation4 + $0x238] sm:$0xff]
    %v2193 = vld [vmem:[#allocation4 + $0x240] sm:$0xff]
    %v2194 = vld [vmem:[#allocation4 + $0x248] sm:$0xff]
    %v2195 = vld [vmem:[#allocation4 + $0x250] sm:$0xff]
    %v2196 = vld [vmem:[#allocation4 + $0x258] sm:$0xff]
    %v2197 = vld [vmem:[#allocation4 + $0x260] sm:$0xff]
    %v2198 = vld [vmem:[#allocation4 + $0x268] sm:$0xff]
    %v2199 = vld [vmem:[#allocation4 + $0x270] sm:$0xff]
    %v2200 = vld [vmem:[#allocation4 + $0x278] sm:$0xff]
    %v2201 = vld [vmem:[#allocation4 + $0x280] sm:$0xff]
    %v2202 = vld [vmem:[#allocation4 + $0x288] sm:$0xff]
    %v2203 = vld [vmem:[#allocation4 + $0x290] sm:$0xff]
    %v2204 = vld [vmem:[#allocation4 + $0x298] sm:$0xff]
    %v2205 = vld [vmem:[#allocation4 + $0x2a0] sm:$0xff]
    %v2206 = vld [vmem:[#allocation4 + $0x2a8] sm:$0xff]
    %v2207 = vld [vmem:[#allocation4 + $0x2b0] sm:$0xff]
    %v2208 = vld [vmem:[#allocation4 + $0x2b8] sm:$0xff]
    %v2209 = vld [vmem:[#allocation4 + $0x2c0] sm:$0xff]
    %v2210 = vld [vmem:[#allocation4 + $0x2c8] sm:$0xff]
    %v2211 = vld [vmem:[#allocation4 + $0x2d0] sm:$0xff]
    %v2212 = vld [vmem:[#allocation4 + $0x2d8] sm:$0xff]
    %v2213 = vld [vmem:[#allocation4 + $0x2e0] sm:$0xff]
    %v2214 = vld [vmem:[#allocation4 + $0x2e8] sm:$0xff]
    %v2215 = vld [vmem:[#allocation4 + $0x2f0] sm:$0xff]
    %v2216 = vld [vmem:[#allocation4 + $0x2f8] sm:$0xff]
    %v2217 = vld [vmem:[#allocation4 + $0x300] sm:$0xff]
    %v2218 = vld [vmem:[#allocation4 + $0x308] sm:$0xff]
    %v2219 = vld [vmem:[#allocation4 + $0x310] sm:$0xff]
    %v2220 = vld [vmem:[#allocation4 + $0x318] sm:$0xff]
    %v2221 = vld [vmem:[#allocation4 + $0x320] sm:$0xff]
    %v2222 = vld [vmem:[#allocation4 + $0x328] sm:$0xff]
    %v2223 = vld [vmem:[#allocation4 + $0x330] sm:$0xff]
    %v2224 = vld [vmem:[#allocation4 + $0x338] sm:$0xff]
    %v2225 = vld [vmem:[#allocation4 + $0x340] sm:$0xff]
    %v2226 = vld [vmem:[#allocation4 + $0x348] sm:$0xff]
    %v2227 = vld [vmem:[#allocation4 + $0x350] sm:$0xff]
    %v2228 = vld [vmem:[#allocation4 + $0x358] sm:$0xff]
    %v2229 = vld [vmem:[#allocation4 + $0x360] sm:$0xff]
    %v2230 = vld [vmem:[#allocation4 + $0x368] sm:$0xff]
    %v2231 = vld [vmem:[#allocation4 + $0x370] sm:$0xff]
    %v2232 = vld [vmem:[#allocation4 + $0x378] sm:$0xff]
    %v2233 = vld [vmem:[#allocation4 + $0x380] sm:$0xff]
    %v2234 = vld [vmem:[#allocation4 + $0x388] sm:$0xff]
    %v2235 = vld [vmem:[#allocation4 + $0x390] sm:$0xff]
    %v2236 = vld [vmem:[#allocation4 + $0x398] sm:$0xff]
    %v2237 = vld [vmem:[#allocation4 + $0x3a0] sm:$0xff]
    %v2238 = vld [vmem:[#allocation4 + $0x3a8] sm:$0xff]
    %v2239 = vld [vmem:[#allocation4 + $0x3b0] sm:$0xff]
    %v2240 = vld [vmem:[#allocation4 + $0x3b8] sm:$0xff]
    %v2241 = vld [vmem:[#allocation4 + $0x3c0] sm:$0xff]
    %v2242 = vld [vmem:[#allocation4 + $0x3c8] sm:$0xff]
    %v2243 = vld [vmem:[#allocation4 + $0x3d0] sm:$0xff]
    %v2244 = vld [vmem:[#allocation4 + $0x3d8] sm:$0xff]
    %v2245 = vld [vmem:[#allocation4 + $0x3e0] sm:$0xff]
    %v2246 = vld [vmem:[#allocation4 + $0x3e8] sm:$0xff]
    %v2247 = vld [vmem:[#allocation4 + $0x3f0] sm:$0xff]
    %v2248 = vld [vmem:[#allocation4 + $0x3f8] sm:$0xff]
    %v2249 = vld [vmem:[%s8] sm:$0xff]
    %v2251 = vperm.slane %v2249, 0
    %v2252 = vperm.slane %v2249, 1
    %v2253 = vperm.slane %v2249, 2
    %v2254 = vperm.slane %v2249, 3
    %v2255 = vperm.slane %v2249, 4
    %v2256 = vperm.slane %v2249, 5
    %v2257 = vperm.slane %v2249, 6
    %v2258 = vperm.slane %v2249, 7
    %v2269 = vunpack.c.h.b16 %v1862
    %v2270 = vunpack.c.l.b16 %v1863
    %v2271 = vunpack.c.h.b16 %v1865
    %v2272 = vunpack.c.l.b16 %v1866
    %v2273 = vpack.c.b16 %v2271, %v2269
    %v2274 = vpack.c.b16 %v2272, %v2270
    %v2405 = vunpack.c.l.b16 %v2121
    %v2406 = vunpack.c.h.b16 %v2121
    %v2407 = vunpack.c.l.b16 %v2122
    %v2408 = vunpack.c.h.b16 %v2122
    %v2409 = vunpack.c.l.b16 %v2123
    %v2410 = vunpack.c.h.b16 %v2123
    %v2411 = vunpack.c.l.b16 %v2124
    %v2412 = vunpack.c.h.b16 %v2124
    %v2413 = vunpack.c.l.b16 %v2125
    %v2414 = vunpack.c.h.b16 %v2125
    %v2415 = vunpack.c.l.b16 %v2126
    %v2416 = vunpack.c.h.b16 %v2126
    %v2417 = vunpack.c.l.b16 %v2127
    %v2418 = vunpack.c.h.b16 %v2127
    %v2419 = vunpack.c.l.b16 %v2128
    %v2420 = vunpack.c.h.b16 %v2128
    %v2421 = vunpack.c.l.b16 %v2129
    %v2422 = vunpack.c.h.b16 %v2129
    %v2423 = vunpack.c.l.b16 %v2130
    %v2424 = vunpack.c.h.b16 %v2130
    %v2425 = vunpack.c.l.b16 %v2131
    %v2426 = vunpack.c.h.b16 %v2131
    %v2427 = vunpack.c.l.b16 %v2132
    %v2428 = vunpack.c.h.b16 %v2132
    %v2429 = vunpack.c.l.b16 %v2133
    %v2430 = vunpack.c.h.b16 %v2133
    %v2431 = vunpack.c.l.b16 %v2134
    %v2432 = vunpack.c.h.b16 %v2134
    %v2433 = vunpack.c.l.b16 %v2135
    %v2434 = vunpack.c.h.b16 %v2135
    %v2435 = vunpack.c.l.b16 %v2136
    %v2436 = vunpack.c.h.b16 %v2136
    %v2437 = vunpack.c.l.b16 %v2137
    %v2438 = vunpack.c.h.b16 %v2137
    %v2439 = vunpack.c.l.b16 %v2138
    %v2440 = vunpack.c.h.b16 %v2138
    %v2441 = vunpack.c.l.b16 %v2139
    %v2442 = vunpack.c.h.b16 %v2139
    %v2443 = vunpack.c.l.b16 %v2140
    %v2444 = vunpack.c.h.b16 %v2140
    %v2445 = vunpack.c.l.b16 %v2141
    %v2446 = vunpack.c.h.b16 %v2141
    %v2447 = vunpack.c.l.b16 %v2142
    %v2448 = vunpack.c.h.b16 %v2142
    %v2449 = vunpack.c.l.b16 %v2143
    %v2450 = vunpack.c.h.b16 %v2143
    %v2451 = vunpack.c.l.b16 %v2144
    %v2452 = vunpack.c.h.b16 %v2144
    %v2453 = vunpack.c.l.b16 %v2145
    %v2454 = vunpack.c.h.b16 %v2145
    %v2455 = vunpack.c.l.b16 %v2146
    %v2456 = vunpack.c.h.b16 %v2146
    %v2457 = vunpack.c.l.b16 %v2147
    %v2458 = vunpack.c.h.b16 %v2147
    %v2459 = vunpack.c.l.b16 %v2148
    %v2460 = vunpack.c.h.b16 %v2148
    %v2461 = vunpack.c.l.b16 %v2149
    %v2462 = vunpack.c.h.b16 %v2149
    %v2463 = vunpack.c.l.b16 %v2150
    %v2464 = vunpack.c.h.b16 %v2150
    %v2465 = vunpack.c.l.b16 %v2151
    %v2466 = vunpack.c.h.b16 %v2151
    %v2467 = vunpack.c.l.b16 %v2152
    %v2468 = vunpack.c.h.b16 %v2152
    %v2469 = vunpack.c.l.b16 %v2153
    %v2470 = vunpack.c.h.b16 %v2153
    %v2471 = vunpack.c.l.b16 %v2154
    %v2472 = vunpack.c.h.b16 %v2154
    %v2473 = vunpack.c.l.b16 %v2155
    %v2474 = vunpack.c.h.b16 %v2155
    %v2475 = vunpack.c.l.b16 %v2156
    %v2476 = vunpack.c.h.b16 %v2156
    %v2477 = vunpack.c.l.b16 %v2157
    %v2478 = vunpack.c.h.b16 %v2157
    %v2479 = vunpack.c.l.b16 %v2158
    %v2480 = vunpack.c.h.b16 %v2158
    %v2481 = vunpack.c.l.b16 %v2159
    %v2482 = vunpack.c.h.b16 %v2159
    %v2483 = vunpack.c.l.b16 %v2160
    %v2484 = vunpack.c.h.b16 %v2160
    %v2485 = vunpack.c.l.b16 %v2161
    %v2486 = vunpack.c.h.b16 %v2161
    %v2487 = vunpack.c.l.b16 %v2162
    %v2488 = vunpack.c.h.b16 %v2162
    %v2489 = vunpack.c.l.b16 %v2163
    %v2490 = vunpack.c.h.b16 %v2163
    %v2491 = vunpack.c.l.b16 %v2164
    %v2492 = vunpack.c.h.b16 %v2164
    %v2493 = vunpack.c.l.b16 %v2165
    %v2494 = vunpack.c.h.b16 %v2165
    %v2495 = vunpack.c.l.b16 %v2166
    %v2496 = vunpack.c.h.b16 %v2166
    %v2497 = vunpack.c.l.b16 %v2167
    %v2498 = vunpack.c.h.b16 %v2167
    %v2499 = vunpack.c.l.b16 %v2168
    %v2500 = vunpack.c.h.b16 %v2168
    %v2501 = vunpack.c.l.b16 %v2169
    %v2502 = vunpack.c.h.b16 %v2169
    %v2503 = vunpack.c.l.b16 %v2170
    %v2504 = vunpack.c.h.b16 %v2170
    %v2505 = vunpack.c.l.b16 %v2171
    %v2506 = vunpack.c.h.b16 %v2171
    %v2507 = vunpack.c.l.b16 %v2172
    %v2508 = vunpack.c.h.b16 %v2172
    %v2509 = vunpack.c.l.b16 %v2173
    %v2510 = vunpack.c.h.b16 %v2173
    %v2511 = vunpack.c.l.b16 %v2174
    %v2512 = vunpack.c.h.b16 %v2174
    %v2513 = vunpack.c.l.b16 %v2175
    %v2514 = vunpack.c.h.b16 %v2175
    %v2515 = vunpack.c.l.b16 %v2176
    %v2516 = vunpack.c.h.b16 %v2176
    %v2517 = vunpack.c.l.b16 %v2177
    %v2518 = vunpack.c.h.b16 %v2177
    %v2519 = vunpack.c.l.b16 %v2178
    %v2520 = vunpack.c.h.b16 %v2178
    %v2521 = vunpack.c.l.b16 %v2179
    %v2522 = vunpack.c.h.b16 %v2179
    %v2523 = vunpack.c.l.b16 %v2180
    %v2524 = vunpack.c.h.b16 %v2180
    %v2525 = vunpack.c.l.b16 %v2181
    %v2526 = vunpack.c.h.b16 %v2181
    %v2527 = vunpack.c.l.b16 %v2182
    %v2528 = vunpack.c.h.b16 %v2182
    %v2529 = vunpack.c.l.b16 %v2183
    %v2530 = vunpack.c.h.b16 %v2183
    %v2531 = vunpack.c.l.b16 %v2184
    %v2532 = vunpack.c.h.b16 %v2184
    %v2533 = vunpack.c.l.b16 %v2185
    %v2534 = vunpack.c.h.b16 %v2185
    %v2535 = vunpack.c.l.b16 %v2186
    %v2536 = vunpack.c.h.b16 %v2186
    %v2537 = vunpack.c.l.b16 %v2187
    %v2538 = vunpack.c.h.b16 %v2187
    %v2539 = vunpack.c.l.b16 %v2188
    %v2540 = vunpack.c.h.b16 %v2188
    %v2541 = vunpack.c.l.b16 %v2189
    %v2542 = vunpack.c.h.b16 %v2189
    %v2543 = vunpack.c.l.b16 %v2190
    %v2544 = vunpack.c.h.b16 %v2190
    %v2545 = vunpack.c.l.b16 %v2191
    %v2546 = vunpack.c.h.b16 %v2191
    %v2547 = vunpack.c.l.b16 %v2192
    %v2548 = vunpack.c.h.b16 %v2192
    %v2549 = vunpack.c.l.b16 %v2193
    %v2550 = vunpack.c.h.b16 %v2193
    %v2551 = vunpack.c.l.b16 %v2194
    %v2552 = vunpack.c.h.b16 %v2194
    %v2553 = vunpack.c.l.b16 %v2195
    %v2554 = vunpack.c.h.b16 %v2195
    %v2555 = vunpack.c.l.b16 %v2196
    %v2556 = vunpack.c.h.b16 %v2196
    %v2557 = vunpack.c.l.b16 %v2197
    %v2558 = vunpack.c.h.b16 %v2197
    %v2559 = vunpack.c.l.b16 %v2198
    %v2560 = vunpack.c.h.b16 %v2198
    %v2561 = vunpack.c.l.b16 %v2199
    %v2562 = vunpack.c.h.b16 %v2199
    %v2563 = vunpack.c.l.b16 %v2200
    %v2564 = vunpack.c.h.b16 %v2200
    %v2565 = vunpack.c.l.b16 %v2201
    %v2566 = vunpack.c.h.b16 %v2201
    %v2567 = vunpack.c.l.b16 %v2202
    %v2568 = vunpack.c.h.b16 %v2202
    %v2569 = vunpack.c.l.b16 %v2203
    %v2570 = vunpack.c.h.b16 %v2203
    %v2571 = vunpack.c.l.b16 %v2204
    %v2572 = vunpack.c.h.b16 %v2204
    %v2573 = vunpack.c.l.b16 %v2205
    %v2574 = vunpack.c.h.b16 %v2205
    %v2575 = vunpack.c.l.b16 %v2206
    %v2576 = vunpack.c.h.b16 %v2206
    %v2577 = vunpack.c.l.b16 %v2207
    %v2578 = vunpack.c.h.b16 %v2207
    %v2579 = vunpack.c.l.b16 %v2208
    %v2580 = vunpack.c.h.b16 %v2208
    %v2581 = vunpack.c.l.b16 %v2209
    %v2582 = vunpack.c.h.b16 %v2209
    %v2583 = vunpack.c.l.b16 %v2210
    %v2584 = vunpack.c.h.b16 %v2210
    %v2585 = vunpack.c.l.b16 %v2211
    %v2586 = vunpack.c.h.b16 %v2211
    %v2587 = vunpack.c.l.b16 %v2212
    %v2588 = vunpack.c.h.b16 %v2212
    %v2589 = vunpack.c.l.b16 %v2213
    %v2590 = vunpack.c.h.b16 %v2213
    %v2591 = vunpack.c.l.b16 %v2214
    %v2592 = vunpack.c.h.b16 %v2214
    %v2593 = vunpack.c.l.b16 %v2215
    %v2594 = vunpack.c.h.b16 %v2215
    %v2595 = vunpack.c.l.b16 %v2216
    %v2596 = vunpack.c.h.b16 %v2216
    %v2597 = vunpack.c.l.b16 %v2217
    %v2598 = vunpack.c.h.b16 %v2217
    %v2599 = vunpack.c.l.b16 %v2218
    %v2600 = vunpack.c.h.b16 %v2218
    %v2601 = vunpack.c.l.b16 %v2219
    %v2602 = vunpack.c.h.b16 %v2219
    %v2603 = vunpack.c.l.b16 %v2220
    %v2604 = vunpack.c.h.b16 %v2220
    %v2605 = vunpack.c.l.b16 %v2221
    %v2606 = vunpack.c.h.b16 %v2221
    %v2607 = vunpack.c.l.b16 %v2222
    %v2608 = vunpack.c.h.b16 %v2222
    %v2609 = vunpack.c.l.b16 %v2223
    %v2610 = vunpack.c.h.b16 %v2223
    %v2611 = vunpack.c.l.b16 %v2224
    %v2612 = vunpack.c.h.b16 %v2224
    %v2613 = vunpack.c.l.b16 %v2225
    %v2614 = vunpack.c.h.b16 %v2225
    %v2615 = vunpack.c.l.b16 %v2226
    %v2616 = vunpack.c.h.b16 %v2226
    %v2617 = vunpack.c.l.b16 %v2227
    %v2618 = vunpack.c.h.b16 %v2227
    %v2619 = vunpack.c.l.b16 %v2228
    %v2620 = vunpack.c.h.b16 %v2228
    %v2621 = vunpack.c.l.b16 %v2229
    %v2622 = vunpack.c.h.b16 %v2229
    %v2623 = vunpack.c.l.b16 %v2230
    %v2624 = vunpack.c.h.b16 %v2230
    %v2625 = vunpack.c.l.b16 %v2231
    %v2626 = vunpack.c.h.b16 %v2231
    %v2627 = vunpack.c.l.b16 %v2232
    %v2628 = vunpack.c.h.b16 %v2232
    %v2629 = vunpack.c.l.b16 %v2233
    %v2630 = vunpack.c.h.b16 %v2233
    %v2631 = vunpack.c.l.b16 %v2234
    %v2632 = vunpack.c.h.b16 %v2234
    %v2633 = vunpack.c.l.b16 %v2235
    %v2634 = vunpack.c.h.b16 %v2235
    %v2635 = vunpack.c.l.b16 %v2236
    %v2636 = vunpack.c.h.b16 %v2236
    %v2637 = vunpack.c.l.b16 %v2237
    %v2638 = vunpack.c.h.b16 %v2237
    %v2639 = vunpack.c.l.b16 %v2238
    %v2640 = vunpack.c.h.b16 %v2238
    %v2641 = vunpack.c.l.b16 %v2239
    %v2642 = vunpack.c.h.b16 %v2239
    %v2643 = vunpack.c.l.b16 %v2240
    %v2644 = vunpack.c.h.b16 %v2240
    %v2645 = vunpack.c.l.b16 %v2241
    %v2646 = vunpack.c.h.b16 %v2241
    %v2647 = vunpack.c.l.b16 %v2242
    %v2648 = vunpack.c.h.b16 %v2242
    %v2649 = vunpack.c.l.b16 %v2243
    %v2650 = vunpack.c.h.b16 %v2243
    %v2651 = vunpack.c.l.b16 %v2244
    %v2652 = vunpack.c.h.b16 %v2244
    %v2653 = vunpack.c.l.b16 %v2245
    %v2654 = vunpack.c.h.b16 %v2245
    %v2655 = vunpack.c.l.b16 %v2246
    %v2656 = vunpack.c.h.b16 %v2246
    %v2657 = vunpack.c.l.b16 %v2247
    %v2658 = vunpack.c.h.b16 %v2247
    %v2659 = vunpack.c.l.b16 %v2248
    %v2660 = vunpack.c.h.b16 %v2248
    %v2661 = vpack.c.b16 %v2413, %v2405
    %v2662 = vpack.c.b16 %v2414, %v2406
    %v2663 = vpack.c.b16 %v2415, %v2407
    %v2664 = vpack.c.b16 %v2416, %v2408
    %v2665 = vpack.c.b16 %v2417, %v2409
    %v2666 = vpack.c.b16 %v2418, %v2410
    %v2667 = vpack.c.b16 %v2419, %v2411
    %v2668 = vpack.c.b16 %v2420, %v2412
    %v2669 = vpack.c.b16 %v2429, %v2421
    %v2670 = vpack.c.b16 %v2430, %v2422
    %v2671 = vpack.c.b16 %v2431, %v2423
    %v2672 = vpack.c.b16 %v2432, %v2424
    %v2673 = vpack.c.b16 %v2433, %v2425
    %v2674 = vpack.c.b16 %v2434, %v2426
    %v2675 = vpack.c.b16 %v2435, %v2427
    %v2676 = vpack.c.b16 %v2436, %v2428
    %v2677 = vpack.c.b16 %v2445, %v2437
    %v2678 = vpack.c.b16 %v2446, %v2438
    %v2679 = vpack.c.b16 %v2447, %v2439
    %v2680 = vpack.c.b16 %v2448, %v2440
    %v2681 = vpack.c.b16 %v2449, %v2441
    %v2682 = vpack.c.b16 %v2450, %v2442
    %v2683 = vpack.c.b16 %v2451, %v2443
    %v2684 = vpack.c.b16 %v2452, %v2444
    %v2685 = vpack.c.b16 %v2461, %v2453
    %v2686 = vpack.c.b16 %v2462, %v2454
    %v2687 = vpack.c.b16 %v2463, %v2455
    %v2688 = vpack.c.b16 %v2464, %v2456
    %v2689 = vpack.c.b16 %v2465, %v2457
    %v2690 = vpack.c.b16 %v2466, %v2458
    %v2691 = vpack.c.b16 %v2467, %v2459
    %v2692 = vpack.c.b16 %v2468, %v2460
    %v2693 = vpack.c.b16 %v2477, %v2469
    %v2694 = vpack.c.b16 %v2478, %v2470
    %v2695 = vpack.c.b16 %v2479, %v2471
    %v2696 = vpack.c.b16 %v2480, %v2472
    %v2697 = vpack.c.b16 %v2481, %v2473
    %v2698 = vpack.c.b16 %v2482, %v2474
    %v2699 = vpack.c.b16 %v2483, %v2475
    %v2700 = vpack.c.b16 %v2484, %v2476
    %v2701 = vpack.c.b16 %v2493, %v2485
    %v2702 = vpack.c.b16 %v2494, %v2486
    %v2703 = vpack.c.b16 %v2495, %v2487
    %v2704 = vpack.c.b16 %v2496, %v2488
    %v2705 = vpack.c.b16 %v2497, %v2489
    %v2706 = vpack.c.b16 %v2498, %v2490
    %v2707 = vpack.c.b16 %v2499, %v2491
    %v2708 = vpack.c.b16 %v2500, %v2492
    %v2709 = vpack.c.b16 %v2509, %v2501
    %v2710 = vpack.c.b16 %v2510, %v2502
    %v2711 = vpack.c.b16 %v2511, %v2503
    %v2712 = vpack.c.b16 %v2512, %v2504
    %v2713 = vpack.c.b16 %v2513, %v2505
    %v2714 = vpack.c.b16 %v2514, %v2506
    %v2715 = vpack.c.b16 %v2515, %v2507
    %v2716 = vpack.c.b16 %v2516, %v2508
    %v2717 = vpack.c.b16 %v2525, %v2517
    %v2718 = vpack.c.b16 %v2526, %v2518
    %v2719 = vpack.c.b16 %v2527, %v2519
    %v2720 = vpack.c.b16 %v2528, %v2520
    %v2721 = vpack.c.b16 %v2529, %v2521
    %v2722 = vpack.c.b16 %v2530, %v2522
    %v2723 = vpack.c.b16 %v2531, %v2523
    %v2724 = vpack.c.b16 %v2532, %v2524
    %v2725 = vpack.c.b16 %v2541, %v2533
    %v2726 = vpack.c.b16 %v2542, %v2534
    %v2727 = vpack.c.b16 %v2543, %v2535
    %v2728 = vpack.c.b16 %v2544, %v2536
    %v2729 = vpack.c.b16 %v2545, %v2537
    %v2730 = vpack.c.b16 %v2546, %v2538
    %v2731 = vpack.c.b16 %v2547, %v2539
    %v2732 = vpack.c.b16 %v2548, %v2540
    %v2733 = vpack.c.b16 %v2557, %v2549
    %v2734 = vpack.c.b16 %v2558, %v2550
    %v2735 = vpack.c.b16 %v2559, %v2551
    %v2736 = vpack.c.b16 %v2560, %v2552
    %v2737 = vpack.c.b16 %v2561, %v2553
    %v2738 = vpack.c.b16 %v2562, %v2554
    %v2739 = vpack.c.b16 %v2563, %v2555
    %v2740 = vpack.c.b16 %v2564, %v2556
    %v2741 = vpack.c.b16 %v2573, %v2565
    %v2742 = vpack.c.b16 %v2574, %v2566
    %v2743 = vpack.c.b16 %v2575, %v2567
    %v2744 = vpack.c.b16 %v2576, %v2568
    %v2745 = vpack.c.b16 %v2577, %v2569
    %v2746 = vpack.c.b16 %v2578, %v2570
    %v2747 = vpack.c.b16 %v2579, %v2571
    %v2748 = vpack.c.b16 %v2580, %v2572
    %v2749 = vpack.c.b16 %v2589, %v2581
    %v2750 = vpack.c.b16 %v2590, %v2582
    %v2751 = vpack.c.b16 %v2591, %v2583
    %v2752 = vpack.c.b16 %v2592, %v2584
    %v2753 = vpack.c.b16 %v2593, %v2585
    %v2754 = vpack.c.b16 %v2594, %v2586
    %v2755 = vpack.c.b16 %v2595, %v2587
    %v2756 = vpack.c.b16 %v2596, %v2588
    %v2757 = vpack.c.b16 %v2605, %v2597
    %v2758 = vpack.c.b16 %v2606, %v2598
    %v2759 = vpack.c.b16 %v2607, %v2599
    %v2760 = vpack.c.b16 %v2608, %v2600
    %v2761 = vpack.c.b16 %v2609, %v2601
    %v2762 = vpack.c.b16 %v2610, %v2602
    %v2763 = vpack.c.b16 %v2611, %v2603
    %v2764 = vpack.c.b16 %v2612, %v2604
    %v2765 = vpack.c.b16 %v2621, %v2613
    %v2766 = vpack.c.b16 %v2622, %v2614
    %v2767 = vpack.c.b16 %v2623, %v2615
    %v2768 = vpack.c.b16 %v2624, %v2616
    %v2769 = vpack.c.b16 %v2625, %v2617
    %v2770 = vpack.c.b16 %v2626, %v2618
    %v2771 = vpack.c.b16 %v2627, %v2619
    %v2772 = vpack.c.b16 %v2628, %v2620
    %v2773 = vpack.c.b16 %v2637, %v2629
    %v2774 = vpack.c.b16 %v2638, %v2630
    %v2775 = vpack.c.b16 %v2639, %v2631
    %v2776 = vpack.c.b16 %v2640, %v2632
    %v2777 = vpack.c.b16 %v2641, %v2633
    %v2778 = vpack.c.b16 %v2642, %v2634
    %v2779 = vpack.c.b16 %v2643, %v2635
    %v2780 = vpack.c.b16 %v2644, %v2636
    %v2781 = vpack.c.b16 %v2653, %v2645
    %v2782 = vpack.c.b16 %v2654, %v2646
    %v2783 = vpack.c.b16 %v2655, %v2647
    %v2784 = vpack.c.b16 %v2656, %v2648
    %v2785 = vpack.c.b16 %v2657, %v2649
    %v2786 = vpack.c.b16 %v2658, %v2650
    %v2787 = vpack.c.b16 %v2659, %v2651
    %v2788 = vpack.c.b16 %v2660, %v2652
    %2917 = vmatpush.bf16.msra.mxu0 %v2717
    %2918 = vmatpush.bf16.msra.mxu0 %v2709
    %2919 = vmatpush.bf16.msra.mxu0 %v2701
    %2920 = vmatpush.bf16.msra.mxu0 %v2693
    %2921 = vmatpush.bf16.msra.mxu0 %v2685
    %2922 = vmatpush.bf16.msra.mxu0 %v2677
    %2923 = vmatpush.bf16.msra.mxu0 %v2669
    %2924 = vmatpush.bf16.msra.mxu0 %v2661
    %2925 = vmatmul.bf16.gmra.mxu0 %v2273
    %v2926 = vpop.f32.mrf.mxu0
    %v2927 = vadd.f32 %v2251, %v2926
    %v2928 = vpop.f32.mrf.mxu0
    %v2929 = vadd.f32 %v2251, %v2928
    %2930 = vdwg.mxu0
    %2931 = vmatpush.bf16.msra.mxu0 %v2781
    %2932 = vmatpush.bf16.msra.mxu0 %v2773
    %2933 = vmatpush.bf16.msra.mxu0 %v2765
    %2934 = vmatpush.bf16.msra.mxu0 %v2757
    %2935 = vmatpush.bf16.msra.mxu0 %v2749
    %2936 = vmatpush.bf16.msra.mxu0 %v2741
    %2937 = vmatpush.bf16.msra.mxu0 %v2733
    %2938 = vmatpush.bf16.msra.mxu0 %v2725
    %2939 = vmatmul.bf16.gmra.mxu0 %v2274
    %v2940 = vpop.f32.mrf.mxu0
    %v2941 = vadd.f32 %v2927, %v2940
    %v2942 = vpop.f32.mrf.mxu0
    %v2943 = vadd.f32 %v2929, %v2942
    %2944 = vdwg.mxu0
    %2945 = vmatpush.bf16.msra.mxu0 %v2718
    %2946 = vmatpush.bf16.msra.mxu0 %v2710
    %2947 = vmatpush.bf16.msra.mxu0 %v2702
    %2948 = vmatpush.bf16.msra.mxu0 %v2694
    %2949 = vmatpush.bf16.msra.mxu0 %v2686
    %2950 = vmatpush.bf16.msra.mxu0 %v2678
    %2951 = vmatpush.bf16.msra.mxu0 %v2670
    %2952 = vmatpush.bf16.msra.mxu0 %v2662
    %2953 = vmatmul.bf16.gmra.mxu0 %v2273
    %v2954 = vpop.f32.mrf.mxu0
    %v2955 = vadd.f32 %v2252, %v2954
    %v2956 = vpop.f32.mrf.mxu0
    %v2957 = vadd.f32 %v2252, %v2956
    %2958 = vdwg.mxu0
    %2959 = vmatpush.bf16.msra.mxu0 %v2782
    %2960 = vmatpush.bf16.msra.mxu0 %v2774
    %2961 = vmatpush.bf16.msra.mxu0 %v2766
    %2962 = vmatpush.bf16.msra.mxu0 %v2758
    %2963 = vmatpush.bf16.msra.mxu0 %v2750
    %2964 = vmatpush.bf16.msra.mxu0 %v2742
    %2965 = vmatpush.bf16.msra.mxu0 %v2734
    %2966 = vmatpush.bf16.msra.mxu0 %v2726
    %2967 = vmatmul.bf16.gmra.mxu0 %v2274
    %v2968 = vpop.f32.mrf.mxu0
    %v2969 = vadd.f32 %v2955, %v2968
    %v2970 = vpop.f32.mrf.mxu0
    %v2971 = vadd.f32 %v2957, %v2970
    %2972 = vdwg.mxu0
    %2973 = vmatpush.bf16.msra.mxu0 %v2719
    %2974 = vmatpush.bf16.msra.mxu0 %v2711
    %2975 = vmatpush.bf16.msra.mxu0 %v2703
    %2976 = vmatpush.bf16.msra.mxu0 %v2695
    %2977 = vmatpush.bf16.msra.mxu0 %v2687
    %2978 = vmatpush.bf16.msra.mxu0 %v2679
    %2979 = vmatpush.bf16.msra.mxu0 %v2671
    %2980 = vmatpush.bf16.msra.mxu0 %v2663
    %2981 = vmatmul.bf16.gmra.mxu0 %v2273
    %v2982 = vpop.f32.mrf.mxu0
    %v2983 = vadd.f32 %v2253, %v2982
    %v2984 = vpop.f32.mrf.mxu0
    %v2985 = vadd.f32 %v2253, %v2984
    %2986 = vdwg.mxu0
    %2987 = vmatpush.bf16.msra.mxu0 %v2783
    %2988 = vmatpush.bf16.msra.mxu0 %v2775
    %2989 = vmatpush.bf16.msra.mxu0 %v2767
    %2990 = vmatpush.bf16.msra.mxu0 %v2759
    %2991 = vmatpush.bf16.msra.mxu0 %v2751
    %2992 = vmatpush.bf16.msra.mxu0 %v2743
    %2993 = vmatpush.bf16.msra.mxu0 %v2735
    %2994 = vmatpush.bf16.msra.mxu0 %v2727
    %2995 = vmatmul.bf16.gmra.mxu0 %v2274
    %v2996 = vpop.f32.mrf.mxu0
    %v2997 = vadd.f32 %v2983, %v2996
    %v2998 = vpop.f32.mrf.mxu0
    %v2999 = vadd.f32 %v2985, %v2998
    %3000 = vdwg.mxu0
    %3001 = vmatpush.bf16.msra.mxu0 %v2720
    %3002 = vmatpush.bf16.msra.mxu0 %v2712
    %3003 = vmatpush.bf16.msra.mxu0 %v2704
    %3004 = vmatpush.bf16.msra.mxu0 %v2696
    %3005 = vmatpush.bf16.msra.mxu0 %v2688
    %3006 = vmatpush.bf16.msra.mxu0 %v2680
    %3007 = vmatpush.bf16.msra.mxu0 %v2672
    %3008 = vmatpush.bf16.msra.mxu0 %v2664
    %3009 = vmatmul.bf16.gmra.mxu0 %v2273
    %v3010 = vpop.f32.mrf.mxu0
    %v3011 = vadd.f32 %v2254, %v3010
    %v3012 = vpop.f32.mrf.mxu0
    %v3013 = vadd.f32 %v2254, %v3012
    %3014 = vdwg.mxu0
    %3015 = vmatpush.bf16.msra.mxu0 %v2784
    %3016 = vmatpush.bf16.msra.mxu0 %v2776
    %3017 = vmatpush.bf16.msra.mxu0 %v2768
    %3018 = vmatpush.bf16.msra.mxu0 %v2760
    %3019 = vmatpush.bf16.msra.mxu0 %v2752
    %3020 = vmatpush.bf16.msra.mxu0 %v2744
    %3021 = vmatpush.bf16.msra.mxu0 %v2736
    %3022 = vmatpush.bf16.msra.mxu0 %v2728
    %3023 = vmatmul.bf16.gmra.mxu0 %v2274
    %v3024 = vpop.f32.mrf.mxu0
    %v3025 = vadd.f32 %v3011, %v3024
    %v3026 = vpop.f32.mrf.mxu0
    %v3027 = vadd.f32 %v3013, %v3026
    %3028 = vdwg.mxu0
    %3029 = vmatpush.bf16.msra.mxu0 %v2721
    %3030 = vmatpush.bf16.msra.mxu0 %v2713
    %3031 = vmatpush.bf16.msra.mxu0 %v2705
    %3032 = vmatpush.bf16.msra.mxu0 %v2697
    %3033 = vmatpush.bf16.msra.mxu0 %v2689
    %3034 = vmatpush.bf16.msra.mxu0 %v2681
    %3035 = vmatpush.bf16.msra.mxu0 %v2673
    %3036 = vmatpush.bf16.msra.mxu0 %v2665
    %3037 = vmatmul.bf16.gmra.mxu0 %v2273
    %v3038 = vpop.f32.mrf.mxu0
    %v3039 = vadd.f32 %v2255, %v3038
    %v3040 = vpop.f32.mrf.mxu0
    %v3041 = vadd.f32 %v2255, %v3040
    %3042 = vdwg.mxu0
    %3043 = vmatpush.bf16.msra.mxu0 %v2785
    %3044 = vmatpush.bf16.msra.mxu0 %v2777
    %3045 = vmatpush.bf16.msra.mxu0 %v2769
    %3046 = vmatpush.bf16.msra.mxu0 %v2761
    %3047 = vmatpush.bf16.msra.mxu0 %v2753
    %3048 = vmatpush.bf16.msra.mxu0 %v2745
    %3049 = vmatpush.bf16.msra.mxu0 %v2737
    %3050 = vmatpush.bf16.msra.mxu0 %v2729
    %3051 = vmatmul.bf16.gmra.mxu0 %v2274
    %v3052 = vpop.f32.mrf.mxu0
    %v3053 = vadd.f32 %v3039, %v3052
    %v3054 = vpop.f32.mrf.mxu0
    %v3055 = vadd.f32 %v3041, %v3054
    %3056 = vdwg.mxu0
    %3057 = vmatpush.bf16.msra.mxu0 %v2722
    %3058 = vmatpush.bf16.msra.mxu0 %v2714
    %3059 = vmatpush.bf16.msra.mxu0 %v2706
    %3060 = vmatpush.bf16.msra.mxu0 %v2698
    %3061 = vmatpush.bf16.msra.mxu0 %v2690
    %3062 = vmatpush.bf16.msra.mxu0 %v2682
    %3063 = vmatpush.bf16.msra.mxu0 %v2674
    %3064 = vmatpush.bf16.msra.mxu0 %v2666
    %3065 = vmatmul.bf16.gmra.mxu0 %v2273
    %v3066 = vpop.f32.mrf.mxu0
    %v3067 = vadd.f32 %v2256, %v3066
    %v3068 = vpop.f32.mrf.mxu0
    %v3069 = vadd.f32 %v2256, %v3068
    %3070 = vdwg.mxu0
    %3071 = vmatpush.bf16.msra.mxu0 %v2786
    %3072 = vmatpush.bf16.msra.mxu0 %v2778
    %3073 = vmatpush.bf16.msra.mxu0 %v2770
    %3074 = vmatpush.bf16.msra.mxu0 %v2762
    %3075 = vmatpush.bf16.msra.mxu0 %v2754
    %3076 = vmatpush.bf16.msra.mxu0 %v2746
    %3077 = vmatpush.bf16.msra.mxu0 %v2738
    %3078 = vmatpush.bf16.msra.mxu0 %v2730
    %3079 = vmatmul.bf16.gmra.mxu0 %v2274
    %v3080 = vpop.f32.mrf.mxu0
    %v3081 = vadd.f32 %v3067, %v3080
    %v3082 = vpop.f32.mrf.mxu0
    %v3083 = vadd.f32 %v3069, %v3082
    %3084 = vdwg.mxu0
    %3085 = vmatpush.bf16.msra.mxu0 %v2723
    %3086 = vmatpush.bf16.msra.mxu0 %v2715
    %3087 = vmatpush.bf16.msra.mxu0 %v2707
    %3088 = vmatpush.bf16.msra.mxu0 %v2699
    %3089 = vmatpush.bf16.msra.mxu0 %v2691
    %3090 = vmatpush.bf16.msra.mxu0 %v2683
    %3091 = vmatpush.bf16.msra.mxu0 %v2675
    %3092 = vmatpush.bf16.msra.mxu0 %v2667
    %3093 = vmatmul.bf16.gmra.mxu0 %v2273
    %v3094 = vpop.f32.mrf.mxu0
    %v3095 = vadd.f32 %v2257, %v3094
    %v3096 = vpop.f32.mrf.mxu0
    %v3097 = vadd.f32 %v2257, %v3096
    %3098 = vdwg.mxu0
    %3099 = vmatpush.bf16.msra.mxu0 %v2787
    %3100 = vmatpush.bf16.msra.mxu0 %v2779
    %3101 = vmatpush.bf16.msra.mxu0 %v2771
    %3102 = vmatpush.bf16.msra.mxu0 %v2763
    %3103 = vmatpush.bf16.msra.mxu0 %v2755
    %3104 = vmatpush.bf16.msra.mxu0 %v2747
    %3105 = vmatpush.bf16.msra.mxu0 %v2739
    %3106 = vmatpush.bf16.msra.mxu0 %v2731
    %3107 = vmatmul.bf16.gmra.mxu0 %v2274
    %v3108 = vpop.f32.mrf.mxu0
    %v3109 = vadd.f32 %v3095, %v3108
    %v3110 = vpop.f32.mrf.mxu0
    %v3111 = vadd.f32 %v3097, %v3110
    %3112 = vdwg.mxu0
    %3113 = vmatpush.bf16.msra.mxu0 %v2724
    %3114 = vmatpush.bf16.msra.mxu0 %v2716
    %3115 = vmatpush.bf16.msra.mxu0 %v2708
    %3116 = vmatpush.bf16.msra.mxu0 %v2700
    %3117 = vmatpush.bf16.msra.mxu0 %v2692
    %3118 = vmatpush.bf16.msra.mxu0 %v2684
    %3119 = vmatpush.bf16.msra.mxu0 %v2676
    %3120 = vmatpush.bf16.msra.mxu0 %v2668
    %3121 = vmatmul.bf16.gmra.mxu0 %v2273
    %v3122 = vpop.f32.mrf.mxu0
    %v3123 = vadd.f32 %v2258, %v3122
    %v3124 = vpop.f32.mrf.mxu0
    %v3125 = vadd.f32 %v2258, %v3124
    %3126 = vdwg.mxu0
    %3127 = vmatpush.bf16.msra.mxu0 %v2788
    %3128 = vmatpush.bf16.msra.mxu0 %v2780
    %3129 = vmatpush.bf16.msra.mxu0 %v2772
    %3130 = vmatpush.bf16.msra.mxu0 %v2764
    %3131 = vmatpush.bf16.msra.mxu0 %v2756
    %3132 = vmatpush.bf16.msra.mxu0 %v2748
    %3133 = vmatpush.bf16.msra.mxu0 %v2740
    %3134 = vmatpush.bf16.msra.mxu0 %v2732
    %3135 = vmatmul.bf16.gmra.mxu0 %v2274
    %v3136 = vpop.f32.mrf.mxu0
    %v3137 = vadd.f32 %v3123, %v3136
    %v3138 = vpop.f32.mrf.mxu0
    %v3139 = vadd.f32 %v3125, %v3138
    %3140 = vdwg.mxu0
    %3141 = vst [vmem:[%s9] sm:$0xff] 0.0
    %3142 = vst [vmem:[%s9 + $0x8] sm:$0xff] 0.0
    %3143 = vst.msk [vmem:[%s9] sm:$0xff] %vm1451, %v2117
    %3144 = vst.msk [vmem:[%s9 + $0x8] sm:$0xff] %vm1451, %v2119
    %v3145 = vpack.c.bf16 %v1852, %v1852
    %v3146 = vpack.c.bf16 %v1853, %v1853
    %v3147 = vpack.c.bf16 %v2941, %v2941
    %v3148 = vpack.c.bf16 %v2969, %v2969
    %3149 = vmatpush.bf16.xpose.msra.mxu0 0
    %3150 = vmatpush.bf16.xpose.msra.mxu0 0
    %3151 = vmatpush.bf16.xpose.msra.mxu0 0
    %3152 = vmatpush.bf16.xpose.msra.mxu0 0
    %3153 = vmatpush.bf16.xpose.msra.mxu0 0
    %3154 = vmatpush.bf16.xpose.msra.mxu0 0
    %3155 = vmatpush.bf16.xpose.msra.mxu0 0
    %3156 = vmatpush.bf16.xpose.msra.mxu0 %v3145
    %3157 = vmatmul.bf16.gmra.mxu0 %v3147
    %v3158 = vpop.f32.mrf.mxu0
    %v3159 = vadd.f32 0.0, %v3158
    %v3160 = vpop.f32.mrf.mxu0
    %3161 = vdwg.mxu0
    %3162 = vmatpush.bf16.xpose.msra.mxu0 0
    %3163 = vmatpush.bf16.xpose.msra.mxu0 0
    %3164 = vmatpush.bf16.xpose.msra.mxu0 0
    %3165 = vmatpush.bf16.xpose.msra.mxu0 0
    %3166 = vmatpush.bf16.xpose.msra.mxu0 0
    %3167 = vmatpush.bf16.xpose.msra.mxu0 0
    %3168 = vmatpush.bf16.xpose.msra.mxu0 0
    %3169 = vmatpush.bf16.xpose.msra.mxu0 %v3146
    %3170 = vmatmul.bf16.gmra.mxu0 %v3148
    %v3171 = vpop.f32.mrf.mxu0
    %v3172 = vadd.f32 %v3159, %v3171
    %v3173 = vpop.f32.mrf.mxu0
    %3174 = vdwg.mxu0
    %3176 = vrot.lane.b32.xlu0 %v3172, 16
    %v3177 = vpop.permute.xlu0 %3176
    %vm3179 = vcmask 195712
    %3180 = vst.msk [vmem:[%s9] sm:$0xff] %vm3179, %v3177
    %v3181 = vpack.c.bf16 %v2997, %v2997
    %v3182 = vpack.c.bf16 %v3025, %v3025
    %3183 = vmatpush.bf16.xpose.msra.mxu0 0
    %3184 = vmatpush.bf16.xpose.msra.mxu0 0
    %3185 = vmatpush.bf16.xpose.msra.mxu0 0
    %3186 = vmatpush.bf16.xpose.msra.mxu0 0
    %3187 = vmatpush.bf16.xpose.msra.mxu0 0
    %3188 = vmatpush.bf16.xpose.msra.mxu0 0
    %3189 = vmatpush.bf16.xpose.msra.mxu0 0
    %3190 = vmatpush.bf16.xpose.msra.mxu0 %v3145
    %3191 = vmatmul.bf16.gmra.mxu0 %v3181
    %v3192 = vpop.f32.mrf.mxu0
    %v3193 = vadd.f32 0.0, %v3192
    %v3194 = vpop.f32.mrf.mxu0
    %3195 = vdwg.mxu0
    %3196 = vmatpush.bf16.xpose.msra.mxu0 0
    %3197 = vmatpush.bf16.xpose.msra.mxu0 0
    %3198 = vmatpush.bf16.xpose.msra.mxu0 0
    %3199 = vmatpush.bf16.xpose.msra.mxu0 0
    %3200 = vmatpush.bf16.xpose.msra.mxu0 0
    %3201 = vmatpush.bf16.xpose.msra.mxu0 0
    %3202 = vmatpush.bf16.xpose.msra.mxu0 0
    %3203 = vmatpush.bf16.xpose.msra.mxu0 %v3146
    %3204 = vmatmul.bf16.gmra.mxu0 %v3182
    %v3205 = vpop.f32.mrf.mxu0
    %v3206 = vadd.f32 %v3193, %v3205
    %v3207 = vpop.f32.mrf.mxu0
    %3208 = vdwg.mxu0
    %3210 = vrot.lane.b32.xlu0 %v3206, 24
    %v3211 = vpop.permute.xlu0 %3210
    %vm3213 = vcmask 261312
    %3214 = vst.msk [vmem:[%s9] sm:$0xff] %vm3213, %v3211
    %v3215 = vpack.c.bf16 %v3053, %v3053
    %v3216 = vpack.c.bf16 %v3081, %v3081
    %3217 = vmatpush.bf16.xpose.msra.mxu0 0
    %3218 = vmatpush.bf16.xpose.msra.mxu0 0
    %3219 = vmatpush.bf16.xpose.msra.mxu0 0
    %3220 = vmatpush.bf16.xpose.msra.mxu0 0
    %3221 = vmatpush.bf16.xpose.msra.mxu0 0
    %3222 = vmatpush.bf16.xpose.msra.mxu0 0
    %3223 = vmatpush.bf16.xpose.msra.mxu0 0
    %3224 = vmatpush.bf16.xpose.msra.mxu0 %v3145
    %3225 = vmatmul.bf16.gmra.mxu0 %v3215
    %v3226 = vpop.f32.mrf.mxu0
    %v3227 = vadd.f32 0.0, %v3226
    %v3228 = vpop.f32.mrf.mxu0
    %3229 = vdwg.mxu0
    %3230 = vmatpush.bf16.xpose.msra.mxu0 0
    %3231 = vmatpush.bf16.xpose.msra.mxu0 0
    %3232 = vmatpush.bf16.xpose.msra.mxu0 0
    %3233 = vmatpush.bf16.xpose.msra.mxu0 0
    %3234 = vmatpush.bf16.xpose.msra.mxu0 0
    %3235 = vmatpush.bf16.xpose.msra.mxu0 0
    %3236 = vmatpush.bf16.xpose.msra.mxu0 0
    %3237 = vmatpush.bf16.xpose.msra.mxu0 %v3146
    %3238 = vmatmul.bf16.gmra.mxu0 %v3216
    %v3239 = vpop.f32.mrf.mxu0
    %v3240 = vadd.f32 %v3227, %v3239
    %v3241 = vpop.f32.mrf.mxu0
    %3242 = vdwg.mxu0
    %3244 = vrot.lane.b32.xlu0 %v3240, 32
    %v3245 = vpop.permute.xlu0 %3244
    %vm3247 = vcmask 326912
    %3248 = vst.msk [vmem:[%s9] sm:$0xff] %vm3247, %v3245
    %v3249 = vpack.c.bf16 %v3109, %v3109
    %v3250 = vpack.c.bf16 %v3137, %v3137
    %3251 = vmatpush.bf16.xpose.msra.mxu0 0
    %3252 = vmatpush.bf16.xpose.msra.mxu0 0
    %3253 = vmatpush.bf16.xpose.msra.mxu0 0
    %3254 = vmatpush.bf16.xpose.msra.mxu0 0
    %3255 = vmatpush.bf16.xpose.msra.mxu0 0
    %3256 = vmatpush.bf16.xpose.msra.mxu0 0
    %3257 = vmatpush.bf16.xpose.msra.mxu0 0
    %3258 = vmatpush.bf16.xpose.msra.mxu0 %v3145
    %3259 = vmatmul.bf16.gmra.mxu0 %v3249
    %v3260 = vpop.f32.mrf.mxu0
    %v3261 = vadd.f32 0.0, %v3260
    %v3262 = vpop.f32.mrf.mxu0
    %3263 = vdwg.mxu0
    %3264 = vmatpush.bf16.xpose.msra.mxu0 0
    %3265 = vmatpush.bf16.xpose.msra.mxu0 0
    %3266 = vmatpush.bf16.xpose.msra.mxu0 0
    %3267 = vmatpush.bf16.xpose.msra.mxu0 0
    %3268 = vmatpush.bf16.xpose.msra.mxu0 0
    %3269 = vmatpush.bf16.xpose.msra.mxu0 0
    %3270 = vmatpush.bf16.xpose.msra.mxu0 0
    %3271 = vmatpush.bf16.xpose.msra.mxu0 %v3146
    %3272 = vmatmul.bf16.gmra.mxu0 %v3250
    %v3273 = vpop.f32.mrf.mxu0
    %v3274 = vadd.f32 %v3261, %v3273
    %v3275 = vpop.f32.mrf.mxu0
    %3276 = vdwg.mxu0
    %3278 = vrot.lane.b32.xlu0 %v3274, 40
    %v3279 = vpop.permute.xlu0 %3278
    %vm3281 = vcmask 392512
    %3282 = vst.msk [vmem:[%s9] sm:$0xff] %vm3281, %v3279
    %v3283 = vpack.c.bf16 %v1859, %v1859
    %v3284 = vpack.c.bf16 %v1860, %v1860
    %v3285 = vpack.c.bf16 %v2943, %v2943
    %v3286 = vpack.c.bf16 %v2971, %v2971
    %3287 = vmatpush.bf16.xpose.msra.mxu0 0
    %3288 = vmatpush.bf16.xpose.msra.mxu0 0
    %3289 = vmatpush.bf16.xpose.msra.mxu0 0
    %3290 = vmatpush.bf16.xpose.msra.mxu0 0
    %3291 = vmatpush.bf16.xpose.msra.mxu0 0
    %3292 = vmatpush.bf16.xpose.msra.mxu0 0
    %3293 = vmatpush.bf16.xpose.msra.mxu0 0
    %3294 = vmatpush.bf16.xpose.msra.mxu0 %v3283
    %3295 = vmatmul.bf16.gmra.mxu0 %v3285
    %v3296 = vpop.f32.mrf.mxu0
    %v3297 = vadd.f32 0.0, %v3296
    %v3298 = vpop.f32.mrf.mxu0
    %3299 = vdwg.mxu0
    %3300 = vmatpush.bf16.xpose.msra.mxu0 0
    %3301 = vmatpush.bf16.xpose.msra.mxu0 0
    %3302 = vmatpush.bf16.xpose.msra.mxu0 0
    %3303 = vmatpush.bf16.xpose.msra.mxu0 0
    %3304 = vmatpush.bf16.xpose.msra.mxu0 0
    %3305 = vmatpush.bf16.xpose.msra.mxu0 0
    %3306 = vmatpush.bf16.xpose.msra.mxu0 0
    %3307 = vmatpush.bf16.xpose.msra.mxu0 %v3284
    %3308 = vmatmul.bf16.gmra.mxu0 %v3286
    %v3309 = vpop.f32.mrf.mxu0
    %v3310 = vadd.f32 %v3297, %v3309
    %v3311 = vpop.f32.mrf.mxu0
    %3312 = vdwg.mxu0
    %3314 = vrot.lane.b32.xlu0 %v3310, 16
    %v3315 = vpop.permute.xlu0 %3314
    %3317 = vst.msk [vmem:[%s9 + $0x8] sm:$0xff] %vm3179, %v3315
    %v3318 = vpack.c.bf16 %v2999, %v2999
    %v3319 = vpack.c.bf16 %v3027, %v3027
    %3320 = vmatpush.bf16.xpose.msra.mxu0 0
    %3321 = vmatpush.bf16.xpose.msra.mxu0 0
    %3322 = vmatpush.bf16.xpose.msra.mxu0 0
    %3323 = vmatpush.bf16.xpose.msra.mxu0 0
    %3324 = vmatpush.bf16.xpose.msra.mxu0 0
    %3325 = vmatpush.bf16.xpose.msra.mxu0 0
    %3326 = vmatpush.bf16.xpose.msra.mxu0 0
    %3327 = vmatpush.bf16.xpose.msra.mxu0 %v3283
    %3328 = vmatmul.bf16.gmra.mxu0 %v3318
    %v3329 = vpop.f32.mrf.mxu0
    %v3330 = vadd.f32 0.0, %v3329
    %v3331 = vpop.f32.mrf.mxu0
    %3332 = vdwg.mxu0
    %3333 = vmatpush.bf16.xpose.msra.mxu0 0
    %3334 = vmatpush.bf16.xpose.msra.mxu0 0
    %3335 = vmatpush.bf16.xpose.msra.mxu0 0
    %3336 = vmatpush.bf16.xpose.msra.mxu0 0
    %3337 = vmatpush.bf16.xpose.msra.mxu0 0
    %3338 = vmatpush.bf16.xpose.msra.mxu0 0
    %3339 = vmatpush.bf16.xpose.msra.mxu0 0
    %3340 = vmatpush.bf16.xpose.msra.mxu0 %v3284
    %3341 = vmatmul.bf16.gmra.mxu0 %v3319
    %v3342 = vpop.f32.mrf.mxu0
    %v3343 = vadd.f32 %v3330, %v3342
    %v3344 = vpop.f32.mrf.mxu0
    %3345 = vdwg.mxu0
    %3347 = vrot.lane.b32.xlu0 %v3343, 24
    %v3348 = vpop.permute.xlu0 %3347
    %3350 = vst.msk [vmem:[%s9 + $0x8] sm:$0xff] %vm3213, %v3348
    %v3351 = vpack.c.bf16 %v3055, %v3055
    %v3352 = vpack.c.bf16 %v3083, %v3083
    %3353 = vmatpush.bf16.xpose.msra.mxu0 0
    %3354 = vmatpush.bf16.xpose.msra.mxu0 0
    %3355 = vmatpush.bf16.xpose.msra.mxu0 0
    %3356 = vmatpush.bf16.xpose.msra.mxu0 0
    %3357 = vmatpush.bf16.xpose.msra.mxu0 0
    %3358 = vmatpush.bf16.xpose.msra.mxu0 0
    %3359 = vmatpush.bf16.xpose.msra.mxu0 0
    %3360 = vmatpush.bf16.xpose.msra.mxu0 %v3283
    %3361 = vmatmul.bf16.gmra.mxu0 %v3351
    %v3362 = vpop.f32.mrf.mxu0
    %v3363 = vadd.f32 0.0, %v3362
    %v3364 = vpop.f32.mrf.mxu0
    %3365 = vdwg.mxu0
    %3366 = vmatpush.bf16.xpose.msra.mxu0 0
    %3367 = vmatpush.bf16.xpose.msra.mxu0 0
    %3368 = vmatpush.bf16.xpose.msra.mxu0 0
    %3369 = vmatpush.bf16.xpose.msra.mxu0 0
    %3370 = vmatpush.bf16.xpose.msra.mxu0 0
    %3371 = vmatpush.bf16.xpose.msra.mxu0 0
    %3372 = vmatpush.bf16.xpose.msra.mxu0 0
    %3373 = vmatpush.bf16.xpose.msra.mxu0 %v3284
    %3374 = vmatmul.bf16.gmra.mxu0 %v3352
    %v3375 = vpop.f32.mrf.mxu0
    %v3376 = vadd.f32 %v3363, %v3375
    %v3377 = vpop.f32.mrf.mxu0
    %3378 = vdwg.mxu0
    %3380 = vrot.lane.b32.xlu0 %v3376, 32
    %v3381 = vpop.permute.xlu0 %3380
    %3383 = vst.msk [vmem:[%s9 + $0x8] sm:$0xff] %vm3247, %v3381
    %v3384 = vpack.c.bf16 %v3111, %v3111
    %v3385 = vpack.c.bf16 %v3139, %v3139
    %3386 = vmatpush.bf16.xpose.msra.mxu0 0
    %3387 = vmatpush.bf16.xpose.msra.mxu0 0
    %3388 = vmatpush.bf16.xpose.msra.mxu0 0
    %3389 = vmatpush.bf16.xpose.msra.mxu0 0
    %3390 = vmatpush.bf16.xpose.msra.mxu0 0
    %3391 = vmatpush.bf16.xpose.msra.mxu0 0
    %3392 = vmatpush.bf16.xpose.msra.mxu0 0
    %3393 = vmatpush.bf16.xpose.msra.mxu0 %v3283
    %3394 = vmatmul.bf16.gmra.mxu0 %v3384
    %v3395 = vpop.f32.mrf.mxu0
    %v3396 = vadd.f32 0.0, %v3395
    %v3397 = vpop.f32.mrf.mxu0
    %3398 = vdwg.mxu0
    %3399 = vmatpush.bf16.xpose.msra.mxu0 0
    %3400 = vmatpush.bf16.xpose.msra.mxu0 0
    %3401 = vmatpush.bf16.xpose.msra.mxu0 0
    %3402 = vmatpush.bf16.xpose.msra.mxu0 0
    %3403 = vmatpush.bf16.xpose.msra.mxu0 0
    %3404 = vmatpush.bf16.xpose.msra.mxu0 0
    %3405 = vmatpush.bf16.xpose.msra.mxu0 0
    %3406 = vmatpush.bf16.xpose.msra.mxu0 %v3284
    %3407 = vmatmul.bf16.gmra.mxu0 %v3385
    %v3408 = vpop.f32.mrf.mxu0
    %v3409 = vadd.f32 %v3396, %v3408
    %v3410 = vpop.f32.mrf.mxu0
    %3411 = vdwg.mxu0
    %3413 = vrot.lane.b32.xlu0 %v3409, 40
    %v3414 = vpop.permute.xlu0 %3413
    %3416 = vst.msk [vmem:[%s9 + $0x8] sm:$0xff] %vm3281, %v3414
    // Predicated region
    $region46: #{bote_forward.1} parent=1 // pred_check
      _
    $region47: #{bote_forward.1} parent=1 // pred_check_branch
      %3418 = sbr.rel (0) target = $region49
    $region48: #{bote_forward.1} parent=1 // pred_region
      _
    $region49: #{bote_forward.1} parent=1 // pred_fallthru
      _
    // Predicated region
    $region50: #{bote_forward.1} parent=1 // pred_check
      _
    $region51: #{bote_forward.1} parent=1 // pred_check_branch
      %3420 = sbr.rel (0) target = $region53
    $region52: #{bote_forward.1} parent=1 // pred_region
      _
    $region53: #{bote_forward.1} parent=1 // pred_fallthru
      _
    %3421 = vsyncpa [#allocation3], 1
    %3422 = vsyncpa [#allocation5], 1

</llo_original>
